<compile_context>
chip_gen: v5e
topology: v5e:2x2
jax: 0.10.0
libtpu: 0.0.40
codegen_flags: <defaults>
</compile_context>

<pallas_src>
import jax
import jax.numpy as jnp
import numpy as np
from jax.experimental import pallas as pl
from jax.experimental.pallas import tpu as pltpu

# ---------------- sizes (small, consistent with the module) ----------------
B = 2            # batch
S = 8            # encoder sequence length
H = 32           # dec_hid_dim (== enc_hid_dim, required by BahdanauAttention)
V = 50           # output_dim (vocab)
L = 2            # num_layers
T_STEPS = 8      # decode steps executed inside ONE kernel call
LN_EPS = 1e-5    # PyTorch LayerNorm default

H4 = 4 * H       # 128: LSTM gate width
VPAD = 128       # lane-dense padding of the vocab dim
WLANE = H4 + H   # 160: packed-slab lane width (fits the [whh1 | wa] fusion)


# ============================== kernel ======================================
def att_decoder_kernel(onehot_ref, hidden_ref, cell_ref, enc_ref,
                       wslab_ref, fslab_ref,
                       pred_ref, hid_out_ref, cell_out_ref, attw_ref):
    T = onehot_ref.shape[0]
    bf16 = jnp.bfloat16

    def bdot(x, w):  # bf16 MXU operands, f32 accumulation
        return jnp.dot(x.astype(bf16), w, preferred_element_type=jnp.float32)

    # ---- unpack resident weights (loaded once, reused for all T steps) ----
    w_l0  = wslab_ref[0:2 * H, 0:H4]          # (2H, 4H): [wih0_ctx ; whh0] fused layer-0 gates
    w_h1  = wslab_ref[2 * H:3 * H, :]         # (H, 5H):  [whh1 | wa] shared-LHS fusion
    w_ih1 = wslab_ref[3 * H:4 * H, 0:H4]      # (H, 4H)
    w_fc  = wslab_ref[4 * H:5 * H, 0:VPAD]    # (H, VPAD)
    w_ua  = wslab_ref[5 * H:6 * H, 0:H]       # (H, H)

    brows = fslab_ref[VPAD:VPAD + 8, :]       # (8, WLANE) f32 bias rows
    b1    = brows[0:1, 0:H4]
    bfc   = brows[1:2, 0:VPAD]
    bua   = brows[2:3, 0:H]                   # ba + bu folded at pack time
    gamma = brows[3:4, 0:H]
    beta  = brows[4:5, 0:H]
    va    = brows[5:6, 0:H]

    keys = enc_ref[...]                       # (B, S, H) f32

    # ---- loop-invariant hoists (once per call, off the recurrence chain) ----
    # Ua @ encoder_outputs + (bu + ba): ba folded here so the per-step query add
    # disappears (tanh(Wa·q + ba + Ua·k + bu) is unchanged).
    ua_k = (bdot(keys.reshape(B * S, H), w_ua) + bua).reshape(B, S, H)

    # Embedding->layer-0-gates for ALL steps in one matmul.  The f32 one-hot vs
    # the f32 table makes this an exact row selection (b0 already baked into the
    # table rows), and it happens once, not on the serial per-step chain.
    embgates = fslab_ref[0:VPAD, 0:H4]                            # (VPAD, 4H) f32
    onehot_flat = onehot_ref[...].reshape(T * B, VPAD)
    emb_g = jnp.dot(onehot_flat, embgates,
                    preferred_element_type=jnp.float32).reshape(T, B, H4)

    # ---- decode loop: fully unrolled at trace time (T=8 static) so the LLO
    # scheduler sees across steps; per-step outputs are collected and stored
    # once after the loop. ----
    h0, c0 = hidden_ref[0], cell_ref[0]
    h1, c1 = hidden_ref[1], cell_ref[1]
    h1_hist, attw_hist = [], []

    for t in range(T):
        # --- Bahdanau attention (query = hidden[-1] == h1), fused with the
        # layer-1 recurrent gate projection (same LHS h1). ---
        h1_proj = bdot(h1, w_h1)                       # (B, 5H)
        gates1_h = h1_proj[:, 0:H4]
        wa_q = h1_proj[:, H4:H4 + H]                   # ba already inside ua_k

        t_act = jnp.tanh(wa_q[:, None, :] + ua_k)      # (B, S, H)
        # Va bias dropped: a uniform logit shift is cancelled by softmax.
        scores = jnp.sum(t_act * va, axis=-1)          # (B, S)
        m = jnp.max(scores, axis=-1, keepdims=True)
        e = jnp.exp(scores - m)
        w = e / jnp.sum(e, axis=-1, keepdims=True)
        attw_hist.append(w)

        # context = bmm(weights, keys) as VPU broadcast-multiply + S-reduce.
        context = jnp.sum(w[:, :, None] * keys, axis=1)            # (B, H) f32

        # LayerNorm over H (kept f32)
        mu = jnp.mean(context, axis=-1, keepdims=True)
        var = jnp.mean((context - mu) ** 2, axis=-1, keepdims=True)
        ctx_ln = (context - mu) * jax.lax.rsqrt(var + LN_EPS) * gamma + beta

        # --- layer-0 LSTM: single fused gate matmul (K = 2H = 64) plus the
        # hoisted embedding-gate term (already contains b0).
        # dropout(embedded): identity (eval mode).
        # TODO(synk): training-mode stochastic dropout not implemented.
        x0 = jnp.concatenate([ctx_ln, h0], axis=-1)                # (B, 2H)
        g0 = emb_g[t] + bdot(x0, w_l0)                             # (B, 4H)
        i0 = jax.nn.sigmoid(g0[:, 0:H])
        f0 = jax.nn.sigmoid(g0[:, H:2 * H])
        z0 = jnp.tanh(g0[:, 2 * H:3 * H])
        o0 = jax.nn.sigmoid(g0[:, 3 * H:4 * H])
        c0 = f0 * c0 + i0 * z0
        h0 = o0 * jnp.tanh(c0)

        # --- layer-1 LSTM (recurrent part came from the fused h1 matmul) ---
        g1 = bdot(h0, w_ih1) + gates1_h + b1                       # (B, 4H)
        i1 = jax.nn.sigmoid(g1[:, 0:H])
        f1 = jax.nn.sigmoid(g1[:, H:2 * H])
        z1 = jnp.tanh(g1[:, 2 * H:3 * H])
        o1 = jax.nn.sigmoid(g1[:, 3 * H:4 * H])
        c1 = f1 * c1 + i1 * z1
        h1 = o1 * jnp.tanh(c1)

        h1_hist.append(h1)

    # ---- epilogue: batched fc_out + single stores (off the recurrence chain) ----
    hid_out_ref[0] = h0
    hid_out_ref[1] = h1
    cell_out_ref[0] = c0
    cell_out_ref[1] = c1
    attw_ref[...] = jnp.stack(attw_hist)                           # (T, B, S)

    h1_all = jnp.stack(h1_hist).reshape(T * B, H)                  # (T*B, H)
    pred_ref[...] = (bdot(h1_all, w_fc) + bfc).reshape(T, B, VPAD) # lane-dense


# ============================ parameter packing =============================
def pack_params(p):
    """One-time weight preprocessing: fuse + pad + pack into two slabs.

    wslab (bf16), padded to WLANE=160 lanes:
        [  0: 64]  [wih0[H:2H] ; whh0]   (fused layer-0 gate weights, K=2H)
        [ 64: 96]  [whh1 | wa]           (shared-LHS fusion for hidden[-1])
        [ 96:128]  wih1
        [128:160]  wfc  zero-padded to VPAD lanes
        [160:192]  ua
    fslab (f32):
        [  0:128]  emb @ wih0[:H] + b0   (embedding + bias folded into layer-0 gates)
        [128:136]  bias rows: b1 | bfc_pad | (bu+ba) | gamma | beta | va | 0 | 0
    """
    f32, bf16 = jnp.float32, jnp.bfloat16
    lanepad = lambda x: jnp.pad(x, ((0, 0), (0, WLANE - x.shape[1])))

    w_l0 = jnp.concatenate([p["wih0"][H:2 * H], p["whh0"]], axis=0)    # (2H, 4H)
    w_h1 = jnp.concatenate([p["whh1"], p["wa"]], axis=1)               # (H, 5H)
    wfc_pad = jnp.pad(p["wfc"], ((0, 0), (0, VPAD - V)))               # (H, VPAD)
    wslab = jnp.concatenate(
        [lanepad(w_l0), lanepad(w_h1), lanepad(p["wih1"]),
         lanepad(wfc_pad), lanepad(p["ua"])], axis=0
    ).astype(bf16)                                                     # (192, 160)

    # Fused embedding->layer-0-gates table: same bf16-operand / f32-accumulate
    # policy as every in-kernel matmul, stored in f32 so the in-kernel one-hot
    # matmul is an exact row selection.  b0 baked into every valid row.
    embgates = jnp.dot(p["emb"].astype(bf16), p["wih0"][:H].astype(bf16),
                       preferred_element_type=f32) + p["b0"]           # (V, 4H)
    embgates = lanepad(jnp.pad(embgates, ((0, VPAD - V), (0, 0))))     # (VPAD, WLANE)

    bua = p["bu"] + p["ba"]                                            # (1, H)
    bias_rows = jnp.concatenate(
        [lanepad(p["b1"]),
         lanepad(jnp.pad(p["bfc"], ((0, 0), (0, VPAD - V)))),
         lanepad(bua), lanepad(p["gamma"]), lanepad(p["beta"]),
         lanepad(p["va"]), jnp.zeros((2, WLANE), f32)], axis=0)        # (8, WLANE)
    fslab = jnp.concatenate([embgates, bias_rows], axis=0).astype(f32)  # (136, 160)
    return wslab, fslab


# ================================ wrapper ===================================
def att_decoder_forward(tokens_seq, hidden, cell, encoder_outputs, wslab, fslab):
    """Runs T decoder steps (each identical to AttDecoderLSTM.forward, eval mode)
    inside ONE pallas_call: weights stay resident in VMEM and hidden/cell state
    is carried across steps without HBM round-trips.

    Returns: preds (T,B,1,V), hidden (L,B,H), cell (L,B,H), attw (T,B,1,S)."""
    T = tokens_seq.shape[0]
    # One-hot built once per call for ALL steps; inside the kernel it drives a
    # single hoisted matmul that exactly row-selects the f32 embedding->gate table.
    onehot = jax.nn.one_hot(tokens_seq, VPAD, dtype=jnp.float32)      # (T, B, VPAD)
    vmem = pl.BlockSpec(memory_space=pltpu.MemorySpace.VMEM)

    preds, hid_n, cell_n, attws = pl.pallas_call(
        att_decoder_kernel,
        out_shape=(
            jax.ShapeDtypeStruct((T, B, VPAD), jnp.float32),   # lane-dense (V padded to 128)
            jax.ShapeDtypeStruct((L, B, H), jnp.float32),
            jax.ShapeDtypeStruct((L, B, H), jnp.float32),
            jax.ShapeDtypeStruct((T, B, S), jnp.float32),
        ),
        in_specs=[vmem] * 6,
        out_specs=(vmem, vmem, vmem, vmem),
    )(onehot, hidden, cell, encoder_outputs, wslab, fslab)

    # TODO(synk): for v7x multi-sequence serving, add a leading "parallel" grid
    # axis over independent decode streams so both TensorCores are used, and
    # grow B so the MXU/VPU sublane rows are filled.
    return preds[:, :, None, :V], hid_n, cell_n, attws[:, :, None, :]


# ===================== pure-JAX reference (verification) ====================
def qdot(x, w):
    """Matmul with the kernel's mixed-precision policy: bf16 operands, f32 acc."""
    return jnp.dot(x.astype(jnp.bfloat16), w.astype(jnp.bfloat16),
                   preferred_element_type=jnp.float32)


def reference_step(tok, hidden, cell, enc, p):
    emb = p["emb"][tok]                                        # (B, H)
    query = hidden[-1]
    wa_q = qdot(query, p["wa"]) + p["ba"][0]
    ua_k = qdot(enc, p["ua"]) + p["bu"][0]
    t = jnp.tanh(wa_q[:, None, :] + ua_k)
    scores = jnp.sum(t * p["va"][0][None, None, :], axis=-1)   # Va bias: softmax no-op
    w = jax.nn.softmax(scores, axis=-1)
    ctx = jnp.einsum("bs,bsh->bh", w, enc)
    mu = ctx.mean(-1, keepdims=True)
    var = ((ctx - mu) ** 2).mean(-1, keepdims=True)
    ctx_ln = (ctx - mu) * jax.lax.rsqrt(var + LN_EPS) * p["gamma"][0] + p["beta"][0]

    def lstm_step(x_parts, w_parts, h, c, whh, b):
        gates = sum(qdot(x, wp) for x, wp in zip(x_parts, w_parts)) + qdot(h, whh) + b[0]
        i, f, g, o = jnp.split(gates, 4, axis=-1)
        c_new = jax.nn.sigmoid(f) * c + jax.nn.sigmoid(i) * jnp.tanh(g)
        h_new = jax.nn.sigmoid(o) * jnp.tanh(c_new)
        return h_new, c_new

    h0, c0 = lstm_step([emb, ctx_ln], [p["wih0"][:H], p["wih0"][H:]],
                       hidden[0], cell[0], p["whh0"], p["b0"])
    h1, c1 = lstm_step([h0], [p["wih1"]], hidden[1], cell[1], p["whh1"], p["b1"])
    pred = qdot(h1, p["wfc"]) + p["bfc"][0]
    return pred, jnp.stack([h0, h1]), jnp.stack([c0, c1]), w


def make_params(key):
    ks = jax.random.split(key, 15)
    n = lambda k, shape, s=0.1: (s * jax.random.normal(k, shape)).astype(jnp.float32)
    # all Linear/LSTM weights stored pre-transposed: y = x @ W + b
    return {
        "emb":   n(ks[0], (V, H), 1.0),
        "wa":    n(ks[1], (H, H)), "ba": n(ks[2], (1, H)),
        "ua":    n(ks[3], (H, H)), "bu": n(ks[4], (1, H)),
        "va":    n(ks[5], (1, H)),
        # Va bias omitted entirely: a constant logit shift is a softmax no-op.
        "gamma": jnp.ones((1, H), jnp.float32),
        "beta":  jnp.zeros((1, H), jnp.float32),
        "wih0":  n(ks[6], (2 * H, 4 * H)), "whh0": n(ks[7], (H, 4 * H)),
        "b0":    n(ks[8], (1, 4 * H)),      # b_ih0 + b_hh0 combined
        "wih1":  n(ks[9], (H, 4 * H)), "whh1": n(ks[10], (H, 4 * H)),
        "b1":    n(ks[11], (1, 4 * H)),     # b_ih1 + b_hh1 combined
        "wfc":   n(ks[12], (H, V)), "bfc": n(ks[13], (1, V)),
    }


if __name__ == "__main__":
    key = jax.random.PRNGKey(0)
    k_tok, k_hid, k_cell, k_enc, k_par = jax.random.split(key, 5)

    tokens_seq = jax.random.randint(k_tok, (T_STEPS, B), 0, V, dtype=jnp.int32)
    hidden = (0.5 * jax.random.normal(k_hid, (L, B, H))).astype(jnp.float32)
    cell = (0.5 * jax.random.normal(k_cell, (L, B, H))).astype(jnp.float32)
    enc_out = jax.random.normal(k_enc, (B, S, H)).astype(jnp.float32)
    params = make_params(k_par)
    wslab, fslab = pack_params(params)            # one-time weight preprocessing

    preds, hid_n, cell_n, attws = att_decoder_forward(
        tokens_seq, hidden, cell, enc_out, wslab, fslab)
    jax.block_until_ready((preds, hid_n, cell_n, attws))

    # step-by-step verification against the module math
    r_h, r_c = hidden, cell
    for t in range(T_STEPS):
        r_pred, r_h, r_c, r_w = reference_step(tokens_seq[t], r_h, r_c, enc_out, params)
        np.testing.assert_allclose(np.asarray(preds[t, :, 0, :]), np.asarray(r_pred),
                                   atol=2e-3, rtol=2e-3)
        np.testing.assert_allclose(np.asarray(attws[t, :, 0, :]), np.asarray(r_w),
                                   atol=2e-3, rtol=2e-3)
    np.testing.assert_allclose(np.asarray(hid_n), np.asarray(r_h), atol=2e-3, rtol=2e-3)
    np.testing.assert_allclose(np.asarray(cell_n), np.asarray(r_c), atol=2e-3, rtol=2e-3)

    print("KERNEL_OK")
</pallas_src>

<mosaic_0001>
module attributes {stable_mosaic.version = 11 : i64} {
  func.func @att_decoder_kernel(%arg0: memref<8x2x128xf32, #tpu.memory_space<vmem>>, %arg1: memref<2x2x32xf32, #tpu.memory_space<vmem>>, %arg2: memref<2x2x32xf32, #tpu.memory_space<vmem>>, %arg3: memref<2x8x32xf32, #tpu.memory_space<vmem>>, %arg4: memref<192x160xbf16, #tpu.memory_space<vmem>>, %arg5: memref<136x160xf32, #tpu.memory_space<vmem>>, %arg6: memref<8x2x128xf32, #tpu.memory_space<vmem>>, %arg7: memref<2x2x32xf32, #tpu.memory_space<vmem>>, %arg8: memref<2x2x32xf32, #tpu.memory_space<vmem>>, %arg9: memref<8x2x8xf32, #tpu.memory_space<vmem>>) attributes {dimension_semantics = [], scalar_prefetch = 0 : i64, scratch_operands = 0 : i64, tpu.core_type = #tpu.core_type<tc>} {
    %c0 = arith.constant 0 : index
    %c0_0 = arith.constant 0 : index
    %0 = vector.load %arg4[%c0, %c0_0] : memref<192x160xbf16, #tpu.memory_space<vmem>>, vector<64x128xbf16>
    %c64 = arith.constant 64 : index
    %c0_1 = arith.constant 0 : index
    %1 = vector.load %arg4[%c64, %c0_1] : memref<192x160xbf16, #tpu.memory_space<vmem>>, vector<32x160xbf16>
    %c96 = arith.constant 96 : index
    %c0_2 = arith.constant 0 : index
    %2 = vector.load %arg4[%c96, %c0_2] : memref<192x160xbf16, #tpu.memory_space<vmem>>, vector<32x128xbf16>
    %c128 = arith.constant 128 : index
    %c0_3 = arith.constant 0 : index
    %3 = vector.load %arg4[%c128, %c0_3] : memref<192x160xbf16, #tpu.memory_space<vmem>>, vector<32x128xbf16>
    %c160 = arith.constant 160 : index
    %c0_4 = arith.constant 0 : index
    %4 = vector.load %arg4[%c160, %c0_4] : memref<192x160xbf16, #tpu.memory_space<vmem>>, vector<32x32xbf16>
    %c128_5 = arith.constant 128 : index
    %c0_6 = arith.constant 0 : index
    %5 = vector.load %arg5[%c128_5, %c0_6] : memref<136x160xf32, #tpu.memory_space<vmem>>, vector<8x160xf32>
    %6 = vector.extract_strided_slice %5 {offsets = [0, 0], sizes = [1, 128], strides = [1, 1]} : vector<8x160xf32> to vector<1x128xf32>
    %7 = vector.extract_strided_slice %5 {offsets = [1, 0], sizes = [1, 128], strides = [1, 1]} : vector<8x160xf32> to vector<1x128xf32>
    %8 = vector.extract_strided_slice %5 {offsets = [2, 0], sizes = [1, 32], strides = [1, 1]} : vector<8x160xf32> to vector<1x32xf32>
    %9 = vector.extract_strided_slice %5 {offsets = [3, 0], sizes = [1, 32], strides = [1, 1]} : vector<8x160xf32> to vector<1x32xf32>
    %10 = vector.extract_strided_slice %5 {offsets = [4, 0], sizes = [1, 32], strides = [1, 1]} : vector<8x160xf32> to vector<1x32xf32>
    %11 = vector.extract_strided_slice %5 {offsets = [5, 0], sizes = [1, 32], strides = [1, 1]} : vector<8x160xf32> to vector<1x32xf32>
    %c0_7 = arith.constant 0 : index
    %c0_8 = arith.constant 0 : index
    %c0_9 = arith.constant 0 : index
    %12 = vector.load %arg3[%c0_7, %c0_8, %c0_9] : memref<2x8x32xf32, #tpu.memory_space<vmem>>, vector<2x8x32xf32>
    %13 = vector.shape_cast %12 : vector<2x8x32xf32> to vector<16x32xf32>
    %14 = arith.truncf %13 : vector<16x32xf32> to vector<16x32xbf16>
    %cst = arith.constant dense<0.000000e+00> : vector<16x32xf32>
    %15 = tpu.matmul %14, %4, %cst {dimension_numbers = #tpu.dot_dimension_numbers<[1], [0], [0], [1], [0, 0, 1, 1], [], []>} : vector<16x32xbf16>, vector<32x32xbf16>, vector<16x32xf32> -> vector<16x32xf32>
    %16 = vector.broadcast %8 : vector<1x32xf32> to vector<16x32xf32>
    %17 = arith.addf %15, %16 : vector<16x32xf32>
    %18 = vector.shape_cast %17 : vector<16x32xf32> to vector<2x8x32xf32>
    %c0_10 = arith.constant 0 : index
    %c0_11 = arith.constant 0 : index
    %19 = vector.load %arg5[%c0_10, %c0_11] : memref<136x160xf32, #tpu.memory_space<vmem>>, vector<128x128xf32>
    %c0_12 = arith.constant 0 : index
    %c0_13 = arith.constant 0 : index
    %c0_14 = arith.constant 0 : index
    %20 = vector.load %arg0[%c0_12, %c0_13, %c0_14] : memref<8x2x128xf32, #tpu.memory_space<vmem>>, vector<8x2x128xf32>
    %21 = vector.shape_cast %20 : vector<8x2x128xf32> to vector<16x128xf32>
    %cst_15 = arith.constant dense<0.000000e+00> : vector<16x128xf32>
    %22 = tpu.matmul %21, %19, %cst_15 {dimension_numbers = #tpu.dot_dimension_numbers<[1], [0], [0], [1], [0, 0, 1, 1], [], []>} : vector<16x128xf32>, vector<128x128xf32>, vector<16x128xf32> -> vector<16x128xf32>
    %23 = vector.shape_cast %22 : vector<16x128xf32> to vector<8x2x128xf32>
    %c0_16 = arith.constant 0 : index
    %c0_17 = arith.constant 0 : index
    %c0_18 = arith.constant 0 : index
    %24 = vector.load %arg1[%c0_16, %c0_17, %c0_18] : memref<2x2x32xf32, #tpu.memory_space<vmem>>, vector<1x2x32xf32>
    %25 = vector.shape_cast %24 : vector<1x2x32xf32> to vector<2x32xf32>
    %c0_19 = arith.constant 0 : index
    %c0_20 = arith.constant 0 : index
    %c0_21 = arith.constant 0 : index
    %26 = vector.load %arg2[%c0_19, %c0_20, %c0_21] : memref<2x2x32xf32, #tpu.memory_space<vmem>>, vector<1x2x32xf32>
    %27 = vector.shape_cast %26 : vector<1x2x32xf32> to vector<2x32xf32>
    %c1 = arith.constant 1 : index
    %c0_22 = arith.constant 0 : index
    %c0_23 = arith.constant 0 : index
    %28 = vector.load %arg1[%c1, %c0_22, %c0_23] : memref<2x2x32xf32, #tpu.memory_space<vmem>>, vector<1x2x32xf32>
    %29 = vector.shape_cast %28 : vector<1x2x32xf32> to vector<2x32xf32>
    %c1_24 = arith.constant 1 : index
    %c0_25 = arith.constant 0 : index
    %c0_26 = arith.constant 0 : index
    %30 = vector.load %arg2[%c1_24, %c0_25, %c0_26] : memref<2x2x32xf32, #tpu.memory_space<vmem>>, vector<1x2x32xf32>
    %31 = vector.shape_cast %30 : vector<1x2x32xf32> to vector<2x32xf32>
    %32 = arith.truncf %29 : vector<2x32xf32> to vector<2x32xbf16>
    %cst_27 = arith.constant dense<0.000000e+00> : vector<2x160xf32>
    %33 = tpu.matmul %32, %1, %cst_27 {dimension_numbers = #tpu.dot_dimension_numbers<[1], [0], [0], [1], [0, 0, 1, 1], [], []>} : vector<2x32xbf16>, vector<32x160xbf16>, vector<2x160xf32> -> vector<2x160xf32>
    %34 = vector.extract_strided_slice %33 {offsets = [0, 0], sizes = [2, 128], strides = [1, 1]} : vector<2x160xf32> to vector<2x128xf32>
    %35 = vector.extract_strided_slice %33 {offsets = [0, 128], sizes = [2, 32], strides = [1, 1]} : vector<2x160xf32> to vector<2x32xf32>
    %36 = vector.shape_cast %35 : vector<2x32xf32> to vector<2x1x32xf32>
    %37 = vector.broadcast %36 : vector<2x1x32xf32> to vector<2x8x32xf32>
    %38 = arith.addf %37, %18 : vector<2x8x32xf32>
    %39 = math.tanh %38 : vector<2x8x32xf32>
    %40 = vector.shape_cast %11 : vector<1x32xf32> to vector<1x1x32xf32>
    %41 = vector.broadcast %40 : vector<1x1x32xf32> to vector<2x8x32xf32>
    %42 = arith.mulf %39, %41 : vector<2x8x32xf32>
    %cst_28 = arith.constant dense<0.000000e+00> : vector<2x8xf32>
    %43 = vector.multi_reduction <add>, %42, %cst_28 [2] : vector<2x8x32xf32> to vector<2x8xf32>
    %cst_29 = arith.constant dense<0xFF800000> : vector<2xf32>
    %44 = vector.multi_reduction <maximumf>, %43, %cst_29 [1] : vector<2x8xf32> to vector<2xf32>
    %45 = vector.shape_cast %44 : vector<2xf32> to vector<2x1xf32>
    %46 = vector.broadcast %45 : vector<2x1xf32> to vector<2x8xf32>
    %47 = arith.subf %43, %46 : vector<2x8xf32>
    %48 = math.exp %47 : vector<2x8xf32>
    %cst_30 = arith.constant dense<0.000000e+00> : vector<2xf32>
    %49 = vector.multi_reduction <add>, %48, %cst_30 [1] : vector<2x8xf32> to vector<2xf32>
    %50 = vector.shape_cast %49 : vector<2xf32> to vector<2x1xf32>
    %51 = vector.broadcast %50 : vector<2x1xf32> to vector<2x8xf32>
    %52 = arith.divf %48, %51 : vector<2x8xf32>
    %53 = vector.shape_cast %52 : vector<2x8xf32> to vector<2x8x1xf32>
    %54 = vector.broadcast %53 : vector<2x8x1xf32> to vector<2x8x32xf32>
    %55 = arith.mulf %54, %12 : vector<2x8x32xf32>
    %cst_31 = arith.constant dense<0.000000e+00> : vector<2x32xf32>
    %56 = vector.multi_reduction <add>, %55, %cst_31 [1] : vector<2x8x32xf32> to vector<2x32xf32>
    %cst_32 = arith.constant dense<0.000000e+00> : vector<2xf32>
    %57 = vector.multi_reduction <add>, %56, %cst_32 [1] : vector<2x32xf32> to vector<2xf32>
    %58 = vector.shape_cast %57 : vector<2xf32> to vector<2x1xf32>
    %cst_33 = arith.constant 3.200000e+01 : f32
    %59 = vector.broadcast %cst_33 : f32 to vector<2x1xf32>
    %60 = arith.divf %58, %59 : vector<2x1xf32>
    %61 = vector.broadcast %60 : vector<2x1xf32> to vector<2x32xf32>
    %62 = arith.subf %56, %61 : vector<2x32xf32>
    %63 = arith.mulf %62, %62 : vector<2x32xf32>
    %cst_34 = arith.constant dense<0.000000e+00> : vector<2xf32>
    %64 = vector.multi_reduction <add>, %63, %cst_34 [1] : vector<2x32xf32> to vector<2xf32>
    %65 = vector.shape_cast %64 : vector<2xf32> to vector<2x1xf32>
    %cst_35 = arith.constant 3.200000e+01 : f32
    %66 = vector.broadcast %cst_35 : f32 to vector<2x1xf32>
    %67 = arith.divf %65, %66 : vector<2x1xf32>
    %68 = vector.broadcast %60 : vector<2x1xf32> to vector<2x32xf32>
    %69 = arith.subf %56, %68 : vector<2x32xf32>
    %cst_36 = arith.constant 9.99999974E-6 : f32
    %70 = vector.broadcast %cst_36 : f32 to vector<2x1xf32>
    %71 = arith.addf %67, %70 : vector<2x1xf32>
    %72 = math.rsqrt %71 : vector<2x1xf32>
    %73 = vector.broadcast %72 : vector<2x1xf32> to vector<2x32xf32>
    %74 = arith.mulf %69, %73 : vector<2x32xf32>
    %75 = vector.broadcast %9 : vector<1x32xf32> to vector<2x32xf32>
    %76 = arith.mulf %74, %75 : vector<2x32xf32>
    %77 = vector.broadcast %10 : vector<1x32xf32> to vector<2x32xf32>
    %78 = arith.addf %76, %77 : vector<2x32xf32>
    %79 = tpu.concatenate %78, %25 in 1 : vector<2x32xf32>, vector<2x32xf32> -> vector<2x64xf32>
    %80 = vector.extract_strided_slice %23 {offsets = [0, 0, 0], sizes = [1, 2, 128], strides = [1, 1, 1]} : vector<8x2x128xf32> to vector<1x2x128xf32>
    %81 = vector.shape_cast %80 : vector<1x2x128xf32> to vector<2x128xf32>
    %82 = arith.truncf %79 : vector<2x64xf32> to vector<2x64xbf16>
    %cst_37 = arith.constant dense<0.000000e+00> : vector<2x128xf32>
    %83 = tpu.matmul %82, %0, %cst_37 {dimension_numbers = #tpu.dot_dimension_numbers<[1], [0], [0], [1], [0, 0, 1, 1], [], []>} : vector<2x64xbf16>, vector<64x128xbf16>, vector<2x128xf32> -> vector<2x128xf32>
    %84 = arith.addf %81, %83 : vector<2x128xf32>
    %85 = vector.extract_strided_slice %84 {offsets = [0, 0], sizes = [2, 32], strides = [1, 1]} : vector<2x128xf32> to vector<2x32xf32>
    %86 = arith.negf %85 : vector<2x32xf32>
    %87 = math.exp %86 : vector<2x32xf32>
    %cst_38 = arith.constant 1.000000e+00 : f32
    %88 = vector.broadcast %cst_38 : f32 to vector<2x32xf32>
    %89 = arith.addf %88, %87 : vector<2x32xf32>
    %90 = arith.divf %88, %89 : vector<2x32xf32>
    %91 = vector.extract_strided_slice %84 {offsets = [0, 32], sizes = [2, 32], strides = [1, 1]} : vector<2x128xf32> to vector<2x32xf32>
    %92 = arith.negf %91 : vector<2x32xf32>
    %93 = math.exp %92 : vector<2x32xf32>
    %cst_39 = arith.constant 1.000000e+00 : f32
    %94 = vector.broadcast %cst_39 : f32 to vector<2x32xf32>
    %95 = arith.addf %94, %93 : vector<2x32xf32>
    %96 = arith.divf %94, %95 : vector<2x32xf32>
    %97 = vector.extract_strided_slice %84 {offsets = [0, 64], sizes = [2, 32], strides = [1, 1]} : vector<2x128xf32> to vector<2x32xf32>
    %98 = math.tanh %97 : vector<2x32xf32>
    %99 = vector.extract_strided_slice %84 {offsets = [0, 96], sizes = [2, 32], strides = [1, 1]} : vector<2x128xf32> to vector<2x32xf32>
    %100 = arith.negf %99 : vector<2x32xf32>
    %101 = math.exp %100 : vector<2x32xf32>
    %cst_40 = arith.constant 1.000000e+00 : f32
    %102 = vector.broadcast %cst_40 : f32 to vector<2x32xf32>
    %103 = arith.addf %102, %101 : vector<2x32xf32>
    %104 = arith.divf %102, %103 : vector<2x32xf32>
    %105 = arith.mulf %96, %27 : vector<2x32xf32>
    %106 = arith.mulf %90, %98 : vector<2x32xf32>
    %107 = arith.addf %105, %106 : vector<2x32xf32>
    %108 = math.tanh %107 : vector<2x32xf32>
    %109 = arith.mulf %104, %108 : vector<2x32xf32>
    %110 = arith.truncf %109 : vector<2x32xf32> to vector<2x32xbf16>
    %cst_41 = arith.constant dense<0.000000e+00> : vector<2x128xf32>
    %111 = tpu.matmul %110, %2, %cst_41 {dimension_numbers = #tpu.dot_dimension_numbers<[1], [0], [0], [1], [0, 0, 1, 1], [], []>} : vector<2x32xbf16>, vector<32x128xbf16>, vector<2x128xf32> -> vector<2x128xf32>
    %112 = arith.addf %111, %34 : vector<2x128xf32>
    %113 = vector.broadcast %6 : vector<1x128xf32> to vector<2x128xf32>
    %114 = arith.addf %112, %113 : vector<2x128xf32>
    %115 = vector.extract_strided_slice %114 {offsets = [0, 0], sizes = [2, 32], strides = [1, 1]} : vector<2x128xf32> to vector<2x32xf32>
    %116 = arith.negf %115 : vector<2x32xf32>
    %117 = math.exp %116 : vector<2x32xf32>
    %cst_42 = arith.constant 1.000000e+00 : f32
    %118 = vector.broadcast %cst_42 : f32 to vector<2x32xf32>
    %119 = arith.addf %118, %117 : vector<2x32xf32>
    %120 = arith.divf %118, %119 : vector<2x32xf32>
    %121 = vector.extract_strided_slice %114 {offsets = [0, 32], sizes = [2, 32], strides = [1, 1]} : vector<2x128xf32> to vector<2x32xf32>
    %122 = arith.negf %121 : vector<2x32xf32>
    %123 = math.exp %122 : vector<2x32xf32>
    %cst_43 = arith.constant 1.000000e+00 : f32
    %124 = vector.broadcast %cst_43 : f32 to vector<2x32xf32>
    %125 = arith.addf %124, %123 : vector<2x32xf32>
    %126 = arith.divf %124, %125 : vector<2x32xf32>
    %127 = vector.extract_strided_slice %114 {offsets = [0, 64], sizes = [2, 32], strides = [1, 1]} : vector<2x128xf32> to vector<2x32xf32>
    %128 = math.tanh %127 : vector<2x32xf32>
    %129 = vector.extract_strided_slice %114 {offsets = [0, 96], sizes = [2, 32], strides = [1, 1]} : vector<2x128xf32> to vector<2x32xf32>
    %130 = arith.negf %129 : vector<2x32xf32>
    %131 = math.exp %130 : vector<2x32xf32>
    %cst_44 = arith.constant 1.000000e+00 : f32
    %132 = vector.broadcast %cst_44 : f32 to vector<2x32xf32>
    %133 = arith.addf %132, %131 : vector<2x32xf32>
    %134 = arith.divf %132, %133 : vector<2x32xf32>
    %135 = arith.mulf %126, %31 : vector<2x32xf32>
    %136 = arith.mulf %120, %128 : vector<2x32xf32>
    %137 = arith.addf %135, %136 : vector<2x32xf32>
    %138 = math.tanh %137 : vector<2x32xf32>
    %139 = arith.mulf %134, %138 : vector<2x32xf32>
    %140 = arith.truncf %139 : vector<2x32xf32> to vector<2x32xbf16>
    %cst_45 = arith.constant dense<0.000000e+00> : vector<2x160xf32>
    %141 = tpu.matmul %140, %1, %cst_45 {dimension_numbers = #tpu.dot_dimension_numbers<[1], [0], [0], [1], [0, 0, 1, 1], [], []>} : vector<2x32xbf16>, vector<32x160xbf16>, vector<2x160xf32> -> vector<2x160xf32>
    %142 = vector.extract_strided_slice %141 {offsets = [0, 0], sizes = [2, 128], strides = [1, 1]} : vector<2x160xf32> to vector<2x128xf32>
    %143 = vector.extract_strided_slice %141 {offsets = [0, 128], sizes = [2, 32], strides = [1, 1]} : vector<2x160xf32> to vector<2x32xf32>
    %144 = vector.shape_cast %143 : vector<2x32xf32> to vector<2x1x32xf32>
    %145 = vector.broadcast %144 : vector<2x1x32xf32> to vector<2x8x32xf32>
    %146 = arith.addf %145, %18 : vector<2x8x32xf32>
    %147 = math.tanh %146 : vector<2x8x32xf32>
    %148 = vector.shape_cast %11 : vector<1x32xf32> to vector<1x1x32xf32>
    %149 = vector.broadcast %148 : vector<1x1x32xf32> to vector<2x8x32xf32>
    %150 = arith.mulf %147, %149 : vector<2x8x32xf32>
    %cst_46 = arith.constant dense<0.000000e+00> : vector<2x8xf32>
    %151 = vector.multi_reduction <add>, %150, %cst_46 [2] : vector<2x8x32xf32> to vector<2x8xf32>
    %cst_47 = arith.constant dense<0xFF800000> : vector<2xf32>
    %152 = vector.multi_reduction <maximumf>, %151, %cst_47 [1] : vector<2x8xf32> to vector<2xf32>
    %153 = vector.shape_cast %152 : vector<2xf32> to vector<2x1xf32>
    %154 = vector.broadcast %153 : vector<2x1xf32> to vector<2x8xf32>
    %155 = arith.subf %151, %154 : vector<2x8xf32>
    %156 = math.exp %155 : vector<2x8xf32>
    %cst_48 = arith.constant dense<0.000000e+00> : vector<2xf32>
    %157 = vector.multi_reduction <add>, %156, %cst_48 [1] : vector<2x8xf32> to vector<2xf32>
    %158 = vector.shape_cast %157 : vector<2xf32> to vector<2x1xf32>
    %159 = vector.broadcast %158 : vector<2x1xf32> to vector<2x8xf32>
    %160 = arith.divf %156, %159 : vector<2x8xf32>
    %161 = vector.shape_cast %160 : vector<2x8xf32> to vector<2x8x1xf32>
    %162 = vector.broadcast %161 : vector<2x8x1xf32> to vector<2x8x32xf32>
    %163 = arith.mulf %162, %12 : vector<2x8x32xf32>
    %cst_49 = arith.constant dense<0.000000e+00> : vector<2x32xf32>
    %164 = vector.multi_reduction <add>, %163, %cst_49 [1] : vector<2x8x32xf32> to vector<2x32xf32>
    %cst_50 = arith.constant dense<0.000000e+00> : vector<2xf32>
    %165 = vector.multi_reduction <add>, %164, %cst_50 [1] : vector<2x32xf32> to vector<2xf32>
    %166 = vector.shape_cast %165 : vector<2xf32> to vector<2x1xf32>
    %cst_51 = arith.constant 3.200000e+01 : f32
    %167 = vector.broadcast %cst_51 : f32 to vector<2x1xf32>
    %168 = arith.divf %166, %167 : vector<2x1xf32>
    %169 = vector.broadcast %168 : vector<2x1xf32> to vector<2x32xf32>
    %170 = arith.subf %164, %169 : vector<2x32xf32>
    %171 = arith.mulf %170, %170 : vector<2x32xf32>
    %cst_52 = arith.constant dense<0.000000e+00> : vector<2xf32>
    %172 = vector.multi_reduction <add>, %171, %cst_52 [1] : vector<2x32xf32> to vector<2xf32>
    %173 = vector.shape_cast %172 : vector<2xf32> to vector<2x1xf32>
    %cst_53 = arith.constant 3.200000e+01 : f32
    %174 = vector.broadcast %cst_53 : f32 to vector<2x1xf32>
    %175 = arith.divf %173, %174 : vector<2x1xf32>
    %176 = vector.broadcast %168 : vector<2x1xf32> to vector<2x32xf32>
    %177 = arith.subf %164, %176 : vector<2x32xf32>
    %cst_54 = arith.constant 9.99999974E-6 : f32
    %178 = vector.broadcast %cst_54 : f32 to vector<2x1xf32>
    %179 = arith.addf %175, %178 : vector<2x1xf32>
    %180 = math.rsqrt %179 : vector<2x1xf32>
    %181 = vector.broadcast %180 : vector<2x1xf32> to vector<2x32xf32>
    %182 = arith.mulf %177, %181 : vector<2x32xf32>
    %183 = vector.broadcast %9 : vector<1x32xf32> to vector<2x32xf32>
    %184 = arith.mulf %182, %183 : vector<2x32xf32>
    %185 = vector.broadcast %10 : vector<1x32xf32> to vector<2x32xf32>
    %186 = arith.addf %184, %185 : vector<2x32xf32>
    %187 = tpu.concatenate %186, %109 in 1 : vector<2x32xf32>, vector<2x32xf32> -> vector<2x64xf32>
    %188 = vector.extract_strided_slice %23 {offsets = [1, 0, 0], sizes = [1, 2, 128], strides = [1, 1, 1]} : vector<8x2x128xf32> to vector<1x2x128xf32>
    %189 = vector.shape_cast %188 : vector<1x2x128xf32> to vector<2x128xf32>
    %190 = arith.truncf %187 : vector<2x64xf32> to vector<2x64xbf16>
    %cst_55 = arith.constant dense<0.000000e+00> : vector<2x128xf32>
    %191 = tpu.matmul %190, %0, %cst_55 {dimension_numbers = #tpu.dot_dimension_numbers<[1], [0], [0], [1], [0, 0, 1, 1], [], []>} : vector<2x64xbf16>, vector<64x128xbf16>, vector<2x128xf32> -> vector<2x128xf32>
    %192 = arith.addf %189, %191 : vector<2x128xf32>
    %193 = vector.extract_strided_slice %192 {offsets = [0, 0], sizes = [2, 32], strides = [1, 1]} : vector<2x128xf32> to vector<2x32xf32>
    %194 = arith.negf %193 : vector<2x32xf32>
    %195 = math.exp %194 : vector<2x32xf32>
    %cst_56 = arith.constant 1.000000e+00 : f32
    %196 = vector.broadcast %cst_56 : f32 to vector<2x32xf32>
    %197 = arith.addf %196, %195 : vector<2x32xf32>
    %198 = arith.divf %196, %197 : vector<2x32xf32>
    %199 = vector.extract_strided_slice %192 {offsets = [0, 32], sizes = [2, 32], strides = [1, 1]} : vector<2x128xf32> to vector<2x32xf32>
    %200 = arith.negf %199 : vector<2x32xf32>
    %201 = math.exp %200 : vector<2x32xf32>
    %cst_57 = arith.constant 1.000000e+00 : f32
    %202 = vector.broadcast %cst_57 : f32 to vector<2x32xf32>
    %203 = arith.addf %202, %201 : vector<2x32xf32>
    %204 = arith.divf %202, %203 : vector<2x32xf32>
    %205 = vector.extract_strided_slice %192 {offsets = [0, 64], sizes = [2, 32], strides = [1, 1]} : vector<2x128xf32> to vector<2x32xf32>
    %206 = math.tanh %205 : vector<2x32xf32>
    %207 = vector.extract_strided_slice %192 {offsets = [0, 96], sizes = [2, 32], strides = [1, 1]} : vector<2x128xf32> to vector<2x32xf32>
    %208 = arith.negf %207 : vector<2x32xf32>
    %209 = math.exp %208 : vector<2x32xf32>
    %cst_58 = arith.constant 1.000000e+00 : f32
    %210 = vector.broadcast %cst_58 : f32 to vector<2x32xf32>
    %211 = arith.addf %210, %209 : vector<2x32xf32>
    %212 = arith.divf %210, %211 : vector<2x32xf32>
    %213 = arith.mulf %204, %107 : vector<2x32xf32>
    %214 = arith.mulf %198, %206 : vector<2x32xf32>
    %215 = arith.addf %213, %214 : vector<2x32xf32>
    %216 = math.tanh %215 : vector<2x32xf32>
    %217 = arith.mulf %212, %216 : vector<2x32xf32>
    %218 = arith.truncf %217 : vector<2x32xf32> to vector<2x32xbf16>
    %cst_59 = arith.constant dense<0.000000e+00> : vector<2x128xf32>
    %219 = tpu.matmul %218, %2, %cst_59 {dimension_numbers = #tpu.dot_dimension_numbers<[1], [0], [0], [1], [0, 0, 1, 1], [], []>} : vector<2x32xbf16>, vector<32x128xbf16>, vector<2x128xf32> -> vector<2x128xf32>
    %220 = arith.addf %219, %142 : vector<2x128xf32>
    %221 = vector.broadcast %6 : vector<1x128xf32> to vector<2x128xf32>
    %222 = arith.addf %220, %221 : vector<2x128xf32>
    %223 = vector.extract_strided_slice %222 {offsets = [0, 0], sizes = [2, 32], strides = [1, 1]} : vector<2x128xf32> to vector<2x32xf32>
    %224 = arith.negf %223 : vector<2x32xf32>
    %225 = math.exp %224 : vector<2x32xf32>
    %cst_60 = arith.constant 1.000000e+00 : f32
    %226 = vector.broadcast %cst_60 : f32 to vector<2x32xf32>
    %227 = arith.addf %226, %225 : vector<2x32xf32>
    %228 = arith.divf %226, %227 : vector<2x32xf32>
    %229 = vector.extract_strided_slice %222 {offsets = [0, 32], sizes = [2, 32], strides = [1, 1]} : vector<2x128xf32> to vector<2x32xf32>
    %230 = arith.negf %229 : vector<2x32xf32>
    %231 = math.exp %230 : vector<2x32xf32>
    %cst_61 = arith.constant 1.000000e+00 : f32
    %232 = vector.broadcast %cst_61 : f32 to vector<2x32xf32>
    %233 = arith.addf %232, %231 : vector<2x32xf32>
    %234 = arith.divf %232, %233 : vector<2x32xf32>
    %235 = vector.extract_strided_slice %222 {offsets = [0, 64], sizes = [2, 32], strides = [1, 1]} : vector<2x128xf32> to vector<2x32xf32>
    %236 = math.tanh %235 : vector<2x32xf32>
    %237 = vector.extract_strided_slice %222 {offsets = [0, 96], sizes = [2, 32], strides = [1, 1]} : vector<2x128xf32> to vector<2x32xf32>
    %238 = arith.negf %237 : vector<2x32xf32>
    %239 = math.exp %238 : vector<2x32xf32>
    %cst_62 = arith.constant 1.000000e+00 : f32
    %240 = vector.broadcast %cst_62 : f32 to vector<2x32xf32>
    %241 = arith.addf %240, %239 : vector<2x32xf32>
    %242 = arith.divf %240, %241 : vector<2x32xf32>
    %243 = arith.mulf %234, %137 : vector<2x32xf32>
    %244 = arith.mulf %228, %236 : vector<2x32xf32>
    %245 = arith.addf %243, %244 : vector<2x32xf32>
    %246 = math.tanh %245 : vector<2x32xf32>
    %247 = arith.mulf %242, %246 : vector<2x32xf32>
    %248 = arith.truncf %247 : vector<2x32xf32> to vector<2x32xbf16>
    %cst_63 = arith.constant dense<0.000000e+00> : vector<2x160xf32>
    %249 = tpu.matmul %248, %1, %cst_63 {dimension_numbers = #tpu.dot_dimension_numbers<[1], [0], [0], [1], [0, 0, 1, 1], [], []>} : vector<2x32xbf16>, vector<32x160xbf16>, vector<2x160xf32> -> vector<2x160xf32>
    %250 = vector.extract_strided_slice %249 {offsets = [0, 0], sizes = [2, 128], strides = [1, 1]} : vector<2x160xf32> to vector<2x128xf32>
    %251 = vector.extract_strided_slice %249 {offsets = [0, 128], sizes = [2, 32], strides = [1, 1]} : vector<2x160xf32> to vector<2x32xf32>
    %252 = vector.shape_cast %251 : vector<2x32xf32> to vector<2x1x32xf32>
    %253 = vector.broadcast %252 : vector<2x1x32xf32> to vector<2x8x32xf32>
    %254 = arith.addf %253, %18 : vector<2x8x32xf32>
    %255 = math.tanh %254 : vector<2x8x32xf32>
    %256 = vector.shape_cast %11 : vector<1x32xf32> to vector<1x1x32xf32>
    %257 = vector.broadcast %256 : vector<1x1x32xf32> to vector<2x8x32xf32>
    %258 = arith.mulf %255, %257 : vector<2x8x32xf32>
    %cst_64 = arith.constant dense<0.000000e+00> : vector<2x8xf32>
    %259 = vector.multi_reduction <add>, %258, %cst_64 [2] : vector<2x8x32xf32> to vector<2x8xf32>
    %cst_65 = arith.constant dense<0xFF800000> : vector<2xf32>
    %260 = vector.multi_reduction <maximumf>, %259, %cst_65 [1] : vector<2x8xf32> to vector<2xf32>
    %261 = vector.shape_cast %260 : vector<2xf32> to vector<2x1xf32>
    %262 = vector.broadcast %261 : vector<2x1xf32> to vector<2x8xf32>
    %263 = arith.subf %259, %262 : vector<2x8xf32>
    %264 = math.exp %263 : vector<2x8xf32>
    %cst_66 = arith.constant dense<0.000000e+00> : vector<2xf32>
    %265 = vector.multi_reduction <add>, %264, %cst_66 [1] : vector<2x8xf32> to vector<2xf32>
    %266 = vector.shape_cast %265 : vector<2xf32> to vector<2x1xf32>
    %267 = vector.broadcast %266 : vector<2x1xf32> to vector<2x8xf32>
    %268 = arith.divf %264, %267 : vector<2x8xf32>
    %269 = vector.shape_cast %268 : vector<2x8xf32> to vector<2x8x1xf32>
    %270 = vector.broadcast %269 : vector<2x8x1xf32> to vector<2x8x32xf32>
    %271 = arith.mulf %270, %12 : vector<2x8x32xf32>
    %cst_67 = arith.constant dense<0.000000e+00> : vector<2x32xf32>
    %272 = vector.multi_reduction <add>, %271, %cst_67 [1] : vector<2x8x32xf32> to vector<2x32xf32>
    %cst_68 = arith.constant dense<0.000000e+00> : vector<2xf32>
    %273 = vector.multi_reduction <add>, %272, %cst_68 [1] : vector<2x32xf32> to vector<2xf32>
    %274 = vector.shape_cast %273 : vector<2xf32> to vector<2x1xf32>
    %cst_69 = arith.constant 3.200000e+01 : f32
    %275 = vector.broadcast %cst_69 : f32 to vector<2x1xf32>
    %276 = arith.divf %274, %275 : vector<2x1xf32>
    %277 = vector.broadcast %276 : vector<2x1xf32> to vector<2x32xf32>
    %278 = arith.subf %272, %277 : vector<2x32xf32>
    %279 = arith.mulf %278, %278 : vector<2x32xf32>
    %cst_70 = arith.constant dense<0.000000e+00> : vector<2xf32>
    %280 = vector.multi_reduction <add>, %279, %cst_70 [1] : vector<2x32xf32> to vector<2xf32>
    %281 = vector.shape_cast %280 : vector<2xf32> to vector<2x1xf32>
    %cst_71 = arith.constant 3.200000e+01 : f32
    %282 = vector.broadcast %cst_71 : f32 to vector<2x1xf32>
    %283 = arith.divf %281, %282 : vector<2x1xf32>
    %284 = vector.broadcast %276 : vector<2x1xf32> to vector<2x32xf32>
    %285 = arith.subf %272, %284 : vector<2x32xf32>
    %cst_72 = arith.constant 9.99999974E-6 : f32
    %286 = vector.broadcast %cst_72 : f32 to vector<2x1xf32>
    %287 = arith.addf %283, %286 : vector<2x1xf32>
    %288 = math.rsqrt %287 : vector<2x1xf32>
    %289 = vector.broadcast %288 : vector<2x1xf32> to vector<2x32xf32>
    %290 = arith.mulf %285, %289 : vector<2x32xf32>
    %291 = vector.broadcast %9 : vector<1x32xf32> to vector<2x32xf32>
    %292 = arith.mulf %290, %291 : vector<2x32xf32>
    %293 = vector.broadcast %10 : vector<1x32xf32> to vector<2x32xf32>
    %294 = arith.addf %292, %293 : vector<2x32xf32>
    %295 = tpu.concatenate %294, %217 in 1 : vector<2x32xf32>, vector<2x32xf32> -> vector<2x64xf32>
    %296 = vector.extract_strided_slice %23 {offsets = [2, 0, 0], sizes = [1, 2, 128], strides = [1, 1, 1]} : vector<8x2x128xf32> to vector<1x2x128xf32>
    %297 = vector.shape_cast %296 : vector<1x2x128xf32> to vector<2x128xf32>
    %298 = arith.truncf %295 : vector<2x64xf32> to vector<2x64xbf16>
    %cst_73 = arith.constant dense<0.000000e+00> : vector<2x128xf32>
    %299 = tpu.matmul %298, %0, %cst_73 {dimension_numbers = #tpu.dot_dimension_numbers<[1], [0], [0], [1], [0, 0, 1, 1], [], []>} : vector<2x64xbf16>, vector<64x128xbf16>, vector<2x128xf32> -> vector<2x128xf32>
    %300 = arith.addf %297, %299 : vector<2x128xf32>
    %301 = vector.extract_strided_slice %300 {offsets = [0, 0], sizes = [2, 32], strides = [1, 1]} : vector<2x128xf32> to vector<2x32xf32>
    %302 = arith.negf %301 : vector<2x32xf32>
    %303 = math.exp %302 : vector<2x32xf32>
    %cst_74 = arith.constant 1.000000e+00 : f32
    %304 = vector.broadcast %cst_74 : f32 to vector<2x32xf32>
    %305 = arith.addf %304, %303 : vector<2x32xf32>
    %306 = arith.divf %304, %305 : vector<2x32xf32>
    %307 = vector.extract_strided_slice %300 {offsets = [0, 32], sizes = [2, 32], strides = [1, 1]} : vector<2x128xf32> to vector<2x32xf32>
    %308 = arith.negf %307 : vector<2x32xf32>
    %309 = math.exp %308 : vector<2x32xf32>
    %cst_75 = arith.constant 1.000000e+00 : f32
    %310 = vector.broadcast %cst_75 : f32 to vector<2x32xf32>
    %311 = arith.addf %310, %309 : vector<2x32xf32>
    %312 = arith.divf %310, %311 : vector<2x32xf32>
    %313 = vector.extract_strided_slice %300 {offsets = [0, 64], sizes = [2, 32], strides = [1, 1]} : vector<2x128xf32> to vector<2x32xf32>
    %314 = math.tanh %313 : vector<2x32xf32>
    %315 = vector.extract_strided_slice %300 {offsets = [0, 96], sizes = [2, 32], strides = [1, 1]} : vector<2x128xf32> to vector<2x32xf32>
    %316 = arith.negf %315 : vector<2x32xf32>
    %317 = math.exp %316 : vector<2x32xf32>
    %cst_76 = arith.constant 1.000000e+00 : f32
    %318 = vector.broadcast %cst_76 : f32 to vector<2x32xf32>
    %319 = arith.addf %318, %317 : vector<2x32xf32>
    %320 = arith.divf %318, %319 : vector<2x32xf32>
    %321 = arith.mulf %312, %215 : vector<2x32xf32>
    %322 = arith.mulf %306, %314 : vector<2x32xf32>
    %323 = arith.addf %321, %322 : vector<2x32xf32>
    %324 = math.tanh %323 : vector<2x32xf32>
    %325 = arith.mulf %320, %324 : vector<2x32xf32>
    %326 = arith.truncf %325 : vector<2x32xf32> to vector<2x32xbf16>
    %cst_77 = arith.constant dense<0.000000e+00> : vector<2x128xf32>
    %327 = tpu.matmul %326, %2, %cst_77 {dimension_numbers = #tpu.dot_dimension_numbers<[1], [0], [0], [1], [0, 0, 1, 1], [], []>} : vector<2x32xbf16>, vector<32x128xbf16>, vector<2x128xf32> -> vector<2x128xf32>
    %328 = arith.addf %327, %250 : vector<2x128xf32>
    %329 = vector.broadcast %6 : vector<1x128xf32> to vector<2x128xf32>
    %330 = arith.addf %328, %329 : vector<2x128xf32>
    %331 = vector.extract_strided_slice %330 {offsets = [0, 0], sizes = [2, 32], strides = [1, 1]} : vector<2x128xf32> to vector<2x32xf32>
    %332 = arith.negf %331 : vector<2x32xf32>
    %333 = math.exp %332 : vector<2x32xf32>
    %cst_78 = arith.constant 1.000000e+00 : f32
    %334 = vector.broadcast %cst_78 : f32 to vector<2x32xf32>
    %335 = arith.addf %334, %333 : vector<2x32xf32>
    %336 = arith.divf %334, %335 : vector<2x32xf32>
    %337 = vector.extract_strided_slice %330 {offsets = [0, 32], sizes = [2, 32], strides = [1, 1]} : vector<2x128xf32> to vector<2x32xf32>
    %338 = arith.negf %337 : vector<2x32xf32>
    %339 = math.exp %338 : vector<2x32xf32>
    %cst_79 = arith.constant 1.000000e+00 : f32
    %340 = vector.broadcast %cst_79 : f32 to vector<2x32xf32>
    %341 = arith.addf %340, %339 : vector<2x32xf32>
    %342 = arith.divf %340, %341 : vector<2x32xf32>
    %343 = vector.extract_strided_slice %330 {offsets = [0, 64], sizes = [2, 32], strides = [1, 1]} : vector<2x128xf32> to vector<2x32xf32>
    %344 = math.tanh %343 : vector<2x32xf32>
    %345 = vector.extract_strided_slice %330 {offsets = [0, 96], sizes = [2, 32], strides = [1, 1]} : vector<2x128xf32> to vector<2x32xf32>
    %346 = arith.negf %345 : vector<2x32xf32>
    %347 = math.exp %346 : vector<2x32xf32>
    %cst_80 = arith.constant 1.000000e+00 : f32
    %348 = vector.broadcast %cst_80 : f32 to vector<2x32xf32>
    %349 = arith.addf %348, %347 : vector<2x32xf32>
    %350 = arith.divf %348, %349 : vector<2x32xf32>
    %351 = arith.mulf %342, %245 : vector<2x32xf32>
    %352 = arith.mulf %336, %344 : vector<2x32xf32>
    %353 = arith.addf %351, %352 : vector<2x32xf32>
    %354 = math.tanh %353 : vector<2x32xf32>
    %355 = arith.mulf %350, %354 : vector<2x32xf32>
    %356 = arith.truncf %355 : vector<2x32xf32> to vector<2x32xbf16>
    %cst_81 = arith.constant dense<0.000000e+00> : vector<2x160xf32>
    %357 = tpu.matmul %356, %1, %cst_81 {dimension_numbers = #tpu.dot_dimension_numbers<[1], [0], [0], [1], [0, 0, 1, 1], [], []>} : vector<2x32xbf16>, vector<32x160xbf16>, vector<2x160xf32> -> vector<2x160xf32>
    %358 = vector.extract_strided_slice %357 {offsets = [0, 0], sizes = [2, 128], strides = [1, 1]} : vector<2x160xf32> to vector<2x128xf32>
    %359 = vector.extract_strided_slice %357 {offsets = [0, 128], sizes = [2, 32], strides = [1, 1]} : vector<2x160xf32> to vector<2x32xf32>
    %360 = vector.shape_cast %359 : vector<2x32xf32> to vector<2x1x32xf32>
    %361 = vector.broadcast %360 : vector<2x1x32xf32> to vector<2x8x32xf32>
    %362 = arith.addf %361, %18 : vector<2x8x32xf32>
    %363 = math.tanh %362 : vector<2x8x32xf32>
    %364 = vector.shape_cast %11 : vector<1x32xf32> to vector<1x1x32xf32>
    %365 = vector.broadcast %364 : vector<1x1x32xf32> to vector<2x8x32xf32>
    %366 = arith.mulf %363, %365 : vector<2x8x32xf32>
    %cst_82 = arith.constant dense<0.000000e+00> : vector<2x8xf32>
    %367 = vector.multi_reduction <add>, %366, %cst_82 [2] : vector<2x8x32xf32> to vector<2x8xf32>
    %cst_83 = arith.constant dense<0xFF800000> : vector<2xf32>
    %368 = vector.multi_reduction <maximumf>, %367, %cst_83 [1] : vector<2x8xf32> to vector<2xf32>
    %369 = vector.shape_cast %368 : vector<2xf32> to vector<2x1xf32>
    %370 = vector.broadcast %369 : vector<2x1xf32> to vector<2x8xf32>
    %371 = arith.subf %367, %370 : vector<2x8xf32>
    %372 = math.exp %371 : vector<2x8xf32>
    %cst_84 = arith.constant dense<0.000000e+00> : vector<2xf32>
    %373 = vector.multi_reduction <add>, %372, %cst_84 [1] : vector<2x8xf32> to vector<2xf32>
    %374 = vector.shape_cast %373 : vector<2xf32> to vector<2x1xf32>
    %375 = vector.broadcast %374 : vector<2x1xf32> to vector<2x8xf32>
    %376 = arith.divf %372, %375 : vector<2x8xf32>
    %377 = vector.shape_cast %376 : vector<2x8xf32> to vector<2x8x1xf32>
    %378 = vector.broadcast %377 : vector<2x8x1xf32> to vector<2x8x32xf32>
    %379 = arith.mulf %378, %12 : vector<2x8x32xf32>
    %cst_85 = arith.constant dense<0.000000e+00> : vector<2x32xf32>
    %380 = vector.multi_reduction <add>, %379, %cst_85 [1] : vector<2x8x32xf32> to vector<2x32xf32>
    %cst_86 = arith.constant dense<0.000000e+00> : vector<2xf32>
    %381 = vector.multi_reduction <add>, %380, %cst_86 [1] : vector<2x32xf32> to vector<2xf32>
    %382 = vector.shape_cast %381 : vector<2xf32> to vector<2x1xf32>
    %cst_87 = arith.constant 3.200000e+01 : f32
    %383 = vector.broadcast %cst_87 : f32 to vector<2x1xf32>
    %384 = arith.divf %382, %383 : vector<2x1xf32>
    %385 = vector.broadcast %384 : vector<2x1xf32> to vector<2x32xf32>
    %386 = arith.subf %380, %385 : vector<2x32xf32>
    %387 = arith.mulf %386, %386 : vector<2x32xf32>
    %cst_88 = arith.constant dense<0.000000e+00> : vector<2xf32>
    %388 = vector.multi_reduction <add>, %387, %cst_88 [1] : vector<2x32xf32> to vector<2xf32>
    %389 = vector.shape_cast %388 : vector<2xf32> to vector<2x1xf32>
    %cst_89 = arith.constant 3.200000e+01 : f32
    %390 = vector.broadcast %cst_89 : f32 to vector<2x1xf32>
    %391 = arith.divf %389, %390 : vector<2x1xf32>
    %392 = vector.broadcast %384 : vector<2x1xf32> to vector<2x32xf32>
    %393 = arith.subf %380, %392 : vector<2x32xf32>
    %cst_90 = arith.constant 9.99999974E-6 : f32
    %394 = vector.broadcast %cst_90 : f32 to vector<2x1xf32>
    %395 = arith.addf %391, %394 : vector<2x1xf32>
    %396 = math.rsqrt %395 : vector<2x1xf32>
    %397 = vector.broadcast %396 : vector<2x1xf32> to vector<2x32xf32>
    %398 = arith.mulf %393, %397 : vector<2x32xf32>
    %399 = vector.broadcast %9 : vector<1x32xf32> to vector<2x32xf32>
    %400 = arith.mulf %398, %399 : vector<2x32xf32>
    %401 = vector.broadcast %10 : vector<1x32xf32> to vector<2x32xf32>
    %402 = arith.addf %400, %401 : vector<2x32xf32>
    %403 = tpu.concatenate %402, %325 in 1 : vector<2x32xf32>, vector<2x32xf32> -> vector<2x64xf32>
    %404 = vector.extract_strided_slice %23 {offsets = [3, 0, 0], sizes = [1, 2, 128], strides = [1, 1, 1]} : vector<8x2x128xf32> to vector<1x2x128xf32>
    %405 = vector.shape_cast %404 : vector<1x2x128xf32> to vector<2x128xf32>
    %406 = arith.truncf %403 : vector<2x64xf32> to vector<2x64xbf16>
    %cst_91 = arith.constant dense<0.000000e+00> : vector<2x128xf32>
    %407 = tpu.matmul %406, %0, %cst_91 {dimension_numbers = #tpu.dot_dimension_numbers<[1], [0], [0], [1], [0, 0, 1, 1], [], []>} : vector<2x64xbf16>, vector<64x128xbf16>, vector<2x128xf32> -> vector<2x128xf32>
    %408 = arith.addf %405, %407 : vector<2x128xf32>
    %409 = vector.extract_strided_slice %408 {offsets = [0, 0], sizes = [2, 32], strides = [1, 1]} : vector<2x128xf32> to vector<2x32xf32>
    %410 = arith.negf %409 : vector<2x32xf32>
    %411 = math.exp %410 : vector<2x32xf32>
    %cst_92 = arith.constant 1.000000e+00 : f32
    %412 = vector.broadcast %cst_92 : f32 to vector<2x32xf32>
    %413 = arith.addf %412, %411 : vector<2x32xf32>
    %414 = arith.divf %412, %413 : vector<2x32xf32>
    %415 = vector.extract_strided_slice %408 {offsets = [0, 32], sizes = [2, 32], strides = [1, 1]} : vector<2x128xf32> to vector<2x32xf32>
    %416 = arith.negf %415 : vector<2x32xf32>
    %417 = math.exp %416 : vector<2x32xf32>
    %cst_93 = arith.constant 1.000000e+00 : f32
    %418 = vector.broadcast %cst_93 : f32 to vector<2x32xf32>
    %419 = arith.addf %418, %417 : vector<2x32xf32>
    %420 = arith.divf %418, %419 : vector<2x32xf32>
    %421 = vector.extract_strided_slice %408 {offsets = [0, 64], sizes = [2, 32], strides = [1, 1]} : vector<2x128xf32> to vector<2x32xf32>
    %422 = math.tanh %421 : vector<2x32xf32>
    %423 = vector.extract_strided_slice %408 {offsets = [0, 96], sizes = [2, 32], strides = [1, 1]} : vector<2x128xf32> to vector<2x32xf32>
    %424 = arith.negf %423 : vector<2x32xf32>
    %425 = math.exp %424 : vector<2x32xf32>
    %cst_94 = arith.constant 1.000000e+00 : f32
    %426 = vector.broadcast %cst_94 : f32 to vector<2x32xf32>
    %427 = arith.addf %426, %425 : vector<2x32xf32>
    %428 = arith.divf %426, %427 : vector<2x32xf32>
    %429 = arith.mulf %420, %323 : vector<2x32xf32>
    %430 = arith.mulf %414, %422 : vector<2x32xf32>
    %431 = arith.addf %429, %430 : vector<2x32xf32>
    %432 = math.tanh %431 : vector<2x32xf32>
    %433 = arith.mulf %428, %432 : vector<2x32xf32>
    %434 = arith.truncf %433 : vector<2x32xf32> to vector<2x32xbf16>
    %cst_95 = arith.constant dense<0.000000e+00> : vector<2x128xf32>
    %435 = tpu.matmul %434, %2, %cst_95 {dimension_numbers = #tpu.dot_dimension_numbers<[1], [0], [0], [1], [0, 0, 1, 1], [], []>} : vector<2x32xbf16>, vector<32x128xbf16>, vector<2x128xf32> -> vector<2x128xf32>
    %436 = arith.addf %435, %358 : vector<2x128xf32>
    %437 = vector.broadcast %6 : vector<1x128xf32> to vector<2x128xf32>
    %438 = arith.addf %436, %437 : vector<2x128xf32>
    %439 = vector.extract_strided_slice %438 {offsets = [0, 0], sizes = [2, 32], strides = [1, 1]} : vector<2x128xf32> to vector<2x32xf32>
    %440 = arith.negf %439 : vector<2x32xf32>
    %441 = math.exp %440 : vector<2x32xf32>
    %cst_96 = arith.constant 1.000000e+00 : f32
    %442 = vector.broadcast %cst_96 : f32 to vector<2x32xf32>
    %443 = arith.addf %442, %441 : vector<2x32xf32>
    %444 = arith.divf %442, %443 : vector<2x32xf32>
    %445 = vector.extract_strided_slice %438 {offsets = [0, 32], sizes = [2, 32], strides = [1, 1]} : vector<2x128xf32> to vector<2x32xf32>
    %446 = arith.negf %445 : vector<2x32xf32>
    %447 = math.exp %446 : vector<2x32xf32>
    %cst_97 = arith.constant 1.000000e+00 : f32
    %448 = vector.broadcast %cst_97 : f32 to vector<2x32xf32>
    %449 = arith.addf %448, %447 : vector<2x32xf32>
    %450 = arith.divf %448, %449 : vector<2x32xf32>
    %451 = vector.extract_strided_slice %438 {offsets = [0, 64], sizes = [2, 32], strides = [1, 1]} : vector<2x128xf32> to vector<2x32xf32>
    %452 = math.tanh %451 : vector<2x32xf32>
    %453 = vector.extract_strided_slice %438 {offsets = [0, 96], sizes = [2, 32], strides = [1, 1]} : vector<2x128xf32> to vector<2x32xf32>
    %454 = arith.negf %453 : vector<2x32xf32>
    %455 = math.exp %454 : vector<2x32xf32>
    %cst_98 = arith.constant 1.000000e+00 : f32
    %456 = vector.broadcast %cst_98 : f32 to vector<2x32xf32>
    %457 = arith.addf %456, %455 : vector<2x32xf32>
    %458 = arith.divf %456, %457 : vector<2x32xf32>
    %459 = arith.mulf %450, %353 : vector<2x32xf32>
    %460 = arith.mulf %444, %452 : vector<2x32xf32>
    %461 = arith.addf %459, %460 : vector<2x32xf32>
    %462 = math.tanh %461 : vector<2x32xf32>
    %463 = arith.mulf %458, %462 : vector<2x32xf32>
    %464 = arith.truncf %463 : vector<2x32xf32> to vector<2x32xbf16>
    %cst_99 = arith.constant dense<0.000000e+00> : vector<2x160xf32>
    %465 = tpu.matmul %464, %1, %cst_99 {dimension_numbers = #tpu.dot_dimension_numbers<[1], [0], [0], [1], [0, 0, 1, 1], [], []>} : vector<2x32xbf16>, vector<32x160xbf16>, vector<2x160xf32> -> vector<2x160xf32>
    %466 = vector.extract_strided_slice %465 {offsets = [0, 0], sizes = [2, 128], strides = [1, 1]} : vector<2x160xf32> to vector<2x128xf32>
    %467 = vector.extract_strided_slice %465 {offsets = [0, 128], sizes = [2, 32], strides = [1, 1]} : vector<2x160xf32> to vector<2x32xf32>
    %468 = vector.shape_cast %467 : vector<2x32xf32> to vector<2x1x32xf32>
    %469 = vector.broadcast %468 : vector<2x1x32xf32> to vector<2x8x32xf32>
    %470 = arith.addf %469, %18 : vector<2x8x32xf32>
    %471 = math.tanh %470 : vector<2x8x32xf32>
    %472 = vector.shape_cast %11 : vector<1x32xf32> to vector<1x1x32xf32>
    %473 = vector.broadcast %472 : vector<1x1x32xf32> to vector<2x8x32xf32>
    %474 = arith.mulf %471, %473 : vector<2x8x32xf32>
    %cst_100 = arith.constant dense<0.000000e+00> : vector<2x8xf32>
    %475 = vector.multi_reduction <add>, %474, %cst_100 [2] : vector<2x8x32xf32> to vector<2x8xf32>
    %cst_101 = arith.constant dense<0xFF800000> : vector<2xf32>
    %476 = vector.multi_reduction <maximumf>, %475, %cst_101 [1] : vector<2x8xf32> to vector<2xf32>
    %477 = vector.shape_cast %476 : vector<2xf32> to vector<2x1xf32>
    %478 = vector.broadcast %477 : vector<2x1xf32> to vector<2x8xf32>
    %479 = arith.subf %475, %478 : vector<2x8xf32>
    %480 = math.exp %479 : vector<2x8xf32>
    %cst_102 = arith.constant dense<0.000000e+00> : vector<2xf32>
    %481 = vector.multi_reduction <add>, %480, %cst_102 [1] : vector<2x8xf32> to vector<2xf32>
    %482 = vector.shape_cast %481 : vector<2xf32> to vector<2x1xf32>
    %483 = vector.broadcast %482 : vector<2x1xf32> to vector<2x8xf32>
    %484 = arith.divf %480, %483 : vector<2x8xf32>
    %485 = vector.shape_cast %484 : vector<2x8xf32> to vector<2x8x1xf32>
    %486 = vector.broadcast %485 : vector<2x8x1xf32> to vector<2x8x32xf32>
    %487 = arith.mulf %486, %12 : vector<2x8x32xf32>
    %cst_103 = arith.constant dense<0.000000e+00> : vector<2x32xf32>
    %488 = vector.multi_reduction <add>, %487, %cst_103 [1] : vector<2x8x32xf32> to vector<2x32xf32>
    %cst_104 = arith.constant dense<0.000000e+00> : vector<2xf32>
    %489 = vector.multi_reduction <add>, %488, %cst_104 [1] : vector<2x32xf32> to vector<2xf32>
    %490 = vector.shape_cast %489 : vector<2xf32> to vector<2x1xf32>
    %cst_105 = arith.constant 3.200000e+01 : f32
    %491 = vector.broadcast %cst_105 : f32 to vector<2x1xf32>
    %492 = arith.divf %490, %491 : vector<2x1xf32>
    %493 = vector.broadcast %492 : vector<2x1xf32> to vector<2x32xf32>
    %494 = arith.subf %488, %493 : vector<2x32xf32>
    %495 = arith.mulf %494, %494 : vector<2x32xf32>
    %cst_106 = arith.constant dense<0.000000e+00> : vector<2xf32>
    %496 = vector.multi_reduction <add>, %495, %cst_106 [1] : vector<2x32xf32> to vector<2xf32>
    %497 = vector.shape_cast %496 : vector<2xf32> to vector<2x1xf32>
    %cst_107 = arith.constant 3.200000e+01 : f32
    %498 = vector.broadcast %cst_107 : f32 to vector<2x1xf32>
    %499 = arith.divf %497, %498 : vector<2x1xf32>
    %500 = vector.broadcast %492 : vector<2x1xf32> to vector<2x32xf32>
    %501 = arith.subf %488, %500 : vector<2x32xf32>
    %cst_108 = arith.constant 9.99999974E-6 : f32
    %502 = vector.broadcast %cst_108 : f32 to vector<2x1xf32>
    %503 = arith.addf %499, %502 : vector<2x1xf32>
    %504 = math.rsqrt %503 : vector<2x1xf32>
    %505 = vector.broadcast %504 : vector<2x1xf32> to vector<2x32xf32>
    %506 = arith.mulf %501, %505 : vector<2x32xf32>
    %507 = vector.broadcast %9 : vector<1x32xf32> to vector<2x32xf32>
    %508 = arith.mulf %506, %507 : vector<2x32xf32>
    %509 = vector.broadcast %10 : vector<1x32xf32> to vector<2x32xf32>
    %510 = arith.addf %508, %509 : vector<2x32xf32>
    %511 = tpu.concatenate %510, %433 in 1 : vector<2x32xf32>, vector<2x32xf32> -> vector<2x64xf32>
    %512 = vector.extract_strided_slice %23 {offsets = [4, 0, 0], sizes = [1, 2, 128], strides = [1, 1, 1]} : vector<8x2x128xf32> to vector<1x2x128xf32>
    %513 = vector.shape_cast %512 : vector<1x2x128xf32> to vector<2x128xf32>
    %514 = arith.truncf %511 : vector<2x64xf32> to vector<2x64xbf16>
    %cst_109 = arith.constant dense<0.000000e+00> : vector<2x128xf32>
    %515 = tpu.matmul %514, %0, %cst_109 {dimension_numbers = #tpu.dot_dimension_numbers<[1], [0], [0], [1], [0, 0, 1, 1], [], []>} : vector<2x64xbf16>, vector<64x128xbf16>, vector<2x128xf32> -> vector<2x128xf32>
    %516 = arith.addf %513, %515 : vector<2x128xf32>
    %517 = vector.extract_strided_slice %516 {offsets = [0, 0], sizes = [2, 32], strides = [1, 1]} : vector<2x128xf32> to vector<2x32xf32>
    %518 = arith.negf %517 : vector<2x32xf32>
    %519 = math.exp %518 : vector<2x32xf32>
    %cst_110 = arith.constant 1.000000e+00 : f32
    %520 = vector.broadcast %cst_110 : f32 to vector<2x32xf32>
    %521 = arith.addf %520, %519 : vector<2x32xf32>
    %522 = arith.divf %520, %521 : vector<2x32xf32>
    %523 = vector.extract_strided_slice %516 {offsets = [0, 32], sizes = [2, 32], strides = [1, 1]} : vector<2x128xf32> to vector<2x32xf32>
    %524 = arith.negf %523 : vector<2x32xf32>
    %525 = math.exp %524 : vector<2x32xf32>
    %cst_111 = arith.constant 1.000000e+00 : f32
    %526 = vector.broadcast %cst_111 : f32 to vector<2x32xf32>
    %527 = arith.addf %526, %525 : vector<2x32xf32>
    %528 = arith.divf %526, %527 : vector<2x32xf32>
    %529 = vector.extract_strided_slice %516 {offsets = [0, 64], sizes = [2, 32], strides = [1, 1]} : vector<2x128xf32> to vector<2x32xf32>
    %530 = math.tanh %529 : vector<2x32xf32>
    %531 = vector.extract_strided_slice %516 {offsets = [0, 96], sizes = [2, 32], strides = [1, 1]} : vector<2x128xf32> to vector<2x32xf32>
    %532 = arith.negf %531 : vector<2x32xf32>
    %533 = math.exp %532 : vector<2x32xf32>
    %cst_112 = arith.constant 1.000000e+00 : f32
    %534 = vector.broadcast %cst_112 : f32 to vector<2x32xf32>
    %535 = arith.addf %534, %533 : vector<2x32xf32>
    %536 = arith.divf %534, %535 : vector<2x32xf32>
    %537 = arith.mulf %528, %431 : vector<2x32xf32>
    %538 = arith.mulf %522, %530 : vector<2x32xf32>
    %539 = arith.addf %537, %538 : vector<2x32xf32>
    %540 = math.tanh %539 : vector<2x32xf32>
    %541 = arith.mulf %536, %540 : vector<2x32xf32>
    %542 = arith.truncf %541 : vector<2x32xf32> to vector<2x32xbf16>
    %cst_113 = arith.constant dense<0.000000e+00> : vector<2x128xf32>
    %543 = tpu.matmul %542, %2, %cst_113 {dimension_numbers = #tpu.dot_dimension_numbers<[1], [0], [0], [1], [0, 0, 1, 1], [], []>} : vector<2x32xbf16>, vector<32x128xbf16>, vector<2x128xf32> -> vector<2x128xf32>
    %544 = arith.addf %543, %466 : vector<2x128xf32>
    %545 = vector.broadcast %6 : vector<1x128xf32> to vector<2x128xf32>
    %546 = arith.addf %544, %545 : vector<2x128xf32>
    %547 = vector.extract_strided_slice %546 {offsets = [0, 0], sizes = [2, 32], strides = [1, 1]} : vector<2x128xf32> to vector<2x32xf32>
    %548 = arith.negf %547 : vector<2x32xf32>
    %549 = math.exp %548 : vector<2x32xf32>
    %cst_114 = arith.constant 1.000000e+00 : f32
    %550 = vector.broadcast %cst_114 : f32 to vector<2x32xf32>
    %551 = arith.addf %550, %549 : vector<2x32xf32>
    %552 = arith.divf %550, %551 : vector<2x32xf32>
    %553 = vector.extract_strided_slice %546 {offsets = [0, 32], sizes = [2, 32], strides = [1, 1]} : vector<2x128xf32> to vector<2x32xf32>
    %554 = arith.negf %553 : vector<2x32xf32>
    %555 = math.exp %554 : vector<2x32xf32>
    %cst_115 = arith.constant 1.000000e+00 : f32
    %556 = vector.broadcast %cst_115 : f32 to vector<2x32xf32>
    %557 = arith.addf %556, %555 : vector<2x32xf32>
    %558 = arith.divf %556, %557 : vector<2x32xf32>
    %559 = vector.extract_strided_slice %546 {offsets = [0, 64], sizes = [2, 32], strides = [1, 1]} : vector<2x128xf32> to vector<2x32xf32>
    %560 = math.tanh %559 : vector<2x32xf32>
    %561 = vector.extract_strided_slice %546 {offsets = [0, 96], sizes = [2, 32], strides = [1, 1]} : vector<2x128xf32> to vector<2x32xf32>
    %562 = arith.negf %561 : vector<2x32xf32>
    %563 = math.exp %562 : vector<2x32xf32>
    %cst_116 = arith.constant 1.000000e+00 : f32
    %564 = vector.broadcast %cst_116 : f32 to vector<2x32xf32>
    %565 = arith.addf %564, %563 : vector<2x32xf32>
    %566 = arith.divf %564, %565 : vector<2x32xf32>
    %567 = arith.mulf %558, %461 : vector<2x32xf32>
    %568 = arith.mulf %552, %560 : vector<2x32xf32>
    %569 = arith.addf %567, %568 : vector<2x32xf32>
    %570 = math.tanh %569 : vector<2x32xf32>
    %571 = arith.mulf %566, %570 : vector<2x32xf32>
    %572 = arith.truncf %571 : vector<2x32xf32> to vector<2x32xbf16>
    %cst_117 = arith.constant dense<0.000000e+00> : vector<2x160xf32>
    %573 = tpu.matmul %572, %1, %cst_117 {dimension_numbers = #tpu.dot_dimension_numbers<[1], [0], [0], [1], [0, 0, 1, 1], [], []>} : vector<2x32xbf16>, vector<32x160xbf16>, vector<2x160xf32> -> vector<2x160xf32>
    %574 = vector.extract_strided_slice %573 {offsets = [0, 0], sizes = [2, 128], strides = [1, 1]} : vector<2x160xf32> to vector<2x128xf32>
    %575 = vector.extract_strided_slice %573 {offsets = [0, 128], sizes = [2, 32], strides = [1, 1]} : vector<2x160xf32> to vector<2x32xf32>
    %576 = vector.shape_cast %575 : vector<2x32xf32> to vector<2x1x32xf32>
    %577 = vector.broadcast %576 : vector<2x1x32xf32> to vector<2x8x32xf32>
    %578 = arith.addf %577, %18 : vector<2x8x32xf32>
    %579 = math.tanh %578 : vector<2x8x32xf32>
    %580 = vector.shape_cast %11 : vector<1x32xf32> to vector<1x1x32xf32>
    %581 = vector.broadcast %580 : vector<1x1x32xf32> to vector<2x8x32xf32>
    %582 = arith.mulf %579, %581 : vector<2x8x32xf32>
    %cst_118 = arith.constant dense<0.000000e+00> : vector<2x8xf32>
    %583 = vector.multi_reduction <add>, %582, %cst_118 [2] : vector<2x8x32xf32> to vector<2x8xf32>
    %cst_119 = arith.constant dense<0xFF800000> : vector<2xf32>
    %584 = vector.multi_reduction <maximumf>, %583, %cst_119 [1] : vector<2x8xf32> to vector<2xf32>
    %585 = vector.shape_cast %584 : vector<2xf32> to vector<2x1xf32>
    %586 = vector.broadcast %585 : vector<2x1xf32> to vector<2x8xf32>
    %587 = arith.subf %583, %586 : vector<2x8xf32>
    %588 = math.exp %587 : vector<2x8xf32>
    %cst_120 = arith.constant dense<0.000000e+00> : vector<2xf32>
    %589 = vector.multi_reduction <add>, %588, %cst_120 [1] : vector<2x8xf32> to vector<2xf32>
    %590 = vector.shape_cast %589 : vector<2xf32> to vector<2x1xf32>
    %591 = vector.broadcast %590 : vector<2x1xf32> to vector<2x8xf32>
    %592 = arith.divf %588, %591 : vector<2x8xf32>
    %593 = vector.shape_cast %592 : vector<2x8xf32> to vector<2x8x1xf32>
    %594 = vector.broadcast %593 : vector<2x8x1xf32> to vector<2x8x32xf32>
    %595 = arith.mulf %594, %12 : vector<2x8x32xf32>
    %cst_121 = arith.constant dense<0.000000e+00> : vector<2x32xf32>
    %596 = vector.multi_reduction <add>, %595, %cst_121 [1] : vector<2x8x32xf32> to vector<2x32xf32>
    %cst_122 = arith.constant dense<0.000000e+00> : vector<2xf32>
    %597 = vector.multi_reduction <add>, %596, %cst_122 [1] : vector<2x32xf32> to vector<2xf32>
    %598 = vector.shape_cast %597 : vector<2xf32> to vector<2x1xf32>
    %cst_123 = arith.constant 3.200000e+01 : f32
    %599 = vector.broadcast %cst_123 : f32 to vector<2x1xf32>
    %600 = arith.divf %598, %599 : vector<2x1xf32>
    %601 = vector.broadcast %600 : vector<2x1xf32> to vector<2x32xf32>
    %602 = arith.subf %596, %601 : vector<2x32xf32>
    %603 = arith.mulf %602, %602 : vector<2x32xf32>
    %cst_124 = arith.constant dense<0.000000e+00> : vector<2xf32>
    %604 = vector.multi_reduction <add>, %603, %cst_124 [1] : vector<2x32xf32> to vector<2xf32>
    %605 = vector.shape_cast %604 : vector<2xf32> to vector<2x1xf32>
    %cst_125 = arith.constant 3.200000e+01 : f32
    %606 = vector.broadcast %cst_125 : f32 to vector<2x1xf32>
    %607 = arith.divf %605, %606 : vector<2x1xf32>
    %608 = vector.broadcast %600 : vector<2x1xf32> to vector<2x32xf32>
    %609 = arith.subf %596, %608 : vector<2x32xf32>
    %cst_126 = arith.constant 9.99999974E-6 : f32
    %610 = vector.broadcast %cst_126 : f32 to vector<2x1xf32>
    %611 = arith.addf %607, %610 : vector<2x1xf32>
    %612 = math.rsqrt %611 : vector<2x1xf32>
    %613 = vector.broadcast %612 : vector<2x1xf32> to vector<2x32xf32>
    %614 = arith.mulf %609, %613 : vector<2x32xf32>
    %615 = vector.broadcast %9 : vector<1x32xf32> to vector<2x32xf32>
    %616 = arith.mulf %614, %615 : vector<2x32xf32>
    %617 = vector.broadcast %10 : vector<1x32xf32> to vector<2x32xf32>
    %618 = arith.addf %616, %617 : vector<2x32xf32>
    %619 = tpu.concatenate %618, %541 in 1 : vector<2x32xf32>, vector<2x32xf32> -> vector<2x64xf32>
    %620 = vector.extract_strided_slice %23 {offsets = [5, 0, 0], sizes = [1, 2, 128], strides = [1, 1, 1]} : vector<8x2x128xf32> to vector<1x2x128xf32>
    %621 = vector.shape_cast %620 : vector<1x2x128xf32> to vector<2x128xf32>
    %622 = arith.truncf %619 : vector<2x64xf32> to vector<2x64xbf16>
    %cst_127 = arith.constant dense<0.000000e+00> : vector<2x128xf32>
    %623 = tpu.matmul %622, %0, %cst_127 {dimension_numbers = #tpu.dot_dimension_numbers<[1], [0], [0], [1], [0, 0, 1, 1], [], []>} : vector<2x64xbf16>, vector<64x128xbf16>, vector<2x128xf32> -> vector<2x128xf32>
    %624 = arith.addf %621, %623 : vector<2x128xf32>
    %625 = vector.extract_strided_slice %624 {offsets = [0, 0], sizes = [2, 32], strides = [1, 1]} : vector<2x128xf32> to vector<2x32xf32>
    %626 = arith.negf %625 : vector<2x32xf32>
    %627 = math.exp %626 : vector<2x32xf32>
    %cst_128 = arith.constant 1.000000e+00 : f32
    %628 = vector.broadcast %cst_128 : f32 to vector<2x32xf32>
    %629 = arith.addf %628, %627 : vector<2x32xf32>
    %630 = arith.divf %628, %629 : vector<2x32xf32>
    %631 = vector.extract_strided_slice %624 {offsets = [0, 32], sizes = [2, 32], strides = [1, 1]} : vector<2x128xf32> to vector<2x32xf32>
    %632 = arith.negf %631 : vector<2x32xf32>
    %633 = math.exp %632 : vector<2x32xf32>
    %cst_129 = arith.constant 1.000000e+00 : f32
    %634 = vector.broadcast %cst_129 : f32 to vector<2x32xf32>
    %635 = arith.addf %634, %633 : vector<2x32xf32>
    %636 = arith.divf %634, %635 : vector<2x32xf32>
    %637 = vector.extract_strided_slice %624 {offsets = [0, 64], sizes = [2, 32], strides = [1, 1]} : vector<2x128xf32> to vector<2x32xf32>
    %638 = math.tanh %637 : vector<2x32xf32>
    %639 = vector.extract_strided_slice %624 {offsets = [0, 96], sizes = [2, 32], strides = [1, 1]} : vector<2x128xf32> to vector<2x32xf32>
    %640 = arith.negf %639 : vector<2x32xf32>
    %641 = math.exp %640 : vector<2x32xf32>
    %cst_130 = arith.constant 1.000000e+00 : f32
    %642 = vector.broadcast %cst_130 : f32 to vector<2x32xf32>
    %643 = arith.addf %642, %641 : vector<2x32xf32>
    %644 = arith.divf %642, %643 : vector<2x32xf32>
    %645 = arith.mulf %636, %539 : vector<2x32xf32>
    %646 = arith.mulf %630, %638 : vector<2x32xf32>
    %647 = arith.addf %645, %646 : vector<2x32xf32>
    %648 = math.tanh %647 : vector<2x32xf32>
    %649 = arith.mulf %644, %648 : vector<2x32xf32>
    %650 = arith.truncf %649 : vector<2x32xf32> to vector<2x32xbf16>
    %cst_131 = arith.constant dense<0.000000e+00> : vector<2x128xf32>
    %651 = tpu.matmul %650, %2, %cst_131 {dimension_numbers = #tpu.dot_dimension_numbers<[1], [0], [0], [1], [0, 0, 1, 1], [], []>} : vector<2x32xbf16>, vector<32x128xbf16>, vector<2x128xf32> -> vector<2x128xf32>
    %652 = arith.addf %651, %574 : vector<2x128xf32>
    %653 = vector.broadcast %6 : vector<1x128xf32> to vector<2x128xf32>
    %654 = arith.addf %652, %653 : vector<2x128xf32>
    %655 = vector.extract_strided_slice %654 {offsets = [0, 0], sizes = [2, 32], strides = [1, 1]} : vector<2x128xf32> to vector<2x32xf32>
    %656 = arith.negf %655 : vector<2x32xf32>
    %657 = math.exp %656 : vector<2x32xf32>
    %cst_132 = arith.constant 1.000000e+00 : f32
    %658 = vector.broadcast %cst_132 : f32 to vector<2x32xf32>
    %659 = arith.addf %658, %657 : vector<2x32xf32>
    %660 = arith.divf %658, %659 : vector<2x32xf32>
    %661 = vector.extract_strided_slice %654 {offsets = [0, 32], sizes = [2, 32], strides = [1, 1]} : vector<2x128xf32> to vector<2x32xf32>
    %662 = arith.negf %661 : vector<2x32xf32>
    %663 = math.exp %662 : vector<2x32xf32>
    %cst_133 = arith.constant 1.000000e+00 : f32
    %664 = vector.broadcast %cst_133 : f32 to vector<2x32xf32>
    %665 = arith.addf %664, %663 : vector<2x32xf32>
    %666 = arith.divf %664, %665 : vector<2x32xf32>
    %667 = vector.extract_strided_slice %654 {offsets = [0, 64], sizes = [2, 32], strides = [1, 1]} : vector<2x128xf32> to vector<2x32xf32>
    %668 = math.tanh %667 : vector<2x32xf32>
    %669 = vector.extract_strided_slice %654 {offsets = [0, 96], sizes = [2, 32], strides = [1, 1]} : vector<2x128xf32> to vector<2x32xf32>
    %670 = arith.negf %669 : vector<2x32xf32>
    %671 = math.exp %670 : vector<2x32xf32>
    %cst_134 = arith.constant 1.000000e+00 : f32
    %672 = vector.broadcast %cst_134 : f32 to vector<2x32xf32>
    %673 = arith.addf %672, %671 : vector<2x32xf32>
    %674 = arith.divf %672, %673 : vector<2x32xf32>
    %675 = arith.mulf %666, %569 : vector<2x32xf32>
    %676 = arith.mulf %660, %668 : vector<2x32xf32>
    %677 = arith.addf %675, %676 : vector<2x32xf32>
    %678 = math.tanh %677 : vector<2x32xf32>
    %679 = arith.mulf %674, %678 : vector<2x32xf32>
    %680 = arith.truncf %679 : vector<2x32xf32> to vector<2x32xbf16>
    %cst_135 = arith.constant dense<0.000000e+00> : vector<2x160xf32>
    %681 = tpu.matmul %680, %1, %cst_135 {dimension_numbers = #tpu.dot_dimension_numbers<[1], [0], [0], [1], [0, 0, 1, 1], [], []>} : vector<2x32xbf16>, vector<32x160xbf16>, vector<2x160xf32> -> vector<2x160xf32>
    %682 = vector.extract_strided_slice %681 {offsets = [0, 0], sizes = [2, 128], strides = [1, 1]} : vector<2x160xf32> to vector<2x128xf32>
    %683 = vector.extract_strided_slice %681 {offsets = [0, 128], sizes = [2, 32], strides = [1, 1]} : vector<2x160xf32> to vector<2x32xf32>
    %684 = vector.shape_cast %683 : vector<2x32xf32> to vector<2x1x32xf32>
    %685 = vector.broadcast %684 : vector<2x1x32xf32> to vector<2x8x32xf32>
    %686 = arith.addf %685, %18 : vector<2x8x32xf32>
    %687 = math.tanh %686 : vector<2x8x32xf32>
    %688 = vector.shape_cast %11 : vector<1x32xf32> to vector<1x1x32xf32>
    %689 = vector.broadcast %688 : vector<1x1x32xf32> to vector<2x8x32xf32>
    %690 = arith.mulf %687, %689 : vector<2x8x32xf32>
    %cst_136 = arith.constant dense<0.000000e+00> : vector<2x8xf32>
    %691 = vector.multi_reduction <add>, %690, %cst_136 [2] : vector<2x8x32xf32> to vector<2x8xf32>
    %cst_137 = arith.constant dense<0xFF800000> : vector<2xf32>
    %692 = vector.multi_reduction <maximumf>, %691, %cst_137 [1] : vector<2x8xf32> to vector<2xf32>
    %693 = vector.shape_cast %692 : vector<2xf32> to vector<2x1xf32>
    %694 = vector.broadcast %693 : vector<2x1xf32> to vector<2x8xf32>
    %695 = arith.subf %691, %694 : vector<2x8xf32>
    %696 = math.exp %695 : vector<2x8xf32>
    %cst_138 = arith.constant dense<0.000000e+00> : vector<2xf32>
    %697 = vector.multi_reduction <add>, %696, %cst_138 [1] : vector<2x8xf32> to vector<2xf32>
    %698 = vector.shape_cast %697 : vector<2xf32> to vector<2x1xf32>
    %699 = vector.broadcast %698 : vector<2x1xf32> to vector<2x8xf32>
    %700 = arith.divf %696, %699 : vector<2x8xf32>
    %701 = vector.shape_cast %700 : vector<2x8xf32> to vector<2x8x1xf32>
    %702 = vector.broadcast %701 : vector<2x8x1xf32> to vector<2x8x32xf32>
    %703 = arith.mulf %702, %12 : vector<2x8x32xf32>
    %cst_139 = arith.constant dense<0.000000e+00> : vector<2x32xf32>
    %704 = vector.multi_reduction <add>, %703, %cst_139 [1] : vector<2x8x32xf32> to vector<2x32xf32>
    %cst_140 = arith.constant dense<0.000000e+00> : vector<2xf32>
    %705 = vector.multi_reduction <add>, %704, %cst_140 [1] : vector<2x32xf32> to vector<2xf32>
    %706 = vector.shape_cast %705 : vector<2xf32> to vector<2x1xf32>
    %cst_141 = arith.constant 3.200000e+01 : f32
    %707 = vector.broadcast %cst_141 : f32 to vector<2x1xf32>
    %708 = arith.divf %706, %707 : vector<2x1xf32>
    %709 = vector.broadcast %708 : vector<2x1xf32> to vector<2x32xf32>
    %710 = arith.subf %704, %709 : vector<2x32xf32>
    %711 = arith.mulf %710, %710 : vector<2x32xf32>
    %cst_142 = arith.constant dense<0.000000e+00> : vector<2xf32>
    %712 = vector.multi_reduction <add>, %711, %cst_142 [1] : vector<2x32xf32> to vector<2xf32>
    %713 = vector.shape_cast %712 : vector<2xf32> to vector<2x1xf32>
    %cst_143 = arith.constant 3.200000e+01 : f32
    %714 = vector.broadcast %cst_143 : f32 to vector<2x1xf32>
    %715 = arith.divf %713, %714 : vector<2x1xf32>
    %716 = vector.broadcast %708 : vector<2x1xf32> to vector<2x32xf32>
    %717 = arith.subf %704, %716 : vector<2x32xf32>
    %cst_144 = arith.constant 9.99999974E-6 : f32
    %718 = vector.broadcast %cst_144 : f32 to vector<2x1xf32>
    %719 = arith.addf %715, %718 : vector<2x1xf32>
    %720 = math.rsqrt %719 : vector<2x1xf32>
    %721 = vector.broadcast %720 : vector<2x1xf32> to vector<2x32xf32>
    %722 = arith.mulf %717, %721 : vector<2x32xf32>
    %723 = vector.broadcast %9 : vector<1x32xf32> to vector<2x32xf32>
    %724 = arith.mulf %722, %723 : vector<2x32xf32>
    %725 = vector.broadcast %10 : vector<1x32xf32> to vector<2x32xf32>
    %726 = arith.addf %724, %725 : vector<2x32xf32>
    %727 = tpu.concatenate %726, %649 in 1 : vector<2x32xf32>, vector<2x32xf32> -> vector<2x64xf32>
    %728 = vector.extract_strided_slice %23 {offsets = [6, 0, 0], sizes = [1, 2, 128], strides = [1, 1, 1]} : vector<8x2x128xf32> to vector<1x2x128xf32>
    %729 = vector.shape_cast %728 : vector<1x2x128xf32> to vector<2x128xf32>
    %730 = arith.truncf %727 : vector<2x64xf32> to vector<2x64xbf16>
    %cst_145 = arith.constant dense<0.000000e+00> : vector<2x128xf32>
    %731 = tpu.matmul %730, %0, %cst_145 {dimension_numbers = #tpu.dot_dimension_numbers<[1], [0], [0], [1], [0, 0, 1, 1], [], []>} : vector<2x64xbf16>, vector<64x128xbf16>, vector<2x128xf32> -> vector<2x128xf32>
    %732 = arith.addf %729, %731 : vector<2x128xf32>
    %733 = vector.extract_strided_slice %732 {offsets = [0, 0], sizes = [2, 32], strides = [1, 1]} : vector<2x128xf32> to vector<2x32xf32>
    %734 = arith.negf %733 : vector<2x32xf32>
    %735 = math.exp %734 : vector<2x32xf32>
    %cst_146 = arith.constant 1.000000e+00 : f32
    %736 = vector.broadcast %cst_146 : f32 to vector<2x32xf32>
    %737 = arith.addf %736, %735 : vector<2x32xf32>
    %738 = arith.divf %736, %737 : vector<2x32xf32>
    %739 = vector.extract_strided_slice %732 {offsets = [0, 32], sizes = [2, 32], strides = [1, 1]} : vector<2x128xf32> to vector<2x32xf32>
    %740 = arith.negf %739 : vector<2x32xf32>
    %741 = math.exp %740 : vector<2x32xf32>
    %cst_147 = arith.constant 1.000000e+00 : f32
    %742 = vector.broadcast %cst_147 : f32 to vector<2x32xf32>
    %743 = arith.addf %742, %741 : vector<2x32xf32>
    %744 = arith.divf %742, %743 : vector<2x32xf32>
    %745 = vector.extract_strided_slice %732 {offsets = [0, 64], sizes = [2, 32], strides = [1, 1]} : vector<2x128xf32> to vector<2x32xf32>
    %746 = math.tanh %745 : vector<2x32xf32>
    %747 = vector.extract_strided_slice %732 {offsets = [0, 96], sizes = [2, 32], strides = [1, 1]} : vector<2x128xf32> to vector<2x32xf32>
    %748 = arith.negf %747 : vector<2x32xf32>
    %749 = math.exp %748 : vector<2x32xf32>
    %cst_148 = arith.constant 1.000000e+00 : f32
    %750 = vector.broadcast %cst_148 : f32 to vector<2x32xf32>
    %751 = arith.addf %750, %749 : vector<2x32xf32>
    %752 = arith.divf %750, %751 : vector<2x32xf32>
    %753 = arith.mulf %744, %647 : vector<2x32xf32>
    %754 = arith.mulf %738, %746 : vector<2x32xf32>
    %755 = arith.addf %753, %754 : vector<2x32xf32>
    %756 = math.tanh %755 : vector<2x32xf32>
    %757 = arith.mulf %752, %756 : vector<2x32xf32>
    %758 = arith.truncf %757 : vector<2x32xf32> to vector<2x32xbf16>
    %cst_149 = arith.constant dense<0.000000e+00> : vector<2x128xf32>
    %759 = tpu.matmul %758, %2, %cst_149 {dimension_numbers = #tpu.dot_dimension_numbers<[1], [0], [0], [1], [0, 0, 1, 1], [], []>} : vector<2x32xbf16>, vector<32x128xbf16>, vector<2x128xf32> -> vector<2x128xf32>
    %760 = arith.addf %759, %682 : vector<2x128xf32>
    %761 = vector.broadcast %6 : vector<1x128xf32> to vector<2x128xf32>
    %762 = arith.addf %760, %761 : vector<2x128xf32>
    %763 = vector.extract_strided_slice %762 {offsets = [0, 0], sizes = [2, 32], strides = [1, 1]} : vector<2x128xf32> to vector<2x32xf32>
    %764 = arith.negf %763 : vector<2x32xf32>
    %765 = math.exp %764 : vector<2x32xf32>
    %cst_150 = arith.constant 1.000000e+00 : f32
    %766 = vector.broadcast %cst_150 : f32 to vector<2x32xf32>
    %767 = arith.addf %766, %765 : vector<2x32xf32>
    %768 = arith.divf %766, %767 : vector<2x32xf32>
    %769 = vector.extract_strided_slice %762 {offsets = [0, 32], sizes = [2, 32], strides = [1, 1]} : vector<2x128xf32> to vector<2x32xf32>
    %770 = arith.negf %769 : vector<2x32xf32>
    %771 = math.exp %770 : vector<2x32xf32>
    %cst_151 = arith.constant 1.000000e+00 : f32
    %772 = vector.broadcast %cst_151 : f32 to vector<2x32xf32>
    %773 = arith.addf %772, %771 : vector<2x32xf32>
    %774 = arith.divf %772, %773 : vector<2x32xf32>
    %775 = vector.extract_strided_slice %762 {offsets = [0, 64], sizes = [2, 32], strides = [1, 1]} : vector<2x128xf32> to vector<2x32xf32>
    %776 = math.tanh %775 : vector<2x32xf32>
    %777 = vector.extract_strided_slice %762 {offsets = [0, 96], sizes = [2, 32], strides = [1, 1]} : vector<2x128xf32> to vector<2x32xf32>
    %778 = arith.negf %777 : vector<2x32xf32>
    %779 = math.exp %778 : vector<2x32xf32>
    %cst_152 = arith.constant 1.000000e+00 : f32
    %780 = vector.broadcast %cst_152 : f32 to vector<2x32xf32>
    %781 = arith.addf %780, %779 : vector<2x32xf32>
    %782 = arith.divf %780, %781 : vector<2x32xf32>
    %783 = arith.mulf %774, %677 : vector<2x32xf32>
    %784 = arith.mulf %768, %776 : vector<2x32xf32>
    %785 = arith.addf %783, %784 : vector<2x32xf32>
    %786 = math.tanh %785 : vector<2x32xf32>
    %787 = arith.mulf %782, %786 : vector<2x32xf32>
    %788 = arith.truncf %787 : vector<2x32xf32> to vector<2x32xbf16>
    %cst_153 = arith.constant dense<0.000000e+00> : vector<2x160xf32>
    %789 = tpu.matmul %788, %1, %cst_153 {dimension_numbers = #tpu.dot_dimension_numbers<[1], [0], [0], [1], [0, 0, 1, 1], [], []>} : vector<2x32xbf16>, vector<32x160xbf16>, vector<2x160xf32> -> vector<2x160xf32>
    %790 = vector.extract_strided_slice %789 {offsets = [0, 0], sizes = [2, 128], strides = [1, 1]} : vector<2x160xf32> to vector<2x128xf32>
    %791 = vector.extract_strided_slice %789 {offsets = [0, 128], sizes = [2, 32], strides = [1, 1]} : vector<2x160xf32> to vector<2x32xf32>
    %792 = vector.shape_cast %791 : vector<2x32xf32> to vector<2x1x32xf32>
    %793 = vector.broadcast %792 : vector<2x1x32xf32> to vector<2x8x32xf32>
    %794 = arith.addf %793, %18 : vector<2x8x32xf32>
    %795 = math.tanh %794 : vector<2x8x32xf32>
    %796 = vector.shape_cast %11 : vector<1x32xf32> to vector<1x1x32xf32>
    %797 = vector.broadcast %796 : vector<1x1x32xf32> to vector<2x8x32xf32>
    %798 = arith.mulf %795, %797 : vector<2x8x32xf32>
    %cst_154 = arith.constant dense<0.000000e+00> : vector<2x8xf32>
    %799 = vector.multi_reduction <add>, %798, %cst_154 [2] : vector<2x8x32xf32> to vector<2x8xf32>
    %cst_155 = arith.constant dense<0xFF800000> : vector<2xf32>
    %800 = vector.multi_reduction <maximumf>, %799, %cst_155 [1] : vector<2x8xf32> to vector<2xf32>
    %801 = vector.shape_cast %800 : vector<2xf32> to vector<2x1xf32>
    %802 = vector.broadcast %801 : vector<2x1xf32> to vector<2x8xf32>
    %803 = arith.subf %799, %802 : vector<2x8xf32>
    %804 = math.exp %803 : vector<2x8xf32>
    %cst_156 = arith.constant dense<0.000000e+00> : vector<2xf32>
    %805 = vector.multi_reduction <add>, %804, %cst_156 [1] : vector<2x8xf32> to vector<2xf32>
    %806 = vector.shape_cast %805 : vector<2xf32> to vector<2x1xf32>
    %807 = vector.broadcast %806 : vector<2x1xf32> to vector<2x8xf32>
    %808 = arith.divf %804, %807 : vector<2x8xf32>
    %809 = vector.shape_cast %808 : vector<2x8xf32> to vector<2x8x1xf32>
    %810 = vector.broadcast %809 : vector<2x8x1xf32> to vector<2x8x32xf32>
    %811 = arith.mulf %810, %12 : vector<2x8x32xf32>
    %cst_157 = arith.constant dense<0.000000e+00> : vector<2x32xf32>
    %812 = vector.multi_reduction <add>, %811, %cst_157 [1] : vector<2x8x32xf32> to vector<2x32xf32>
    %cst_158 = arith.constant dense<0.000000e+00> : vector<2xf32>
    %813 = vector.multi_reduction <add>, %812, %cst_158 [1] : vector<2x32xf32> to vector<2xf32>
    %814 = vector.shape_cast %813 : vector<2xf32> to vector<2x1xf32>
    %cst_159 = arith.constant 3.200000e+01 : f32
    %815 = vector.broadcast %cst_159 : f32 to vector<2x1xf32>
    %816 = arith.divf %814, %815 : vector<2x1xf32>
    %817 = vector.broadcast %816 : vector<2x1xf32> to vector<2x32xf32>
    %818 = arith.subf %812, %817 : vector<2x32xf32>
    %819 = arith.mulf %818, %818 : vector<2x32xf32>
    %cst_160 = arith.constant dense<0.000000e+00> : vector<2xf32>
    %820 = vector.multi_reduction <add>, %819, %cst_160 [1] : vector<2x32xf32> to vector<2xf32>
    %821 = vector.shape_cast %820 : vector<2xf32> to vector<2x1xf32>
    %cst_161 = arith.constant 3.200000e+01 : f32
    %822 = vector.broadcast %cst_161 : f32 to vector<2x1xf32>
    %823 = arith.divf %821, %822 : vector<2x1xf32>
    %824 = vector.broadcast %816 : vector<2x1xf32> to vector<2x32xf32>
    %825 = arith.subf %812, %824 : vector<2x32xf32>
    %cst_162 = arith.constant 9.99999974E-6 : f32
    %826 = vector.broadcast %cst_162 : f32 to vector<2x1xf32>
    %827 = arith.addf %823, %826 : vector<2x1xf32>
    %828 = math.rsqrt %827 : vector<2x1xf32>
    %829 = vector.broadcast %828 : vector<2x1xf32> to vector<2x32xf32>
    %830 = arith.mulf %825, %829 : vector<2x32xf32>
    %831 = vector.broadcast %9 : vector<1x32xf32> to vector<2x32xf32>
    %832 = arith.mulf %830, %831 : vector<2x32xf32>
    %833 = vector.broadcast %10 : vector<1x32xf32> to vector<2x32xf32>
    %834 = arith.addf %832, %833 : vector<2x32xf32>
    %835 = tpu.concatenate %834, %757 in 1 : vector<2x32xf32>, vector<2x32xf32> -> vector<2x64xf32>
    %836 = vector.extract_strided_slice %23 {offsets = [7, 0, 0], sizes = [1, 2, 128], strides = [1, 1, 1]} : vector<8x2x128xf32> to vector<1x2x128xf32>
    %837 = vector.shape_cast %836 : vector<1x2x128xf32> to vector<2x128xf32>
    %838 = arith.truncf %835 : vector<2x64xf32> to vector<2x64xbf16>
    %cst_163 = arith.constant dense<0.000000e+00> : vector<2x128xf32>
    %839 = tpu.matmul %838, %0, %cst_163 {dimension_numbers = #tpu.dot_dimension_numbers<[1], [0], [0], [1], [0, 0, 1, 1], [], []>} : vector<2x64xbf16>, vector<64x128xbf16>, vector<2x128xf32> -> vector<2x128xf32>
    %840 = arith.addf %837, %839 : vector<2x128xf32>
    %841 = vector.extract_strided_slice %840 {offsets = [0, 0], sizes = [2, 32], strides = [1, 1]} : vector<2x128xf32> to vector<2x32xf32>
    %842 = arith.negf %841 : vector<2x32xf32>
    %843 = math.exp %842 : vector<2x32xf32>
    %cst_164 = arith.constant 1.000000e+00 : f32
    %844 = vector.broadcast %cst_164 : f32 to vector<2x32xf32>
    %845 = arith.addf %844, %843 : vector<2x32xf32>
    %846 = arith.divf %844, %845 : vector<2x32xf32>
    %847 = vector.extract_strided_slice %840 {offsets = [0, 32], sizes = [2, 32], strides = [1, 1]} : vector<2x128xf32> to vector<2x32xf32>
    %848 = arith.negf %847 : vector<2x32xf32>
    %849 = math.exp %848 : vector<2x32xf32>
    %cst_165 = arith.constant 1.000000e+00 : f32
    %850 = vector.broadcast %cst_165 : f32 to vector<2x32xf32>
    %851 = arith.addf %850, %849 : vector<2x32xf32>
    %852 = arith.divf %850, %851 : vector<2x32xf32>
    %853 = vector.extract_strided_slice %840 {offsets = [0, 64], sizes = [2, 32], strides = [1, 1]} : vector<2x128xf32> to vector<2x32xf32>
    %854 = math.tanh %853 : vector<2x32xf32>
    %855 = vector.extract_strided_slice %840 {offsets = [0, 96], sizes = [2, 32], strides = [1, 1]} : vector<2x128xf32> to vector<2x32xf32>
    %856 = arith.negf %855 : vector<2x32xf32>
    %857 = math.exp %856 : vector<2x32xf32>
    %cst_166 = arith.constant 1.000000e+00 : f32
    %858 = vector.broadcast %cst_166 : f32 to vector<2x32xf32>
    %859 = arith.addf %858, %857 : vector<2x32xf32>
    %860 = arith.divf %858, %859 : vector<2x32xf32>
    %861 = arith.mulf %852, %755 : vector<2x32xf32>
    %862 = arith.mulf %846, %854 : vector<2x32xf32>
    %863 = arith.addf %861, %862 : vector<2x32xf32>
    %864 = math.tanh %863 : vector<2x32xf32>
    %865 = arith.mulf %860, %864 : vector<2x32xf32>
    %866 = arith.truncf %865 : vector<2x32xf32> to vector<2x32xbf16>
    %cst_167 = arith.constant dense<0.000000e+00> : vector<2x128xf32>
    %867 = tpu.matmul %866, %2, %cst_167 {dimension_numbers = #tpu.dot_dimension_numbers<[1], [0], [0], [1], [0, 0, 1, 1], [], []>} : vector<2x32xbf16>, vector<32x128xbf16>, vector<2x128xf32> -> vector<2x128xf32>
    %868 = arith.addf %867, %790 : vector<2x128xf32>
    %869 = vector.broadcast %6 : vector<1x128xf32> to vector<2x128xf32>
    %870 = arith.addf %868, %869 : vector<2x128xf32>
    %871 = vector.extract_strided_slice %870 {offsets = [0, 0], sizes = [2, 32], strides = [1, 1]} : vector<2x128xf32> to vector<2x32xf32>
    %872 = arith.negf %871 : vector<2x32xf32>
    %873 = math.exp %872 : vector<2x32xf32>
    %cst_168 = arith.constant 1.000000e+00 : f32
    %874 = vector.broadcast %cst_168 : f32 to vector<2x32xf32>
    %875 = arith.addf %874, %873 : vector<2x32xf32>
    %876 = arith.divf %874, %875 : vector<2x32xf32>
    %877 = vector.extract_strided_slice %870 {offsets = [0, 32], sizes = [2, 32], strides = [1, 1]} : vector<2x128xf32> to vector<2x32xf32>
    %878 = arith.negf %877 : vector<2x32xf32>
    %879 = math.exp %878 : vector<2x32xf32>
    %cst_169 = arith.constant 1.000000e+00 : f32
    %880 = vector.broadcast %cst_169 : f32 to vector<2x32xf32>
    %881 = arith.addf %880, %879 : vector<2x32xf32>
    %882 = arith.divf %880, %881 : vector<2x32xf32>
    %883 = vector.extract_strided_slice %870 {offsets = [0, 64], sizes = [2, 32], strides = [1, 1]} : vector<2x128xf32> to vector<2x32xf32>
    %884 = math.tanh %883 : vector<2x32xf32>
    %885 = vector.extract_strided_slice %870 {offsets = [0, 96], sizes = [2, 32], strides = [1, 1]} : vector<2x128xf32> to vector<2x32xf32>
    %886 = arith.negf %885 : vector<2x32xf32>
    %887 = math.exp %886 : vector<2x32xf32>
    %cst_170 = arith.constant 1.000000e+00 : f32
    %888 = vector.broadcast %cst_170 : f32 to vector<2x32xf32>
    %889 = arith.addf %888, %887 : vector<2x32xf32>
    %890 = arith.divf %888, %889 : vector<2x32xf32>
    %891 = arith.mulf %882, %785 : vector<2x32xf32>
    %892 = arith.mulf %876, %884 : vector<2x32xf32>
    %893 = arith.addf %891, %892 : vector<2x32xf32>
    %894 = math.tanh %893 : vector<2x32xf32>
    %895 = arith.mulf %890, %894 : vector<2x32xf32>
    %c0_171 = arith.constant 0 : index
    %c0_172 = arith.constant 0 : index
    %c0_173 = arith.constant 0 : index
    %896 = vector.load %arg7[%c0_171, %c0_172, %c0_173] : memref<2x2x32xf32, #tpu.memory_space<vmem>>, vector<1x2x32xf32>
    %897 = vector.shape_cast %896 : vector<1x2x32xf32> to vector<2x32xf32>
    %898 = vector.shape_cast %865 : vector<2x32xf32> to vector<1x2x32xf32>
    tpu.vector_store %arg7[%c0_171, %c0_172, %c0_173], %898 {strides = array<i32>} : memref<2x2x32xf32, #tpu.memory_space<vmem>>, vector<1x2x32xf32>,
    %c1_174 = arith.constant 1 : index
    %c0_175 = arith.constant 0 : index
    %c0_176 = arith.constant 0 : index
    %899 = vector.load %arg7[%c1_174, %c0_175, %c0_176] : memref<2x2x32xf32, #tpu.memory_space<vmem>>, vector<1x2x32xf32>
    %900 = vector.shape_cast %899 : vector<1x2x32xf32> to vector<2x32xf32>
    %901 = vector.shape_cast %895 : vector<2x32xf32> to vector<1x2x32xf32>
    tpu.vector_store %arg7[%c1_174, %c0_175, %c0_176], %901 {strides = array<i32>} : memref<2x2x32xf32, #tpu.memory_space<vmem>>, vector<1x2x32xf32>,
    %c0_177 = arith.constant 0 : index
    %c0_178 = arith.constant 0 : index
    %c0_179 = arith.constant 0 : index
    %902 = vector.load %arg8[%c0_177, %c0_178, %c0_179] : memref<2x2x32xf32, #tpu.memory_space<vmem>>, vector<1x2x32xf32>
    %903 = vector.shape_cast %902 : vector<1x2x32xf32> to vector<2x32xf32>
    %904 = vector.shape_cast %863 : vector<2x32xf32> to vector<1x2x32xf32>
    tpu.vector_store %arg8[%c0_177, %c0_178, %c0_179], %904 {strides = array<i32>} : memref<2x2x32xf32, #tpu.memory_space<vmem>>, vector<1x2x32xf32>,
    %c1_180 = arith.constant 1 : index
    %c0_181 = arith.constant 0 : index
    %c0_182 = arith.constant 0 : index
    %905 = vector.load %arg8[%c1_180, %c0_181, %c0_182] : memref<2x2x32xf32, #tpu.memory_space<vmem>>, vector<1x2x32xf32>
    %906 = vector.shape_cast %905 : vector<1x2x32xf32> to vector<2x32xf32>
    %907 = vector.shape_cast %893 : vector<2x32xf32> to vector<1x2x32xf32>
    tpu.vector_store %arg8[%c1_180, %c0_181, %c0_182], %907 {strides = array<i32>} : memref<2x2x32xf32, #tpu.memory_space<vmem>>, vector<1x2x32xf32>,
    %908 = vector.shape_cast %52 : vector<2x8xf32> to vector<1x2x8xf32>
    %909 = vector.shape_cast %160 : vector<2x8xf32> to vector<1x2x8xf32>
    %910 = vector.shape_cast %268 : vector<2x8xf32> to vector<1x2x8xf32>
    %911 = vector.shape_cast %376 : vector<2x8xf32> to vector<1x2x8xf32>
    %912 = vector.shape_cast %484 : vector<2x8xf32> to vector<1x2x8xf32>
    %913 = vector.shape_cast %592 : vector<2x8xf32> to vector<1x2x8xf32>
    %914 = vector.shape_cast %700 : vector<2x8xf32> to vector<1x2x8xf32>
    %915 = vector.shape_cast %808 : vector<2x8xf32> to vector<1x2x8xf32>
    %916 = tpu.concatenate %908, %909, %910, %911, %912, %913, %914, %915 in 0 : vector<1x2x8xf32>, vector<1x2x8xf32>, vector<1x2x8xf32>, vector<1x2x8xf32>, vector<1x2x8xf32>, vector<1x2x8xf32>, vector<1x2x8xf32>, vector<1x2x8xf32> -> vector<8x2x8xf32>
    %c0_183 = arith.constant 0 : index
    %c0_184 = arith.constant 0 : index
    %c0_185 = arith.constant 0 : index
    %917 = vector.load %arg9[%c0_183, %c0_184, %c0_185] : memref<8x2x8xf32, #tpu.memory_space<vmem>>, vector<8x2x8xf32>
    tpu.vector_store %arg9[%c0_183, %c0_184, %c0_185], %916 {strides = array<i32>} : memref<8x2x8xf32, #tpu.memory_space<vmem>>, vector<8x2x8xf32>,
    %918 = vector.shape_cast %139 : vector<2x32xf32> to vector<1x2x32xf32>
    %919 = vector.shape_cast %247 : vector<2x32xf32> to vector<1x2x32xf32>
    %920 = vector.shape_cast %355 : vector<2x32xf32> to vector<1x2x32xf32>
    %921 = vector.shape_cast %463 : vector<2x32xf32> to vector<1x2x32xf32>
    %922 = vector.shape_cast %571 : vector<2x32xf32> to vector<1x2x32xf32>
    %923 = vector.shape_cast %679 : vector<2x32xf32> to vector<1x2x32xf32>
    %924 = vector.shape_cast %787 : vector<2x32xf32> to vector<1x2x32xf32>
    %925 = vector.shape_cast %895 : vector<2x32xf32> to vector<1x2x32xf32>
    %926 = tpu.concatenate %918, %919, %920, %921, %922, %923, %924, %925 in 0 : vector<1x2x32xf32>, vector<1x2x32xf32>, vector<1x2x32xf32>, vector<1x2x32xf32>, vector<1x2x32xf32>, vector<1x2x32xf32>, vector<1x2x32xf32>, vector<1x2x32xf32> -> vector<8x2x32xf32>
    %927 = vector.shape_cast %926 : vector<8x2x32xf32> to vector<16x32xf32>
    %928 = arith.truncf %927 : vector<16x32xf32> to vector<16x32xbf16>
    %cst_186 = arith.constant dense<0.000000e+00> : vector<16x128xf32>
    %929 = tpu.matmul %928, %3, %cst_186 {dimension_numbers = #tpu.dot_dimension_numbers<[1], [0], [0], [1], [0, 0, 1, 1], [], []>} : vector<16x32xbf16>, vector<32x128xbf16>, vector<16x128xf32> -> vector<16x128xf32>
    %930 = vector.broadcast %7 : vector<1x128xf32> to vector<16x128xf32>
    %931 = arith.addf %929, %930 : vector<16x128xf32>
    %932 = vector.shape_cast %931 : vector<16x128xf32> to vector<8x2x128xf32>
    %c0_187 = arith.constant 0 : index
    %c0_188 = arith.constant 0 : index
    %c0_189 = arith.constant 0 : index
    %933 = vector.load %arg6[%c0_187, %c0_188, %c0_189] : memref<8x2x128xf32, #tpu.memory_space<vmem>>, vector<8x2x128xf32>
    tpu.vector_store %arg6[%c0_187, %c0_188, %c0_189], %932 {strides = array<i32>} : memref<8x2x128xf32, #tpu.memory_space<vmem>>, vector<8x2x128xf32>,
    return
  }
}

</mosaic_0001>

<llo_original>
// kernel: tpu_custom_call.1
$region0: #{tpu_custom_call.1}
  #allocation0 [shape = 'u32[]', space=smem, size = 0x4, offset = 0x4, fixed_abs, tag = 'smem constant byte address 0x4 - core index']
  #allocation1 [shape = 'u32[72,128]{1,0:T(1,128)}', space=vmem, size = 0x9000, scoped, tag = 'internal scratch']
  %s0 = inlined_call_operand.vmem [shape: f32[8,2,128], index: 0, kind: input, shape index: {}]
  %s1 = inlined_call_operand.vmem [shape: f32[2,2,32], index: 1, kind: input, shape index: {}]
  %s2 = inlined_call_operand.vmem [shape: f32[2,2,32], index: 2, kind: input, shape index: {}]
  %s3 = inlined_call_operand.vmem [shape: f32[2,8,32], index: 3, kind: input, shape index: {}]
  %s4 = inlined_call_operand.vmem [shape: bf16[192,160], index: 4, kind: input, shape index: {}]
  %s5 = inlined_call_operand.vmem [shape: f32[136,160], index: 5, kind: input, shape index: {}]
  %s6 = inlined_call_operand.hbm [shape: f32[8,2,128], index: 6, kind: output, shape index: {0}]
  %s7 = inlined_call_operand.hbm [shape: f32[2,2,32], index: 7, kind: output, shape index: {1}]
  %s8 = inlined_call_operand.hbm [shape: f32[2,2,32], index: 8, kind: output, shape index: {2}]
  %s9 = inlined_call_operand.hbm [shape: f32[8,2,8], index: 9, kind: output, shape index: {3}]
  %10 = xla_tuple %s6, %s7, %s8, %s9
  %s11 = sld [smem:[#allocation0]]
  $region58: #{tpu_custom_call.1} parent=0
    _
  %s13 = ssub.s32 1, %s11
  %s14 = scalar_select 0, %s13, %s11
  $region1: #{tpu_custom_call.1} parent=0
    #allocation2 [shape = 'u8[8192]{0}', space=vmem, size = 0x2000, scoped, tag = 'output window, operand 0, single buffered']
    #allocation3 [shape = 's32[1]{0}', space=sflag, size = 0x4, scoped, tag = 'scoped memory for tpu_custom_call.1']
    #allocation4 [shape = 'u8[2048]{0}', space=vmem, size = 0x800, scoped, tag = 'output window, operand 1, single buffered']
    #allocation5 [shape = 's32[1]{0}', space=sflag, size = 0x4, scoped, tag = 'scoped memory for tpu_custom_call.1']
    #allocation6 [shape = 'u8[2048]{0}', space=vmem, size = 0x800, scoped, tag = 'output window, operand 2, single buffered']
    #allocation7 [shape = 'u8[8192]{0}', space=vmem, size = 0x2000, scoped, tag = 'output window, operand 3, single buffered']
    #allocation8 [shape = 's32[1]{0}', space=sflag, size = 0x4, scoped, tag = 'scoped memory for tpu_custom_call.1']
    %15 = vsyncpa [#allocation3], 0
    %16 = vsyncpa [#allocation5], 0
    %17 = vsyncpa [#allocation8], 0
    // Predicated region
    $region2: #{tpu_custom_call.1} parent=1 // pred_check
      _
    $region3: #{tpu_custom_call.1} parent=1 // pred_check_branch
      %19 = sbr.rel (0) target = $region5
    $region4: #{tpu_custom_call.1} parent=1 // pred_region
      _
    $region5: #{tpu_custom_call.1} parent=1 // pred_fallthru
      _
    // Predicated region
    $region6: #{tpu_custom_call.1} parent=1 // pred_check
      _
    $region7: #{tpu_custom_call.1} parent=1 // pred_check_branch
      %21 = sbr.rel (0) target = $region9
    $region8: #{tpu_custom_call.1} parent=1 // pred_region
      _
    $region9: #{tpu_custom_call.1} parent=1 // pred_fallthru
      _
    // Predicated region
    $region10: #{tpu_custom_call.1} parent=1 // pred_check
      _
    $region11: #{tpu_custom_call.1} parent=1 // pred_check_branch
      %23 = sbr.rel (0) target = $region13
    $region12: #{tpu_custom_call.1} parent=1 // pred_region
      _
    $region13: #{tpu_custom_call.1} parent=1 // pred_fallthru
      _
    // Predicated region
    $region14: #{tpu_custom_call.1} parent=1 // pred_check
      _
    $region15: #{tpu_custom_call.1} parent=1 // pred_check_branch
      %25 = sbr.rel (0) target = $region17
    $region16: #{tpu_custom_call.1} parent=1 // pred_region
      _
    $region17: #{tpu_custom_call.1} parent=1 // pred_fallthru
      _
    // Predicated region
    $region18: #{tpu_custom_call.1} parent=1 // pred_check
      _
    $region19: #{tpu_custom_call.1} parent=1 // pred_check_branch
      %27 = sbr.rel (0) target = $region21
    $region20: #{tpu_custom_call.1} parent=1 // pred_region
      _
    $region21: #{tpu_custom_call.1} parent=1 // pred_fallthru
      _
    // Predicated region
    $region22: #{tpu_custom_call.1} parent=1 // pred_check
      _
    $region23: #{tpu_custom_call.1} parent=1 // pred_check_branch
      %29 = sbr.rel (0) target = $region25
    $region24: #{tpu_custom_call.1} parent=1 // pred_region
      _
    $region25: #{tpu_custom_call.1} parent=1 // pred_fallthru
      _
    %v31 = vld [vmem:[%s4] sm:$0xf]
    %v32 = vld [vmem:[%s4 + $0x8] sm:$0xf]
    %v33 = vld [vmem:[%s4 + $0x10] sm:$0xf]
    %v34 = vld [vmem:[%s4 + $0x18] sm:$0xf]
    %v35 = vld [vmem:[%s4 + $0x20] sm:$0xf]
    %v36 = vld [vmem:[%s4 + $0x28] sm:$0xf]
    %v37 = vld [vmem:[%s4 + $0x30] sm:$0xf]
    %v38 = vld [vmem:[%s4 + $0x38] sm:$0xf]
    %v39 = vld [vmem:[%s4 + $0x40] sm:$0xff]
    %v40 = vld [vmem:[%s4 + $0x48] sm:$0xff]
    %v41 = vld [vmem:[%s4 + $0x50] sm:$0xff]
    %v42 = vld [vmem:[%s4 + $0x58] sm:$0xff]
    %v43 = vld [vmem:[%s4 + $0x60] sm:$0xf]
    %v44 = vld [vmem:[%s4 + $0x68] sm:$0xf]
    %v45 = vld [vmem:[%s4 + $0x70] sm:$0xf]
    %v46 = vld [vmem:[%s4 + $0x78] sm:$0xf]
    %v47 = vld [vmem:[%s4 + $0x80] sm:$0xf]
    %v48 = vld [vmem:[%s4 + $0x88] sm:$0xf]
    %v49 = vld [vmem:[%s4 + $0x90] sm:$0xf]
    %v50 = vld [vmem:[%s4 + $0x98] sm:$0xf]
    %v51 = vld [vmem:[%s4 + $0xa0] sm:$0xf]
    %v52 = vld [vmem:[%s4 + $0xa8] sm:$0xf]
    %v53 = vld [vmem:[%s4 + $0xb0] sm:$0xf]
    %v54 = vld [vmem:[%s4 + $0xb8] sm:$0xf]
    %v55 = vld [vmem:[%s5 + $0x100] sm:$0xff]
    %v56 = vld [vmem:[%s3] sm:$0xff]
    %v57 = vld [vmem:[%s3 + $0x8] sm:$0xff]
    %v58 = vpack.c.bf16 %v57, %v56
    %v59 = vperm.slane %v55, 2
    %v64 = vunpack.c.l.b16 %v51
    %v65 = vunpack.c.l.b16 %v52
    %v66 = vunpack.c.l.b16 %v53
    %v67 = vunpack.c.l.b16 %v54
    %v68 = vpack.c.b16 %v65, %v64
    %v69 = vpack.c.b16 %v67, %v66
    %vm72 = vcmask 261120
    %v74 = vsel %vm72, %v58, 0
    %76 = vmatpush.bf16.msra.mxu0 0
    %77 = vmatpush.bf16.msra.mxu0 0
    %78 = vmatpush.bf16.msra.mxu0 0
    %79 = vmatpush.bf16.msra.mxu0 0
    %80 = vmatpush.bf16.msra.mxu0 0
    %81 = vmatpush.bf16.msra.mxu0 0
    %82 = vmatpush.bf16.msra.mxu0 %v69
    %83 = vmatpush.bf16.msra.mxu0 %v68
    %84 = vmatmul.bf16.gmra.mxu0 %v74
    %v85 = vpop.f32.mrf.mxu0
    %v86 = vadd.f32 %v59, %v85
    %v87 = vpop.f32.mrf.mxu0
    %v88 = vadd.f32 %v59, %v87
    %89 = vdwg.mxu0
    %v90 = vld [vmem:[%s5] sm:$0xff]
    %v91 = vld [vmem:[%s5 + $0x10] sm:$0xff]
    %v92 = vld [vmem:[%s5 + $0x20] sm:$0xff]
    %v93 = vld [vmem:[%s5 + $0x30] sm:$0xff]
    %v94 = vld [vmem:[%s5 + $0x40] sm:$0xff]
    %v95 = vld [vmem:[%s5 + $0x50] sm:$0xff]
    %v96 = vld [vmem:[%s5 + $0x60] sm:$0xff]
    %v97 = vld [vmem:[%s5 + $0x70] sm:$0xff]
    %v98 = vld [vmem:[%s5 + $0x80] sm:$0xff]
    %v99 = vld [vmem:[%s5 + $0x90] sm:$0xff]
    %v100 = vld [vmem:[%s5 + $0xa0] sm:$0xff]
    %v101 = vld [vmem:[%s5 + $0xb0] sm:$0xff]
    %v102 = vld [vmem:[%s5 + $0xc0] sm:$0xff]
    %v103 = vld [vmem:[%s5 + $0xd0] sm:$0xff]
    %v104 = vld [vmem:[%s5 + $0xe0] sm:$0xff]
    %v105 = vld [vmem:[%s5 + $0xf0] sm:$0xff]
    %v106 = vld [vmem:[%s0] sm:$0x3]
    %v107 = vld [vmem:[%s0 + $0x2] sm:$0x3]
    %v108 = vld [vmem:[%s0 + $0x4] sm:$0x3]
    %v109 = vld [vmem:[%s0 + $0x6] sm:$0x3]
    %v110 = vld [vmem:[%s0 + $0x8] sm:$0x3]
    %v111 = vld [vmem:[%s0 + $0xa] sm:$0x3]
    %v112 = vld [vmem:[%s0 + $0xc] sm:$0x3]
    %v113 = vld [vmem:[%s0 + $0xe] sm:$0x3]
    %122 = vst [vmem:[#allocation1] ss:$4 sm:$0xff] %v106
    %s123 = scalar_lea.vmem [#allocation1], 1
    %124 = vst [vmem:[%s123] ss:$4 sm:$0xff] %v107
    %s125 = scalar_lea.vmem [#allocation1], 2
    %126 = vst [vmem:[%s125] ss:$4 sm:$0xff] %v108
    %s127 = scalar_lea.vmem [#allocation1], 3
    %128 = vst [vmem:[%s127] ss:$4 sm:$0xff] %v109
    %s129 = scalar_lea.vmem [#allocation1], 32
    %130 = vst [vmem:[%s129] ss:$4 sm:$0xff] %v110
    %s131 = scalar_lea.vmem [#allocation1], 33
    %132 = vst [vmem:[%s131] ss:$4 sm:$0xff] %v111
    %s133 = scalar_lea.vmem [#allocation1], 34
    %134 = vst [vmem:[%s133] ss:$4 sm:$0xff] %v112
    %s135 = scalar_lea.vmem [#allocation1], 35
    %136 = vst [vmem:[%s135] ss:$4 sm:$0xff] %v113
    %v137 = vld.sshfl [vmem:[#allocation1] sm:$0xff pattern:$0x73625140]
    %v138 = vld.sshfl [vmem:[#allocation1 + $0x20] sm:$0xff pattern:$0x73625140]
    %141 = vmatpush.msra.mxu0 %v105
    %142 = vmatpush.msra.mxu0 %v104
    %143 = vmatpush.msra.mxu0 %v103
    %144 = vmatpush.msra.mxu0 %v102
    %145 = vmatpush.msra.mxu0 %v101
    %146 = vmatpush.msra.mxu0 %v100
    %147 = vmatpush.msra.mxu0 %v99
    %148 = vmatpush.msra.mxu0 %v98
    %149 = vmatpush.msra.mxu0 %v97
    %150 = vmatpush.msra.mxu0 %v96
    %151 = vmatpush.msra.mxu0 %v95
    %152 = vmatpush.msra.mxu0 %v94
    %153 = vmatpush.msra.mxu0 %v93
    %154 = vmatpush.msra.mxu0 %v92
    %155 = vmatpush.msra.mxu0 %v91
    %156 = vmatpush.msra.mxu0 %v90
    %157 = vmatmul.f32.gmra.mxu0 %v137
    %v158 = vpop.f32.mrf.mxu0
    %v159 = vadd.f32 0.0, %v158
    %160 = vmatmul.f32.gmra.mxu0 %v138
    %v161 = vpop.f32.mrf.mxu0
    %v162 = vadd.f32 0.0, %v161
    %163 = vdwg.mxu0
    %v166 = vrot.slane %v159, 2
    %v167 = vrot.slane %v159, 4
    %v168 = vrot.slane %v159, 6
    %v169 = vrot.slane %v162, 2
    %v170 = vrot.slane %v162, 4
    %v171 = vrot.slane %v162, 6
    %v178 = vld [vmem:[%s1] sm:$0x3]
    %v179 = vld [vmem:[%s2] sm:$0x3]
    %s180 = scalar_lea.vmem %s1, 2
    %v181 = vld [vmem:[%s180] sm:$0x3]
    %s182 = scalar_lea.vmem %s2, 2
    %v183 = vld [vmem:[%s182] sm:$0x3]
    %v184 = vpack.c.bf16 %v181, %v181
    %v189 = vunpack.c.l.b16 %v39
    %v190 = vunpack.c.h.b16 %v39
    %v191 = vunpack.c.l.b16 %v40
    %v192 = vunpack.c.h.b16 %v40
    %v193 = vunpack.c.l.b16 %v41
    %v194 = vunpack.c.h.b16 %v41
    %v195 = vunpack.c.l.b16 %v42
    %v196 = vunpack.c.h.b16 %v42
    %v197 = vpack.c.b16 %v191, %v189
    %v198 = vpack.c.b16 %v192, %v190
    %v199 = vpack.c.b16 %v195, %v193
    %v200 = vpack.c.b16 %v196, %v194
    %v206 = vsel %vm72, %v184, 0
    %208 = vmatpush.bf16.msra.mxu0 0
    %209 = vmatpush.bf16.msra.mxu0 0
    %210 = vmatpush.bf16.msra.mxu0 0
    %211 = vmatpush.bf16.msra.mxu0 0
    %212 = vmatpush.bf16.msra.mxu0 0
    %213 = vmatpush.bf16.msra.mxu0 0
    %214 = vmatpush.bf16.msra.mxu0 %v199
    %215 = vmatpush.bf16.msra.mxu0 %v197
    %216 = vmatmul.bf16.gmra.mxu0 %v206
    %v217 = vpop.f32.mrf.mxu0
    %v218 = vadd.f32 0.0, %v217
    %v219 = vpop.f32.mrf.mxu0
    %220 = vdwg.mxu0
    %221 = vmatpush.bf16.msra.mxu0 0
    %222 = vmatpush.bf16.msra.mxu0 0
    %223 = vmatpush.bf16.msra.mxu0 0
    %224 = vmatpush.bf16.msra.mxu0 0
    %225 = vmatpush.bf16.msra.mxu0 0
    %226 = vmatpush.bf16.msra.mxu0 0
    %227 = vmatpush.bf16.msra.mxu0 %v200
    %228 = vmatpush.bf16.msra.mxu0 %v198
    %229 = vmatmul.bf16.gmra.mxu0 %v206
    %v230 = vpop.f32.mrf.mxu0
    %v231 = vadd.f32 0.0, %v230
    %v232 = vpop.f32.mrf.mxu0
    %233 = vdwg.mxu0
    %v235 = vrot.slane %v231, 1
    %v236 = vperm.slane %v231, 0
    %v237 = vperm.slane %v235, 0
    %v240 = vadd.f32 %v236, %v86
    %v241 = vadd.f32 %v237, %v88
    %v242 = vtanh.pop %v240
    %v243 = vtanh.pop %v241
    %v244 = vperm.slane %v55, 5
    %v245 = vmul.f32 %v242, %v244
    %v246 = vmul.f32 %v243, %v244
    %v247 = vsel %vm72, %v245, 0.0
    %248 = vadd.xlane.f32.xlu0 %v247
    %v249 = vpop.xlane.xlu0 %248
    %v250 = vsel %vm72, %v246, 0.0
    %251 = vadd.xlane.f32.xlu0 %v250
    %v252 = vpop.xlane.xlu0 %251
    %v255 = vlaneseq
    %v256 = vand.u32 %v255, 127
    %v257 = vperm.slane %v249, %v256
    %v258 = vperm.slane %v252, %v256
    %vm259 = vcmask 1041409
    %v260 = vsel %vm259, %v258, %v257
    %vm262 = vcmask 58368
    %v263 = vsel %vm262, %v260, -inf
    %264 = vmax.xlane.f32.xlu0 %v263
    %v265 = vpop.xlane.xlu0 %264
    %v267 = vperm.slane %v265, 0
    %v268 = vperm.slane %v265, 1
    %v271 = vsub.f32 %v249, %v267
    %v272 = vsub.f32 %v252, %v268
    %v273 = vmul.f32 %v271, 1.442695
    %v274 = vpow.pop %v273
    %v275 = vmul.f32 %v272, 1.442695
    %v276 = vpow.pop %v275
    %279 = vset.pattern.permute.xlu0 0
    %280 = vperm.xlu0 %279, %v274
    %v281 = vpop.permute.xlu0 %280
    %282 = vset.pattern.permute.xlu0 0
    %283 = vperm.xlu0 %282, %v276
    %v284 = vpop.permute.xlu0 %283
    %v285 = vperm.slane %v281, %v256
    %v286 = vperm.slane %v284, %v256
    %v287 = vsel %vm259, %v286, %v285
    %v289 = vsel %vm262, %v287, 0.0
    %290 = vadd.xlane.f32.xlu0 %v289
    %v291 = vpop.xlane.xlu0 %290
    %v293 = vperm.slane %v291, 0
    %v294 = vperm.slane %v291, 1
    %v297 = vrcp.pop %v293
    %v298 = vmul.f32 %v293, %v297
    %v299 = vsub.f32 1.0, %v298
    %v300 = vmul.f32 %v297, %v299
    %v301 = vadd.f32 %v297, %v300
    %vm302 = vweird.f32 %v293
    %vm303 = vweird.f32 %v297
    %vm304 = vmor %vm302, %vm303
    %v305 = vsel %vm304, %v297, %v301
    %v306 = vand.u32 2147483647, %v293
    %vm307 = vcmp.eq.f32.partialorder %v306, 8.507059e+37
    %v308 = vand.u32 %v293, 2147483648
    %v309 = vor.u32 1.1754944e-38, %v308
    %v310 = vsel %vm307, %v309, %v305
    %v311 = vmul.f32 %v274, %v310
    %v312 = vrcp.pop %v294
    %v313 = vmul.f32 %v294, %v312
    %v314 = vsub.f32 1.0, %v313
    %v315 = vmul.f32 %v312, %v314
    %v316 = vadd.f32 %v312, %v315
    %vm317 = vweird.f32 %v294
    %vm318 = vweird.f32 %v312
    %vm319 = vmor %vm317, %vm318
    %v320 = vsel %vm319, %v312, %v316
    %v321 = vand.u32 2147483647, %v294
    %vm322 = vcmp.eq.f32.partialorder %v321, 8.507059e+37
    %v323 = vand.u32 %v294, 2147483648
    %v324 = vor.u32 1.1754944e-38, %v323
    %v325 = vsel %vm322, %v324, %v320
    %v326 = vmul.f32 %v276, %v325
    %328 = vset.pattern.permute.xlu0 0
    %329 = vperm.xlu0 %328, %v311
    %v330 = vpop.permute.xlu0 %329
    %333 = vset.pattern.permute.xlu0 0
    %334 = vperm.xlu0 %333, %v326
    %v335 = vpop.permute.xlu0 %334
    %v337 = vmul.f32 %v330, %v56
    %v338 = vmul.f32 %v335, %v57
    %v339 = vsel %vm72, %v337, 0.0
    %v340 = vrot.slane %v339, 4
    %v341 = vadd.f32 %v339, %v340
    %v342 = vrot.slane %v341, 2
    %v343 = vadd.f32 %v341, %v342
    %v344 = vrot.slane %v343, 1
    %v345 = vadd.f32 %v343, %v344
    %v346 = vsel %vm72, %v338, 0.0
    %v347 = vrot.slane %v346, 4
    %v348 = vadd.f32 %v346, %v347
    %v349 = vrot.slane %v348, 2
    %v350 = vadd.f32 %v348, %v349
    %v351 = vrot.slane %v350, 1
    %v352 = vadd.f32 %v350, %v351
    %v355 = vsel %vm259, %v352, %v345
    %vm357 = vcmask 254976
    %v358 = vsel %vm357, %v355, 0.0
    %359 = vadd.xlane.f32.xlu0 %v358
    %v360 = vpop.xlane.xlu0 %359
    %v361 = vrcp.pop 32.0
    %v362 = vmul.f32 32.0, %v361
    %v363 = vsub.f32 1.0, %v362
    %v364 = vmul.f32 %v361, %v363
    %v365 = vadd.f32 %v361, %v364
    %vm366 = vweird.f32 %v361
    %v367 = vsel %vm366, %v361, %v365
    %v368 = vmul.f32 %v360, %v367
    %v370 = vrot.slane %v368, 1
    %v373 = vsub.f32 %v345, %v368
    %v374 = vsub.f32 %v352, %v370
    %v375 = vmul.f32 %v373, %v373
    %v376 = vmul.f32 %v374, %v374
    %v379 = vrot.slane %v376, 7
    %v380 = vsel %vm259, %v379, %v375
    %v382 = vsel %vm357, %v380, 0.0
    %383 = vadd.xlane.f32.xlu0 %v382
    %v384 = vpop.xlane.xlu0 %383
    %v385 = vmul.f32 %v384, %v367
    %v386 = vadd.f32 %v385, 1e-05
    %v387 = vrsqrt.pop %v386
    %v388 = vmul.f32 %v387, %v386
    %v389 = vmul.f32 %v388, %v387
    %v390 = vmul.f32 0.5, %v389
    %v391 = vsub.f32 1.5, %v390
    %v392 = vmul.f32 %v387, %v391
    %vm393 = vweird.f32 %v386
    %vm394 = vweird.f32 %v387
    %vm395 = vmor %vm393, %vm394
    %v396 = vsel %vm395, %v387, %v392
    %v398 = vrot.slane %v396, 1
    %v401 = vmul.f32 %v373, %v396
    %v402 = vmul.f32 %v374, %v398
    %v403 = vperm.slane %v55, 3
    %v404 = vmul.f32 %v401, %v403
    %v405 = vmul.f32 %v402, %v403
    %v406 = vperm.slane %v55, 4
    %v407 = vadd.f32 %v404, %v406
    %v408 = vadd.f32 %v405, %v406
    %v411 = vrot.slane %v408, 7
    %v412 = vsel %vm259, %v411, %v407
    %415 = vrot.lane.b32.xlu0 %v178, 32
    %v416 = vpop.permute.xlu0 %415
    %v418 = vsel %vm72, %v412, %v416
    %v419 = vpack.c.bf16 %v418, %v418
    %v428 = vunpack.c.l.b16 %v31
    %v429 = vunpack.c.l.b16 %v32
    %v430 = vunpack.c.l.b16 %v33
    %v431 = vunpack.c.l.b16 %v34
    %v432 = vunpack.c.l.b16 %v35
    %v433 = vunpack.c.l.b16 %v36
    %v434 = vunpack.c.l.b16 %v37
    %v435 = vunpack.c.l.b16 %v38
    %v436 = vpack.c.b16 %v429, %v428
    %v437 = vpack.c.b16 %v431, %v430
    %v438 = vpack.c.b16 %v433, %v432
    %v439 = vpack.c.b16 %v435, %v434
    %vm444 = vcmask 523264
    %v446 = vsel %vm444, %v419, 0
    %448 = vmatpush.bf16.msra.mxu0 0
    %449 = vmatpush.bf16.msra.mxu0 0
    %450 = vmatpush.bf16.msra.mxu0 0
    %451 = vmatpush.bf16.msra.mxu0 0
    %452 = vmatpush.bf16.msra.mxu0 %v439
    %453 = vmatpush.bf16.msra.mxu0 %v438
    %454 = vmatpush.bf16.msra.mxu0 %v437
    %455 = vmatpush.bf16.msra.mxu0 %v436
    %456 = vmatmul.bf16.gmra.mxu0 %v446
    %v457 = vpop.f32.mrf.mxu0
    %v458 = vadd.f32 0.0, %v457
    %v459 = vpop.f32.mrf.mxu0
    %460 = vdwg.mxu0
    %v461 = vadd.f32 %v159, %v458
    %v462 = vxor.u32 %v461, 2147483648
    %v463 = vmul.f32 %v462, 1.442695
    %v464 = vpow.pop %v463
    %v465 = vadd.f32 %v464, 1.0
    %v466 = vrcp.pop %v465
    %v467 = vmul.f32 %v465, %v466
    %v468 = vsub.f32 1.0, %v467
    %v469 = vmul.f32 %v466, %v468
    %v470 = vadd.f32 %v466, %v469
    %vm471 = vweird.f32 %v465
    %vm472 = vweird.f32 %v466
    %vm473 = vmor %vm471, %vm472
    %v474 = vsel %vm473, %v466, %v470
    %v475 = vand.u32 2147483647, %v465
    %vm476 = vcmp.eq.f32.partialorder %v475, 8.507059e+37
    %v477 = vand.u32 %v465, 2147483648
    %v478 = vor.u32 1.1754944e-38, %v477
    %v479 = vsel %vm476, %v478, %v474
    %v480 = vmul.f32 1.0, %v479
    %v481 = vtanh.pop %v461
    %483 = vrot.lane.b32.xlu0 %v179, 32
    %v484 = vpop.permute.xlu0 %483
    %v486 = vmul.f32 %v480, %v484
    %488 = vrot.lane.b32.xlu0 %v481, 64
    %v489 = vpop.permute.xlu0 %488
    %v491 = vmul.f32 %v480, %v489
    %493 = vrot.lane.b32.xlu0 %v491, 32
    %v494 = vpop.permute.xlu0 %493
    %v496 = vadd.f32 %v486, %v494
    %v497 = vtanh.pop %v496
    %499 = vrot.lane.b32.xlu0 %v497, 64
    %v500 = vpop.permute.xlu0 %499
    %v502 = vmul.f32 %v480, %v500
    %v503 = vpack.c.bf16 %v502, %v502
    %505 = vrot.lane.b32.xlu0 %v503, 32
    %v506 = vpop.permute.xlu0 %505
    %v511 = vunpack.c.l.b16 %v43
    %v512 = vunpack.c.l.b16 %v44
    %v513 = vunpack.c.l.b16 %v45
    %v514 = vunpack.c.l.b16 %v46
    %v515 = vpack.c.b16 %v512, %v511
    %v516 = vpack.c.b16 %v514, %v513
    %v520 = vsel %vm72, %v506, 0
    %522 = vmatpush.bf16.msra.mxu0 0
    %523 = vmatpush.bf16.msra.mxu0 0
    %524 = vmatpush.bf16.msra.mxu0 0
    %525 = vmatpush.bf16.msra.mxu0 0
    %526 = vmatpush.bf16.msra.mxu0 0
    %527 = vmatpush.bf16.msra.mxu0 0
    %528 = vmatpush.bf16.msra.mxu0 %v516
    %529 = vmatpush.bf16.msra.mxu0 %v515
    %530 = vmatmul.bf16.gmra.mxu0 %v520
    %v531 = vpop.f32.mrf.mxu0
    %v532 = vadd.f32 %v218, %v531
    %v533 = vpop.f32.mrf.mxu0
    %534 = vdwg.mxu0
    %v535 = vperm.slane %v55, 0
    %v536 = vadd.f32 %v532, %v535
    %v537 = vxor.u32 %v536, 2147483648
    %v538 = vmul.f32 %v537, 1.442695
    %v539 = vpow.pop %v538
    %v540 = vadd.f32 %v539, 1.0
    %v541 = vrcp.pop %v540
    %v542 = vmul.f32 %v540, %v541
    %v543 = vsub.f32 1.0, %v542
    %v544 = vmul.f32 %v541, %v543
    %v545 = vadd.f32 %v541, %v544
    %vm546 = vweird.f32 %v540
    %vm547 = vweird.f32 %v541
    %vm548 = vmor %vm546, %vm547
    %v549 = vsel %vm548, %v541, %v545
    %v550 = vand.u32 2147483647, %v540
    %vm551 = vcmp.eq.f32.partialorder %v550, 8.507059e+37
    %v552 = vand.u32 %v540, 2147483648
    %v553 = vor.u32 1.1754944e-38, %v552
    %v554 = vsel %vm551, %v553, %v549
    %v555 = vmul.f32 1.0, %v554
    %v556 = vtanh.pop %v536
    %558 = vrot.lane.b32.xlu0 %v183, 32
    %v559 = vpop.permute.xlu0 %558
    %v561 = vmul.f32 %v555, %v559
    %563 = vrot.lane.b32.xlu0 %v556, 64
    %v564 = vpop.permute.xlu0 %563
    %v566 = vmul.f32 %v555, %v564
    %568 = vrot.lane.b32.xlu0 %v566, 32
    %v569 = vpop.permute.xlu0 %568
    %v571 = vadd.f32 %v561, %v569
    %v572 = vtanh.pop %v571
    %574 = vrot.lane.b32.xlu0 %v572, 64
    %v575 = vpop.permute.xlu0 %574
    %v577 = vmul.f32 %v555, %v575
    %v578 = vpack.c.bf16 %v577, %v577
    %580 = vrot.lane.b32.xlu0 %v578, 32
    %v581 = vpop.permute.xlu0 %580
    %v583 = vsel %vm72, %v581, 0
    %585 = vmatpush.bf16.msra.mxu0 0
    %586 = vmatpush.bf16.msra.mxu0 0
    %587 = vmatpush.bf16.msra.mxu0 0
    %588 = vmatpush.bf16.msra.mxu0 0
    %589 = vmatpush.bf16.msra.mxu0 0
    %590 = vmatpush.bf16.msra.mxu0 0
    %591 = vmatpush.bf16.msra.mxu0 %v199
    %592 = vmatpush.bf16.msra.mxu0 %v197
    %593 = vmatmul.bf16.gmra.mxu0 %v583
    %v594 = vpop.f32.mrf.mxu0
    %v595 = vadd.f32 0.0, %v594
    %v596 = vpop.f32.mrf.mxu0
    %597 = vdwg.mxu0
    %598 = vmatpush.bf16.msra.mxu0 0
    %599 = vmatpush.bf16.msra.mxu0 0
    %600 = vmatpush.bf16.msra.mxu0 0
    %601 = vmatpush.bf16.msra.mxu0 0
    %602 = vmatpush.bf16.msra.mxu0 0
    %603 = vmatpush.bf16.msra.mxu0 0
    %604 = vmatpush.bf16.msra.mxu0 %v200
    %605 = vmatpush.bf16.msra.mxu0 %v198
    %606 = vmatmul.bf16.gmra.mxu0 %v583
    %v607 = vpop.f32.mrf.mxu0
    %v608 = vadd.f32 0.0, %v607
    %v609 = vpop.f32.mrf.mxu0
    %610 = vdwg.mxu0
    %v612 = vrot.slane %v608, 1
    %v613 = vperm.slane %v608, 0
    %v614 = vperm.slane %v612, 0
    %v617 = vadd.f32 %v613, %v86
    %v618 = vadd.f32 %v614, %v88
    %v619 = vtanh.pop %v617
    %v620 = vtanh.pop %v618
    %v621 = vmul.f32 %v619, %v244
    %v622 = vmul.f32 %v620, %v244
    %v623 = vsel %vm72, %v621, 0.0
    %624 = vadd.xlane.f32.xlu0 %v623
    %v625 = vpop.xlane.xlu0 %624
    %v626 = vsel %vm72, %v622, 0.0
    %627 = vadd.xlane.f32.xlu0 %v626
    %v628 = vpop.xlane.xlu0 %627
    %v631 = vperm.slane %v625, %v256
    %v632 = vperm.slane %v628, %v256
    %v633 = vsel %vm259, %v632, %v631
    %v635 = vsel %vm262, %v633, -inf
    %636 = vmax.xlane.f32.xlu0 %v635
    %v637 = vpop.xlane.xlu0 %636
    %v639 = vperm.slane %v637, 0
    %v640 = vperm.slane %v637, 1
    %v643 = vsub.f32 %v625, %v639
    %v644 = vsub.f32 %v628, %v640
    %v645 = vmul.f32 %v643, 1.442695
    %v646 = vpow.pop %v645
    %v647 = vmul.f32 %v644, 1.442695
    %v648 = vpow.pop %v647
    %651 = vset.pattern.permute.xlu0 0
    %652 = vperm.xlu0 %651, %v646
    %v653 = vpop.permute.xlu0 %652
    %654 = vset.pattern.permute.xlu0 0
    %655 = vperm.xlu0 %654, %v648
    %v656 = vpop.permute.xlu0 %655
    %v657 = vperm.slane %v653, %v256
    %v658 = vperm.slane %v656, %v256
    %v659 = vsel %vm259, %v658, %v657
    %v661 = vsel %vm262, %v659, 0.0
    %662 = vadd.xlane.f32.xlu0 %v661
    %v663 = vpop.xlane.xlu0 %662
    %v665 = vperm.slane %v663, 0
    %v666 = vperm.slane %v663, 1
    %v669 = vrcp.pop %v665
    %v670 = vmul.f32 %v665, %v669
    %v671 = vsub.f32 1.0, %v670
    %v672 = vmul.f32 %v669, %v671
    %v673 = vadd.f32 %v669, %v672
    %vm674 = vweird.f32 %v665
    %vm675 = vweird.f32 %v669
    %vm676 = vmor %vm674, %vm675
    %v677 = vsel %vm676, %v669, %v673
    %v678 = vand.u32 2147483647, %v665
    %vm679 = vcmp.eq.f32.partialorder %v678, 8.507059e+37
    %v680 = vand.u32 %v665, 2147483648
    %v681 = vor.u32 1.1754944e-38, %v680
    %v682 = vsel %vm679, %v681, %v677
    %v683 = vmul.f32 %v646, %v682
    %v684 = vrcp.pop %v666
    %v685 = vmul.f32 %v666, %v684
    %v686 = vsub.f32 1.0, %v685
    %v687 = vmul.f32 %v684, %v686
    %v688 = vadd.f32 %v684, %v687
    %vm689 = vweird.f32 %v666
    %vm690 = vweird.f32 %v684
    %vm691 = vmor %vm689, %vm690
    %v692 = vsel %vm691, %v684, %v688
    %v693 = vand.u32 2147483647, %v666
    %vm694 = vcmp.eq.f32.partialorder %v693, 8.507059e+37
    %v695 = vand.u32 %v666, 2147483648
    %v696 = vor.u32 1.1754944e-38, %v695
    %v697 = vsel %vm694, %v696, %v692
    %v698 = vmul.f32 %v648, %v697
    %700 = vset.pattern.permute.xlu0 0
    %701 = vperm.xlu0 %700, %v683
    %v702 = vpop.permute.xlu0 %701
    %705 = vset.pattern.permute.xlu0 0
    %706 = vperm.xlu0 %705, %v698
    %v707 = vpop.permute.xlu0 %706
    %v709 = vmul.f32 %v702, %v56
    %v710 = vmul.f32 %v707, %v57
    %v711 = vsel %vm72, %v709, 0.0
    %v712 = vrot.slane %v711, 4
    %v713 = vadd.f32 %v711, %v712
    %v714 = vrot.slane %v713, 2
    %v715 = vadd.f32 %v713, %v714
    %v716 = vrot.slane %v715, 1
    %v717 = vadd.f32 %v715, %v716
    %v718 = vsel %vm72, %v710, 0.0
    %v719 = vrot.slane %v718, 4
    %v720 = vadd.f32 %v718, %v719
    %v721 = vrot.slane %v720, 2
    %v722 = vadd.f32 %v720, %v721
    %v723 = vrot.slane %v722, 1
    %v724 = vadd.f32 %v722, %v723
    %v727 = vsel %vm259, %v724, %v717
    %v729 = vsel %vm357, %v727, 0.0
    %730 = vadd.xlane.f32.xlu0 %v729
    %v731 = vpop.xlane.xlu0 %730
    %v732 = vmul.f32 %v731, %v367
    %v734 = vrot.slane %v732, 1
    %v737 = vsub.f32 %v717, %v732
    %v738 = vsub.f32 %v724, %v734
    %v739 = vmul.f32 %v737, %v737
    %v740 = vmul.f32 %v738, %v738
    %v743 = vrot.slane %v740, 7
    %v744 = vsel %vm259, %v743, %v739
    %v746 = vsel %vm357, %v744, 0.0
    %747 = vadd.xlane.f32.xlu0 %v746
    %v748 = vpop.xlane.xlu0 %747
    %v749 = vmul.f32 %v748, %v367
    %v750 = vadd.f32 %v749, 1e-05
    %v751 = vrsqrt.pop %v750
    %v752 = vmul.f32 %v751, %v750
    %v753 = vmul.f32 %v752, %v751
    %v754 = vmul.f32 0.5, %v753
    %v755 = vsub.f32 1.5, %v754
    %v756 = vmul.f32 %v751, %v755
    %vm757 = vweird.f32 %v750
    %vm758 = vweird.f32 %v751
    %vm759 = vmor %vm757, %vm758
    %v760 = vsel %vm759, %v751, %v756
    %v762 = vrot.slane %v760, 1
    %v765 = vmul.f32 %v737, %v760
    %v766 = vmul.f32 %v738, %v762
    %v767 = vmul.f32 %v765, %v403
    %v768 = vmul.f32 %v766, %v403
    %v769 = vadd.f32 %v767, %v406
    %v770 = vadd.f32 %v768, %v406
    %v773 = vrot.slane %v770, 7
    %v774 = vsel %vm259, %v773, %v769
    %777 = vst [vmem:[#allocation1] ss:$4 sm:$0xff] %v502
    %v778 = vld.sshfl [vmem:[#allocation1] sm:$0xff pattern:$0x73625140]
    %779 = vrot.lane.b32.xlu0 %v778, 64
    %v780 = vpop.permute.xlu0 %779
    %v782 = vsel %vm72, %v774, %v780
    %v783 = vpack.c.bf16 %v782, %v782
    %v785 = vsel %vm444, %v783, 0
    %787 = vmatpush.bf16.msra.mxu0 0
    %788 = vmatpush.bf16.msra.mxu0 0
    %789 = vmatpush.bf16.msra.mxu0 0
    %790 = vmatpush.bf16.msra.mxu0 0
    %791 = vmatpush.bf16.msra.mxu0 %v439
    %792 = vmatpush.bf16.msra.mxu0 %v438
    %793 = vmatpush.bf16.msra.mxu0 %v437
    %794 = vmatpush.bf16.msra.mxu0 %v436
    %795 = vmatmul.bf16.gmra.mxu0 %v785
    %v796 = vpop.f32.mrf.mxu0
    %v797 = vadd.f32 0.0, %v796
    %v798 = vpop.f32.mrf.mxu0
    %799 = vdwg.mxu0
    %v800 = vadd.f32 %v166, %v797
    %v801 = vxor.u32 %v800, 2147483648
    %v802 = vmul.f32 %v801, 1.442695
    %v803 = vpow.pop %v802
    %v804 = vadd.f32 %v803, 1.0
    %v805 = vrcp.pop %v804
    %v806 = vmul.f32 %v804, %v805
    %v807 = vsub.f32 1.0, %v806
    %v808 = vmul.f32 %v805, %v807
    %v809 = vadd.f32 %v805, %v808
    %vm810 = vweird.f32 %v804
    %vm811 = vweird.f32 %v805
    %vm812 = vmor %vm810, %vm811
    %v813 = vsel %vm812, %v805, %v809
    %v814 = vand.u32 2147483647, %v804
    %vm815 = vcmp.eq.f32.partialorder %v814, 8.507059e+37
    %v816 = vand.u32 %v804, 2147483648
    %v817 = vor.u32 1.1754944e-38, %v816
    %v818 = vsel %vm815, %v817, %v813
    %v819 = vmul.f32 1.0, %v818
    %v820 = vtanh.pop %v800
    %v821 = vmul.f32 %v819, %v496
    %823 = vrot.lane.b32.xlu0 %v820, 64
    %v824 = vpop.permute.xlu0 %823
    %v826 = vmul.f32 %v819, %v824
    %828 = vrot.lane.b32.xlu0 %v826, 32
    %v829 = vpop.permute.xlu0 %828
    %v831 = vadd.f32 %v821, %v829
    %v832 = vtanh.pop %v831
    %834 = vrot.lane.b32.xlu0 %v832, 64
    %v835 = vpop.permute.xlu0 %834
    %v837 = vmul.f32 %v819, %v835
    %v838 = vpack.c.bf16 %v837, %v837
    %840 = vrot.lane.b32.xlu0 %v838, 32
    %v841 = vpop.permute.xlu0 %840
    %v843 = vsel %vm72, %v841, 0
    %845 = vmatpush.bf16.msra.mxu0 0
    %846 = vmatpush.bf16.msra.mxu0 0
    %847 = vmatpush.bf16.msra.mxu0 0
    %848 = vmatpush.bf16.msra.mxu0 0
    %849 = vmatpush.bf16.msra.mxu0 0
    %850 = vmatpush.bf16.msra.mxu0 0
    %851 = vmatpush.bf16.msra.mxu0 %v516
    %852 = vmatpush.bf16.msra.mxu0 %v515
    %853 = vmatmul.bf16.gmra.mxu0 %v843
    %v854 = vpop.f32.mrf.mxu0
    %v855 = vadd.f32 %v595, %v854
    %v856 = vpop.f32.mrf.mxu0
    %857 = vdwg.mxu0
    %v858 = vadd.f32 %v855, %v535
    %v859 = vxor.u32 %v858, 2147483648
    %v860 = vmul.f32 %v859, 1.442695
    %v861 = vpow.pop %v860
    %v862 = vadd.f32 %v861, 1.0
    %v863 = vrcp.pop %v862
    %v864 = vmul.f32 %v862, %v863
    %v865 = vsub.f32 1.0, %v864
    %v866 = vmul.f32 %v863, %v865
    %v867 = vadd.f32 %v863, %v866
    %vm868 = vweird.f32 %v862
    %vm869 = vweird.f32 %v863
    %vm870 = vmor %vm868, %vm869
    %v871 = vsel %vm870, %v863, %v867
    %v872 = vand.u32 2147483647, %v862
    %vm873 = vcmp.eq.f32.partialorder %v872, 8.507059e+37
    %v874 = vand.u32 %v862, 2147483648
    %v875 = vor.u32 1.1754944e-38, %v874
    %v876 = vsel %vm873, %v875, %v871
    %v877 = vmul.f32 1.0, %v876
    %v878 = vtanh.pop %v858
    %v879 = vmul.f32 %v877, %v571
    %881 = vrot.lane.b32.xlu0 %v878, 64
    %v882 = vpop.permute.xlu0 %881
    %v884 = vmul.f32 %v877, %v882
    %886 = vrot.lane.b32.xlu0 %v884, 32
    %v887 = vpop.permute.xlu0 %886
    %v889 = vadd.f32 %v879, %v887
    %v890 = vtanh.pop %v889
    %892 = vrot.lane.b32.xlu0 %v890, 64
    %v893 = vpop.permute.xlu0 %892
    %v895 = vmul.f32 %v877, %v893
    %v896 = vpack.c.bf16 %v895, %v895
    %898 = vrot.lane.b32.xlu0 %v896, 32
    %v899 = vpop.permute.xlu0 %898
    %v901 = vsel %vm72, %v899, 0
    %903 = vmatpush.bf16.msra.mxu0 0
    %904 = vmatpush.bf16.msra.mxu0 0
    %905 = vmatpush.bf16.msra.mxu0 0
    %906 = vmatpush.bf16.msra.mxu0 0
    %907 = vmatpush.bf16.msra.mxu0 0
    %908 = vmatpush.bf16.msra.mxu0 0
    %909 = vmatpush.bf16.msra.mxu0 %v199
    %910 = vmatpush.bf16.msra.mxu0 %v197
    %911 = vmatmul.bf16.gmra.mxu0 %v901
    %v912 = vpop.f32.mrf.mxu0
    %v913 = vadd.f32 0.0, %v912
    %v914 = vpop.f32.mrf.mxu0
    %915 = vdwg.mxu0
    %916 = vmatpush.bf16.msra.mxu0 0
    %917 = vmatpush.bf16.msra.mxu0 0
    %918 = vmatpush.bf16.msra.mxu0 0
    %919 = vmatpush.bf16.msra.mxu0 0
    %920 = vmatpush.bf16.msra.mxu0 0
    %921 = vmatpush.bf16.msra.mxu0 0
    %922 = vmatpush.bf16.msra.mxu0 %v200
    %923 = vmatpush.bf16.msra.mxu0 %v198
    %924 = vmatmul.bf16.gmra.mxu0 %v901
    %v925 = vpop.f32.mrf.mxu0
    %v926 = vadd.f32 0.0, %v925
    %v927 = vpop.f32.mrf.mxu0
    %928 = vdwg.mxu0
    %v930 = vrot.slane %v926, 1
    %v931 = vperm.slane %v926, 0
    %v932 = vperm.slane %v930, 0
    %v935 = vadd.f32 %v931, %v86
    %v936 = vadd.f32 %v932, %v88
    %v937 = vtanh.pop %v935
    %v938 = vtanh.pop %v936
    %v939 = vmul.f32 %v937, %v244
    %v940 = vmul.f32 %v938, %v244
    %v941 = vsel %vm72, %v939, 0.0
    %942 = vadd.xlane.f32.xlu0 %v941
    %v943 = vpop.xlane.xlu0 %942
    %v944 = vsel %vm72, %v940, 0.0
    %945 = vadd.xlane.f32.xlu0 %v944
    %v946 = vpop.xlane.xlu0 %945
    %v949 = vperm.slane %v943, %v256
    %v950 = vperm.slane %v946, %v256
    %v951 = vsel %vm259, %v950, %v949
    %v953 = vsel %vm262, %v951, -inf
    %954 = vmax.xlane.f32.xlu0 %v953
    %v955 = vpop.xlane.xlu0 %954
    %v957 = vperm.slane %v955, 0
    %v958 = vperm.slane %v955, 1
    %v961 = vsub.f32 %v943, %v957
    %v962 = vsub.f32 %v946, %v958
    %v963 = vmul.f32 %v961, 1.442695
    %v964 = vpow.pop %v963
    %v965 = vmul.f32 %v962, 1.442695
    %v966 = vpow.pop %v965
    %969 = vset.pattern.permute.xlu0 0
    %970 = vperm.xlu0 %969, %v964
    %v971 = vpop.permute.xlu0 %970
    %972 = vset.pattern.permute.xlu0 0
    %973 = vperm.xlu0 %972, %v966
    %v974 = vpop.permute.xlu0 %973
    %v975 = vperm.slane %v971, %v256
    %v976 = vperm.slane %v974, %v256
    %v977 = vsel %vm259, %v976, %v975
    %v979 = vsel %vm262, %v977, 0.0
    %980 = vadd.xlane.f32.xlu0 %v979
    %v981 = vpop.xlane.xlu0 %980
    %v983 = vperm.slane %v981, 0
    %v984 = vperm.slane %v981, 1
    %v987 = vrcp.pop %v983
    %v988 = vmul.f32 %v983, %v987
    %v989 = vsub.f32 1.0, %v988
    %v990 = vmul.f32 %v987, %v989
    %v991 = vadd.f32 %v987, %v990
    %vm992 = vweird.f32 %v983
    %vm993 = vweird.f32 %v987
    %vm994 = vmor %vm992, %vm993
    %v995 = vsel %vm994, %v987, %v991
    %v996 = vand.u32 2147483647, %v983
    %vm997 = vcmp.eq.f32.partialorder %v996, 8.507059e+37
    %v998 = vand.u32 %v983, 2147483648
    %v999 = vor.u32 1.1754944e-38, %v998
    %v1000 = vsel %vm997, %v999, %v995
    %v1001 = vmul.f32 %v964, %v1000
    %v1002 = vrcp.pop %v984
    %v1003 = vmul.f32 %v984, %v1002
    %v1004 = vsub.f32 1.0, %v1003
    %v1005 = vmul.f32 %v1002, %v1004
    %v1006 = vadd.f32 %v1002, %v1005
    %vm1007 = vweird.f32 %v984
    %vm1008 = vweird.f32 %v1002
    %vm1009 = vmor %vm1007, %vm1008
    %v1010 = vsel %vm1009, %v1002, %v1006
    %v1011 = vand.u32 2147483647, %v984
    %vm1012 = vcmp.eq.f32.partialorder %v1011, 8.507059e+37
    %v1013 = vand.u32 %v984, 2147483648
    %v1014 = vor.u32 1.1754944e-38, %v1013
    %v1015 = vsel %vm1012, %v1014, %v1010
    %v1016 = vmul.f32 %v966, %v1015
    %1018 = vset.pattern.permute.xlu0 0
    %1019 = vperm.xlu0 %1018, %v1001
    %v1020 = vpop.permute.xlu0 %1019
    %1023 = vset.pattern.permute.xlu0 0
    %1024 = vperm.xlu0 %1023, %v1016
    %v1025 = vpop.permute.xlu0 %1024
    %v1027 = vmul.f32 %v1020, %v56
    %v1028 = vmul.f32 %v1025, %v57
    %v1029 = vsel %vm72, %v1027, 0.0
    %v1030 = vrot.slane %v1029, 4
    %v1031 = vadd.f32 %v1029, %v1030
    %v1032 = vrot.slane %v1031, 2
    %v1033 = vadd.f32 %v1031, %v1032
    %v1034 = vrot.slane %v1033, 1
    %v1035 = vadd.f32 %v1033, %v1034
    %v1036 = vsel %vm72, %v1028, 0.0
    %v1037 = vrot.slane %v1036, 4
    %v1038 = vadd.f32 %v1036, %v1037
    %v1039 = vrot.slane %v1038, 2
    %v1040 = vadd.f32 %v1038, %v1039
    %v1041 = vrot.slane %v1040, 1
    %v1042 = vadd.f32 %v1040, %v1041
    %v1045 = vsel %vm259, %v1042, %v1035
    %v1047 = vsel %vm357, %v1045, 0.0
    %1048 = vadd.xlane.f32.xlu0 %v1047
    %v1049 = vpop.xlane.xlu0 %1048
    %v1050 = vmul.f32 %v1049, %v367
    %v1052 = vrot.slane %v1050, 1
    %v1055 = vsub.f32 %v1035, %v1050
    %v1056 = vsub.f32 %v1042, %v1052
    %v1057 = vmul.f32 %v1055, %v1055
    %v1058 = vmul.f32 %v1056, %v1056
    %v1061 = vrot.slane %v1058, 7
    %v1062 = vsel %vm259, %v1061, %v1057
    %v1064 = vsel %vm357, %v1062, 0.0
    %1065 = vadd.xlane.f32.xlu0 %v1064
    %v1066 = vpop.xlane.xlu0 %1065
    %v1067 = vmul.f32 %v1066, %v367
    %v1068 = vadd.f32 %v1067, 1e-05
    %v1069 = vrsqrt.pop %v1068
    %v1070 = vmul.f32 %v1069, %v1068
    %v1071 = vmul.f32 %v1070, %v1069
    %v1072 = vmul.f32 0.5, %v1071
    %v1073 = vsub.f32 1.5, %v1072
    %v1074 = vmul.f32 %v1069, %v1073
    %vm1075 = vweird.f32 %v1068
    %vm1076 = vweird.f32 %v1069
    %vm1077 = vmor %vm1075, %vm1076
    %v1078 = vsel %vm1077, %v1069, %v1074
    %v1080 = vrot.slane %v1078, 1
    %v1083 = vmul.f32 %v1055, %v1078
    %v1084 = vmul.f32 %v1056, %v1080
    %v1085 = vmul.f32 %v1083, %v403
    %v1086 = vmul.f32 %v1084, %v403
    %v1087 = vadd.f32 %v1085, %v406
    %v1088 = vadd.f32 %v1086, %v406
    %v1091 = vrot.slane %v1088, 7
    %v1092 = vsel %vm259, %v1091, %v1087
    %1095 = vst [vmem:[#allocation1] ss:$4 sm:$0xff] %v837
    %v1096 = vld.sshfl [vmem:[#allocation1] sm:$0xff pattern:$0x73625140]
    %1097 = vrot.lane.b32.xlu0 %v1096, 64
    %v1098 = vpop.permute.xlu0 %1097
    %v1100 = vsel %vm72, %v1092, %v1098
    %v1101 = vpack.c.bf16 %v1100, %v1100
    %v1103 = vsel %vm444, %v1101, 0
    %1105 = vmatpush.bf16.msra.mxu0 0
    %1106 = vmatpush.bf16.msra.mxu0 0
    %1107 = vmatpush.bf16.msra.mxu0 0
    %1108 = vmatpush.bf16.msra.mxu0 0
    %1109 = vmatpush.bf16.msra.mxu0 %v439
    %1110 = vmatpush.bf16.msra.mxu0 %v438
    %1111 = vmatpush.bf16.msra.mxu0 %v437
    %1112 = vmatpush.bf16.msra.mxu0 %v436
    %1113 = vmatmul.bf16.gmra.mxu0 %v1103
    %v1114 = vpop.f32.mrf.mxu0
    %v1115 = vadd.f32 0.0, %v1114
    %v1116 = vpop.f32.mrf.mxu0
    %1117 = vdwg.mxu0
    %v1118 = vadd.f32 %v167, %v1115
    %v1119 = vxor.u32 %v1118, 2147483648
    %v1120 = vmul.f32 %v1119, 1.442695
    %v1121 = vpow.pop %v1120
    %v1122 = vadd.f32 %v1121, 1.0
    %v1123 = vrcp.pop %v1122
    %v1124 = vmul.f32 %v1122, %v1123
    %v1125 = vsub.f32 1.0, %v1124
    %v1126 = vmul.f32 %v1123, %v1125
    %v1127 = vadd.f32 %v1123, %v1126
    %vm1128 = vweird.f32 %v1122
    %vm1129 = vweird.f32 %v1123
    %vm1130 = vmor %vm1128, %vm1129
    %v1131 = vsel %vm1130, %v1123, %v1127
    %v1132 = vand.u32 2147483647, %v1122
    %vm1133 = vcmp.eq.f32.partialorder %v1132, 8.507059e+37
    %v1134 = vand.u32 %v1122, 2147483648
    %v1135 = vor.u32 1.1754944e-38, %v1134
    %v1136 = vsel %vm1133, %v1135, %v1131
    %v1137 = vmul.f32 1.0, %v1136
    %v1138 = vtanh.pop %v1118
    %v1139 = vmul.f32 %v1137, %v831
    %1141 = vrot.lane.b32.xlu0 %v1138, 64
    %v1142 = vpop.permute.xlu0 %1141
    %v1144 = vmul.f32 %v1137, %v1142
    %1146 = vrot.lane.b32.xlu0 %v1144, 32
    %v1147 = vpop.permute.xlu0 %1146
    %v1149 = vadd.f32 %v1139, %v1147
    %v1150 = vtanh.pop %v1149
    %1152 = vrot.lane.b32.xlu0 %v1150, 64
    %v1153 = vpop.permute.xlu0 %1152
    %v1155 = vmul.f32 %v1137, %v1153
    %v1156 = vpack.c.bf16 %v1155, %v1155
    %1158 = vrot.lane.b32.xlu0 %v1156, 32
    %v1159 = vpop.permute.xlu0 %1158
    %v1161 = vsel %vm72, %v1159, 0
    %1163 = vmatpush.bf16.msra.mxu0 0
    %1164 = vmatpush.bf16.msra.mxu0 0
    %1165 = vmatpush.bf16.msra.mxu0 0
    %1166 = vmatpush.bf16.msra.mxu0 0
    %1167 = vmatpush.bf16.msra.mxu0 0
    %1168 = vmatpush.bf16.msra.mxu0 0
    %1169 = vmatpush.bf16.msra.mxu0 %v516
    %1170 = vmatpush.bf16.msra.mxu0 %v515
    %1171 = vmatmul.bf16.gmra.mxu0 %v1161
    %v1172 = vpop.f32.mrf.mxu0
    %v1173 = vadd.f32 %v913, %v1172
    %v1174 = vpop.f32.mrf.mxu0
    %1175 = vdwg.mxu0
    %v1176 = vadd.f32 %v1173, %v535
    %v1177 = vxor.u32 %v1176, 2147483648
    %v1178 = vmul.f32 %v1177, 1.442695
    %v1179 = vpow.pop %v1178
    %v1180 = vadd.f32 %v1179, 1.0
    %v1181 = vrcp.pop %v1180
    %v1182 = vmul.f32 %v1180, %v1181
    %v1183 = vsub.f32 1.0, %v1182
    %v1184 = vmul.f32 %v1181, %v1183
    %v1185 = vadd.f32 %v1181, %v1184
    %vm1186 = vweird.f32 %v1180
    %vm1187 = vweird.f32 %v1181
    %vm1188 = vmor %vm1186, %vm1187
    %v1189 = vsel %vm1188, %v1181, %v1185
    %v1190 = vand.u32 2147483647, %v1180
    %vm1191 = vcmp.eq.f32.partialorder %v1190, 8.507059e+37
    %v1192 = vand.u32 %v1180, 2147483648
    %v1193 = vor.u32 1.1754944e-38, %v1192
    %v1194 = vsel %vm1191, %v1193, %v1189
    %v1195 = vmul.f32 1.0, %v1194
    %v1196 = vtanh.pop %v1176
    %v1197 = vmul.f32 %v1195, %v889
    %1199 = vrot.lane.b32.xlu0 %v1196, 64
    %v1200 = vpop.permute.xlu0 %1199
    %v1202 = vmul.f32 %v1195, %v1200
    %1204 = vrot.lane.b32.xlu0 %v1202, 32
    %v1205 = vpop.permute.xlu0 %1204
    %v1207 = vadd.f32 %v1197, %v1205
    %v1208 = vtanh.pop %v1207
    %1210 = vrot.lane.b32.xlu0 %v1208, 64
    %v1211 = vpop.permute.xlu0 %1210
    %v1213 = vmul.f32 %v1195, %v1211
    %v1214 = vpack.c.bf16 %v1213, %v1213
    %1216 = vrot.lane.b32.xlu0 %v1214, 32
    %v1217 = vpop.permute.xlu0 %1216
    %v1219 = vsel %vm72, %v1217, 0
    %1221 = vmatpush.bf16.msra.mxu0 0
    %1222 = vmatpush.bf16.msra.mxu0 0
    %1223 = vmatpush.bf16.msra.mxu0 0
    %1224 = vmatpush.bf16.msra.mxu0 0
    %1225 = vmatpush.bf16.msra.mxu0 0
    %1226 = vmatpush.bf16.msra.mxu0 0
    %1227 = vmatpush.bf16.msra.mxu0 %v199
    %1228 = vmatpush.bf16.msra.mxu0 %v197
    %1229 = vmatmul.bf16.gmra.mxu0 %v1219
    %v1230 = vpop.f32.mrf.mxu0
    %v1231 = vadd.f32 0.0, %v1230
    %v1232 = vpop.f32.mrf.mxu0
    %1233 = vdwg.mxu0
    %1234 = vmatpush.bf16.msra.mxu0 0
    %1235 = vmatpush.bf16.msra.mxu0 0
    %1236 = vmatpush.bf16.msra.mxu0 0
    %1237 = vmatpush.bf16.msra.mxu0 0
    %1238 = vmatpush.bf16.msra.mxu0 0
    %1239 = vmatpush.bf16.msra.mxu0 0
    %1240 = vmatpush.bf16.msra.mxu0 %v200
    %1241 = vmatpush.bf16.msra.mxu0 %v198
    %1242 = vmatmul.bf16.gmra.mxu0 %v1219
    %v1243 = vpop.f32.mrf.mxu0
    %v1244 = vadd.f32 0.0, %v1243
    %v1245 = vpop.f32.mrf.mxu0
    %1246 = vdwg.mxu0
    %v1248 = vrot.slane %v1244, 1
    %v1249 = vperm.slane %v1244, 0
    %v1250 = vperm.slane %v1248, 0
    %v1253 = vadd.f32 %v1249, %v86
    %v1254 = vadd.f32 %v1250, %v88
    %v1255 = vtanh.pop %v1253
    %v1256 = vtanh.pop %v1254
    %v1257 = vmul.f32 %v1255, %v244
    %v1258 = vmul.f32 %v1256, %v244
    %v1259 = vsel %vm72, %v1257, 0.0
    %1260 = vadd.xlane.f32.xlu0 %v1259
    %v1261 = vpop.xlane.xlu0 %1260
    %v1262 = vsel %vm72, %v1258, 0.0
    %1263 = vadd.xlane.f32.xlu0 %v1262
    %v1264 = vpop.xlane.xlu0 %1263
    %v1267 = vperm.slane %v1261, %v256
    %v1268 = vperm.slane %v1264, %v256
    %v1269 = vsel %vm259, %v1268, %v1267
    %v1271 = vsel %vm262, %v1269, -inf
    %1272 = vmax.xlane.f32.xlu0 %v1271
    %v1273 = vpop.xlane.xlu0 %1272
    %v1275 = vperm.slane %v1273, 0
    %v1276 = vperm.slane %v1273, 1
    %v1279 = vsub.f32 %v1261, %v1275
    %v1280 = vsub.f32 %v1264, %v1276
    %v1281 = vmul.f32 %v1279, 1.442695
    %v1282 = vpow.pop %v1281
    %v1283 = vmul.f32 %v1280, 1.442695
    %v1284 = vpow.pop %v1283
    %1287 = vset.pattern.permute.xlu0 0
    %1288 = vperm.xlu0 %1287, %v1282
    %v1289 = vpop.permute.xlu0 %1288
    %1290 = vset.pattern.permute.xlu0 0
    %1291 = vperm.xlu0 %1290, %v1284
    %v1292 = vpop.permute.xlu0 %1291
    %v1293 = vperm.slane %v1289, %v256
    %v1294 = vperm.slane %v1292, %v256
    %v1295 = vsel %vm259, %v1294, %v1293
    %v1297 = vsel %vm262, %v1295, 0.0
    %1298 = vadd.xlane.f32.xlu0 %v1297
    %v1299 = vpop.xlane.xlu0 %1298
    %v1301 = vperm.slane %v1299, 0
    %v1302 = vperm.slane %v1299, 1
    %v1305 = vrcp.pop %v1301
    %v1306 = vmul.f32 %v1301, %v1305
    %v1307 = vsub.f32 1.0, %v1306
    %v1308 = vmul.f32 %v1305, %v1307
    %v1309 = vadd.f32 %v1305, %v1308
    %vm1310 = vweird.f32 %v1301
    %vm1311 = vweird.f32 %v1305
    %vm1312 = vmor %vm1310, %vm1311
    %v1313 = vsel %vm1312, %v1305, %v1309
    %v1314 = vand.u32 2147483647, %v1301
    %vm1315 = vcmp.eq.f32.partialorder %v1314, 8.507059e+37
    %v1316 = vand.u32 %v1301, 2147483648
    %v1317 = vor.u32 1.1754944e-38, %v1316
    %v1318 = vsel %vm1315, %v1317, %v1313
    %v1319 = vmul.f32 %v1282, %v1318
    %v1320 = vrcp.pop %v1302
    %v1321 = vmul.f32 %v1302, %v1320
    %v1322 = vsub.f32 1.0, %v1321
    %v1323 = vmul.f32 %v1320, %v1322
    %v1324 = vadd.f32 %v1320, %v1323
    %vm1325 = vweird.f32 %v1302
    %vm1326 = vweird.f32 %v1320
    %vm1327 = vmor %vm1325, %vm1326
    %v1328 = vsel %vm1327, %v1320, %v1324
    %v1329 = vand.u32 2147483647, %v1302
    %vm1330 = vcmp.eq.f32.partialorder %v1329, 8.507059e+37
    %v1331 = vand.u32 %v1302, 2147483648
    %v1332 = vor.u32 1.1754944e-38, %v1331
    %v1333 = vsel %vm1330, %v1332, %v1328
    %v1334 = vmul.f32 %v1284, %v1333
    %1336 = vset.pattern.permute.xlu0 0
    %1337 = vperm.xlu0 %1336, %v1319
    %v1338 = vpop.permute.xlu0 %1337
    %1341 = vset.pattern.permute.xlu0 0
    %1342 = vperm.xlu0 %1341, %v1334
    %v1343 = vpop.permute.xlu0 %1342
    %v1345 = vmul.f32 %v1338, %v56
    %v1346 = vmul.f32 %v1343, %v57
    %v1347 = vsel %vm72, %v1345, 0.0
    %v1348 = vrot.slane %v1347, 4
    %v1349 = vadd.f32 %v1347, %v1348
    %v1350 = vrot.slane %v1349, 2
    %v1351 = vadd.f32 %v1349, %v1350
    %v1352 = vrot.slane %v1351, 1
    %v1353 = vadd.f32 %v1351, %v1352
    %v1354 = vsel %vm72, %v1346, 0.0
    %v1355 = vrot.slane %v1354, 4
    %v1356 = vadd.f32 %v1354, %v1355
    %v1357 = vrot.slane %v1356, 2
    %v1358 = vadd.f32 %v1356, %v1357
    %v1359 = vrot.slane %v1358, 1
    %v1360 = vadd.f32 %v1358, %v1359
    %v1363 = vsel %vm259, %v1360, %v1353
    %v1365 = vsel %vm357, %v1363, 0.0
    %1366 = vadd.xlane.f32.xlu0 %v1365
    %v1367 = vpop.xlane.xlu0 %1366
    %v1368 = vmul.f32 %v1367, %v367
    %v1370 = vrot.slane %v1368, 1
    %v1373 = vsub.f32 %v1353, %v1368
    %v1374 = vsub.f32 %v1360, %v1370
    %v1375 = vmul.f32 %v1373, %v1373
    %v1376 = vmul.f32 %v1374, %v1374
    %v1379 = vrot.slane %v1376, 7
    %v1380 = vsel %vm259, %v1379, %v1375
    %v1382 = vsel %vm357, %v1380, 0.0
    %1383 = vadd.xlane.f32.xlu0 %v1382
    %v1384 = vpop.xlane.xlu0 %1383
    %v1385 = vmul.f32 %v1384, %v367
    %v1386 = vadd.f32 %v1385, 1e-05
    %v1387 = vrsqrt.pop %v1386
    %v1388 = vmul.f32 %v1387, %v1386
    %v1389 = vmul.f32 %v1388, %v1387
    %v1390 = vmul.f32 0.5, %v1389
    %v1391 = vsub.f32 1.5, %v1390
    %v1392 = vmul.f32 %v1387, %v1391
    %vm1393 = vweird.f32 %v1386
    %vm1394 = vweird.f32 %v1387
    %vm1395 = vmor %vm1393, %vm1394
    %v1396 = vsel %vm1395, %v1387, %v1392
    %v1398 = vrot.slane %v1396, 1
    %v1401 = vmul.f32 %v1373, %v1396
    %v1402 = vmul.f32 %v1374, %v1398
    %v1403 = vmul.f32 %v1401, %v403
    %v1404 = vmul.f32 %v1402, %v403
    %v1405 = vadd.f32 %v1403, %v406
    %v1406 = vadd.f32 %v1404, %v406
    %v1409 = vrot.slane %v1406, 7
    %v1410 = vsel %vm259, %v1409, %v1405
    %1413 = vst [vmem:[#allocation1] ss:$4 sm:$0xff] %v1155
    %v1414 = vld.sshfl [vmem:[#allocation1] sm:$0xff pattern:$0x73625140]
    %1415 = vrot.lane.b32.xlu0 %v1414, 64
    %v1416 = vpop.permute.xlu0 %1415
    %v1418 = vsel %vm72, %v1410, %v1416
    %v1419 = vpack.c.bf16 %v1418, %v1418
    %v1421 = vsel %vm444, %v1419, 0
    %1423 = vmatpush.bf16.msra.mxu0 0
    %1424 = vmatpush.bf16.msra.mxu0 0
    %1425 = vmatpush.bf16.msra.mxu0 0
    %1426 = vmatpush.bf16.msra.mxu0 0
    %1427 = vmatpush.bf16.msra.mxu0 %v439
    %1428 = vmatpush.bf16.msra.mxu0 %v438
    %1429 = vmatpush.bf16.msra.mxu0 %v437
    %1430 = vmatpush.bf16.msra.mxu0 %v436
    %1431 = vmatmul.bf16.gmra.mxu0 %v1421
    %v1432 = vpop.f32.mrf.mxu0
    %v1433 = vadd.f32 0.0, %v1432
    %v1434 = vpop.f32.mrf.mxu0
    %1435 = vdwg.mxu0
    %v1436 = vadd.f32 %v168, %v1433
    %v1437 = vxor.u32 %v1436, 2147483648
    %v1438 = vmul.f32 %v1437, 1.442695
    %v1439 = vpow.pop %v1438
    %v1440 = vadd.f32 %v1439, 1.0
    %v1441 = vrcp.pop %v1440
    %v1442 = vmul.f32 %v1440, %v1441
    %v1443 = vsub.f32 1.0, %v1442
    %v1444 = vmul.f32 %v1441, %v1443
    %v1445 = vadd.f32 %v1441, %v1444
    %vm1446 = vweird.f32 %v1440
    %vm1447 = vweird.f32 %v1441
    %vm1448 = vmor %vm1446, %vm1447
    %v1449 = vsel %vm1448, %v1441, %v1445
    %v1450 = vand.u32 2147483647, %v1440
    %vm1451 = vcmp.eq.f32.partialorder %v1450, 8.507059e+37
    %v1452 = vand.u32 %v1440, 2147483648
    %v1453 = vor.u32 1.1754944e-38, %v1452
    %v1454 = vsel %vm1451, %v1453, %v1449
    %v1455 = vmul.f32 1.0, %v1454
    %v1456 = vtanh.pop %v1436
    %v1457 = vmul.f32 %v1455, %v1149
    %1459 = vrot.lane.b32.xlu0 %v1456, 64
    %v1460 = vpop.permute.xlu0 %1459
    %v1462 = vmul.f32 %v1455, %v1460
    %1464 = vrot.lane.b32.xlu0 %v1462, 32
    %v1465 = vpop.permute.xlu0 %1464
    %v1467 = vadd.f32 %v1457, %v1465
    %v1468 = vtanh.pop %v1467
    %1470 = vrot.lane.b32.xlu0 %v1468, 64
    %v1471 = vpop.permute.xlu0 %1470
    %v1473 = vmul.f32 %v1455, %v1471
    %v1474 = vpack.c.bf16 %v1473, %v1473
    %1476 = vrot.lane.b32.xlu0 %v1474, 32
    %v1477 = vpop.permute.xlu0 %1476
    %v1479 = vsel %vm72, %v1477, 0
    %1481 = vmatpush.bf16.msra.mxu0 0
    %1482 = vmatpush.bf16.msra.mxu0 0
    %1483 = vmatpush.bf16.msra.mxu0 0
    %1484 = vmatpush.bf16.msra.mxu0 0
    %1485 = vmatpush.bf16.msra.mxu0 0
    %1486 = vmatpush.bf16.msra.mxu0 0
    %1487 = vmatpush.bf16.msra.mxu0 %v516
    %1488 = vmatpush.bf16.msra.mxu0 %v515
    %1489 = vmatmul.bf16.gmra.mxu0 %v1479
    %v1490 = vpop.f32.mrf.mxu0
    %v1491 = vadd.f32 %v1231, %v1490
    %v1492 = vpop.f32.mrf.mxu0
    %1493 = vdwg.mxu0
    %v1494 = vadd.f32 %v1491, %v535
    %v1495 = vxor.u32 %v1494, 2147483648
    %v1496 = vmul.f32 %v1495, 1.442695
    %v1497 = vpow.pop %v1496
    %v1498 = vadd.f32 %v1497, 1.0
    %v1499 = vrcp.pop %v1498
    %v1500 = vmul.f32 %v1498, %v1499
    %v1501 = vsub.f32 1.0, %v1500
    %v1502 = vmul.f32 %v1499, %v1501
    %v1503 = vadd.f32 %v1499, %v1502
    %vm1504 = vweird.f32 %v1498
    %vm1505 = vweird.f32 %v1499
    %vm1506 = vmor %vm1504, %vm1505
    %v1507 = vsel %vm1506, %v1499, %v1503
    %v1508 = vand.u32 2147483647, %v1498
    %vm1509 = vcmp.eq.f32.partialorder %v1508, 8.507059e+37
    %v1510 = vand.u32 %v1498, 2147483648
    %v1511 = vor.u32 1.1754944e-38, %v1510
    %v1512 = vsel %vm1509, %v1511, %v1507
    %v1513 = vmul.f32 1.0, %v1512
    %v1514 = vtanh.pop %v1494
    %v1515 = vmul.f32 %v1513, %v1207
    %1517 = vrot.lane.b32.xlu0 %v1514, 64
    %v1518 = vpop.permute.xlu0 %1517
    %v1520 = vmul.f32 %v1513, %v1518
    %1522 = vrot.lane.b32.xlu0 %v1520, 32
    %v1523 = vpop.permute.xlu0 %1522
    %v1525 = vadd.f32 %v1515, %v1523
    %v1526 = vtanh.pop %v1525
    %1528 = vrot.lane.b32.xlu0 %v1526, 64
    %v1529 = vpop.permute.xlu0 %1528
    %v1531 = vmul.f32 %v1513, %v1529
    %v1532 = vpack.c.bf16 %v1531, %v1531
    %1534 = vrot.lane.b32.xlu0 %v1532, 32
    %v1535 = vpop.permute.xlu0 %1534
    %v1537 = vsel %vm72, %v1535, 0
    %1539 = vmatpush.bf16.msra.mxu0 0
    %1540 = vmatpush.bf16.msra.mxu0 0
    %1541 = vmatpush.bf16.msra.mxu0 0
    %1542 = vmatpush.bf16.msra.mxu0 0
    %1543 = vmatpush.bf16.msra.mxu0 0
    %1544 = vmatpush.bf16.msra.mxu0 0
    %1545 = vmatpush.bf16.msra.mxu0 %v199
    %1546 = vmatpush.bf16.msra.mxu0 %v197
    %1547 = vmatmul.bf16.gmra.mxu0 %v1537
    %v1548 = vpop.f32.mrf.mxu0
    %v1549 = vadd.f32 0.0, %v1548
    %v1550 = vpop.f32.mrf.mxu0
    %1551 = vdwg.mxu0
    %1552 = vmatpush.bf16.msra.mxu0 0
    %1553 = vmatpush.bf16.msra.mxu0 0
    %1554 = vmatpush.bf16.msra.mxu0 0
    %1555 = vmatpush.bf16.msra.mxu0 0
    %1556 = vmatpush.bf16.msra.mxu0 0
    %1557 = vmatpush.bf16.msra.mxu0 0
    %1558 = vmatpush.bf16.msra.mxu0 %v200
    %1559 = vmatpush.bf16.msra.mxu0 %v198
    %1560 = vmatmul.bf16.gmra.mxu0 %v1537
    %v1561 = vpop.f32.mrf.mxu0
    %v1562 = vadd.f32 0.0, %v1561
    %v1563 = vpop.f32.mrf.mxu0
    %1564 = vdwg.mxu0
    %v1566 = vrot.slane %v1562, 1
    %v1567 = vperm.slane %v1562, 0
    %v1568 = vperm.slane %v1566, 0
    %v1571 = vadd.f32 %v1567, %v86
    %v1572 = vadd.f32 %v1568, %v88
    %v1573 = vtanh.pop %v1571
    %v1574 = vtanh.pop %v1572
    %v1575 = vmul.f32 %v1573, %v244
    %v1576 = vmul.f32 %v1574, %v244
    %v1577 = vsel %vm72, %v1575, 0.0
    %1578 = vadd.xlane.f32.xlu0 %v1577
    %v1579 = vpop.xlane.xlu0 %1578
    %v1580 = vsel %vm72, %v1576, 0.0
    %1581 = vadd.xlane.f32.xlu0 %v1580
    %v1582 = vpop.xlane.xlu0 %1581
    %v1585 = vperm.slane %v1579, %v256
    %v1586 = vperm.slane %v1582, %v256
    %v1587 = vsel %vm259, %v1586, %v1585
    %v1589 = vsel %vm262, %v1587, -inf
    %1590 = vmax.xlane.f32.xlu0 %v1589
    %v1591 = vpop.xlane.xlu0 %1590
    %v1593 = vperm.slane %v1591, 0
    %v1594 = vperm.slane %v1591, 1
    %v1597 = vsub.f32 %v1579, %v1593
    %v1598 = vsub.f32 %v1582, %v1594
    %v1599 = vmul.f32 %v1597, 1.442695
    %v1600 = vpow.pop %v1599
    %v1601 = vmul.f32 %v1598, 1.442695
    %v1602 = vpow.pop %v1601
    %1605 = vset.pattern.permute.xlu0 0
    %1606 = vperm.xlu0 %1605, %v1600
    %v1607 = vpop.permute.xlu0 %1606
    %1608 = vset.pattern.permute.xlu0 0
    %1609 = vperm.xlu0 %1608, %v1602
    %v1610 = vpop.permute.xlu0 %1609
    %v1611 = vperm.slane %v1607, %v256
    %v1612 = vperm.slane %v1610, %v256
    %v1613 = vsel %vm259, %v1612, %v1611
    %v1615 = vsel %vm262, %v1613, 0.0
    %1616 = vadd.xlane.f32.xlu0 %v1615
    %v1617 = vpop.xlane.xlu0 %1616
    %v1619 = vperm.slane %v1617, 0
    %v1620 = vperm.slane %v1617, 1
    %v1623 = vrcp.pop %v1619
    %v1624 = vmul.f32 %v1619, %v1623
    %v1625 = vsub.f32 1.0, %v1624
    %v1626 = vmul.f32 %v1623, %v1625
    %v1627 = vadd.f32 %v1623, %v1626
    %vm1628 = vweird.f32 %v1619
    %vm1629 = vweird.f32 %v1623
    %vm1630 = vmor %vm1628, %vm1629
    %v1631 = vsel %vm1630, %v1623, %v1627
    %v1632 = vand.u32 2147483647, %v1619
    %vm1633 = vcmp.eq.f32.partialorder %v1632, 8.507059e+37
    %v1634 = vand.u32 %v1619, 2147483648
    %v1635 = vor.u32 1.1754944e-38, %v1634
    %v1636 = vsel %vm1633, %v1635, %v1631
    %v1637 = vmul.f32 %v1600, %v1636
    %v1638 = vrcp.pop %v1620
    %v1639 = vmul.f32 %v1620, %v1638
    %v1640 = vsub.f32 1.0, %v1639
    %v1641 = vmul.f32 %v1638, %v1640
    %v1642 = vadd.f32 %v1638, %v1641
    %vm1643 = vweird.f32 %v1620
    %vm1644 = vweird.f32 %v1638
    %vm1645 = vmor %vm1643, %vm1644
    %v1646 = vsel %vm1645, %v1638, %v1642
    %v1647 = vand.u32 2147483647, %v1620
    %vm1648 = vcmp.eq.f32.partialorder %v1647, 8.507059e+37
    %v1649 = vand.u32 %v1620, 2147483648
    %v1650 = vor.u32 1.1754944e-38, %v1649
    %v1651 = vsel %vm1648, %v1650, %v1646
    %v1652 = vmul.f32 %v1602, %v1651
    %1654 = vset.pattern.permute.xlu0 0
    %1655 = vperm.xlu0 %1654, %v1637
    %v1656 = vpop.permute.xlu0 %1655
    %1659 = vset.pattern.permute.xlu0 0
    %1660 = vperm.xlu0 %1659, %v1652
    %v1661 = vpop.permute.xlu0 %1660
    %v1663 = vmul.f32 %v1656, %v56
    %v1664 = vmul.f32 %v1661, %v57
    %v1665 = vsel %vm72, %v1663, 0.0
    %v1666 = vrot.slane %v1665, 4
    %v1667 = vadd.f32 %v1665, %v1666
    %v1668 = vrot.slane %v1667, 2
    %v1669 = vadd.f32 %v1667, %v1668
    %v1670 = vrot.slane %v1669, 1
    %v1671 = vadd.f32 %v1669, %v1670
    %v1672 = vsel %vm72, %v1664, 0.0
    %v1673 = vrot.slane %v1672, 4
    %v1674 = vadd.f32 %v1672, %v1673
    %v1675 = vrot.slane %v1674, 2
    %v1676 = vadd.f32 %v1674, %v1675
    %v1677 = vrot.slane %v1676, 1
    %v1678 = vadd.f32 %v1676, %v1677
    %v1681 = vsel %vm259, %v1678, %v1671
    %v1683 = vsel %vm357, %v1681, 0.0
    %1684 = vadd.xlane.f32.xlu0 %v1683
    %v1685 = vpop.xlane.xlu0 %1684
    %v1686 = vmul.f32 %v1685, %v367
    %v1688 = vrot.slane %v1686, 1
    %v1691 = vsub.f32 %v1671, %v1686
    %v1692 = vsub.f32 %v1678, %v1688
    %v1693 = vmul.f32 %v1691, %v1691
    %v1694 = vmul.f32 %v1692, %v1692
    %v1697 = vrot.slane %v1694, 7
    %v1698 = vsel %vm259, %v1697, %v1693
    %v1700 = vsel %vm357, %v1698, 0.0
    %1701 = vadd.xlane.f32.xlu0 %v1700
    %v1702 = vpop.xlane.xlu0 %1701
    %v1703 = vmul.f32 %v1702, %v367
    %v1704 = vadd.f32 %v1703, 1e-05
    %v1705 = vrsqrt.pop %v1704
    %v1706 = vmul.f32 %v1705, %v1704
    %v1707 = vmul.f32 %v1706, %v1705
    %v1708 = vmul.f32 0.5, %v1707
    %v1709 = vsub.f32 1.5, %v1708
    %v1710 = vmul.f32 %v1705, %v1709
    %vm1711 = vweird.f32 %v1704
    %vm1712 = vweird.f32 %v1705
    %vm1713 = vmor %vm1711, %vm1712
    %v1714 = vsel %vm1713, %v1705, %v1710
    %v1716 = vrot.slane %v1714, 1
    %v1719 = vmul.f32 %v1691, %v1714
    %v1720 = vmul.f32 %v1692, %v1716
    %v1721 = vmul.f32 %v1719, %v403
    %v1722 = vmul.f32 %v1720, %v403
    %v1723 = vadd.f32 %v1721, %v406
    %v1724 = vadd.f32 %v1722, %v406
    %v1727 = vrot.slane %v1724, 7
    %v1728 = vsel %vm259, %v1727, %v1723
    %1731 = vst [vmem:[#allocation1] ss:$4 sm:$0xff] %v1473
    %v1732 = vld.sshfl [vmem:[#allocation1] sm:$0xff pattern:$0x73625140]
    %1733 = vrot.lane.b32.xlu0 %v1732, 64
    %v1734 = vpop.permute.xlu0 %1733
    %v1736 = vsel %vm72, %v1728, %v1734
    %v1737 = vpack.c.bf16 %v1736, %v1736
    %v1739 = vsel %vm444, %v1737, 0
    %1741 = vmatpush.bf16.msra.mxu0 0
    %1742 = vmatpush.bf16.msra.mxu0 0
    %1743 = vmatpush.bf16.msra.mxu0 0
    %1744 = vmatpush.bf16.msra.mxu0 0
    %1745 = vmatpush.bf16.msra.mxu0 %v439
    %1746 = vmatpush.bf16.msra.mxu0 %v438
    %1747 = vmatpush.bf16.msra.mxu0 %v437
    %1748 = vmatpush.bf16.msra.mxu0 %v436
    %1749 = vmatmul.bf16.gmra.mxu0 %v1739
    %v1750 = vpop.f32.mrf.mxu0
    %v1751 = vadd.f32 0.0, %v1750
    %v1752 = vpop.f32.mrf.mxu0
    %1753 = vdwg.mxu0
    %v1754 = vadd.f32 %v162, %v1751
    %v1755 = vxor.u32 %v1754, 2147483648
    %v1756 = vmul.f32 %v1755, 1.442695
    %v1757 = vpow.pop %v1756
    %v1758 = vadd.f32 %v1757, 1.0
    %v1759 = vrcp.pop %v1758
    %v1760 = vmul.f32 %v1758, %v1759
    %v1761 = vsub.f32 1.0, %v1760
    %v1762 = vmul.f32 %v1759, %v1761
    %v1763 = vadd.f32 %v1759, %v1762
    %vm1764 = vweird.f32 %v1758
    %vm1765 = vweird.f32 %v1759
    %vm1766 = vmor %vm1764, %vm1765
    %v1767 = vsel %vm1766, %v1759, %v1763
    %v1768 = vand.u32 2147483647, %v1758
    %vm1769 = vcmp.eq.f32.partialorder %v1768, 8.507059e+37
    %v1770 = vand.u32 %v1758, 2147483648
    %v1771 = vor.u32 1.1754944e-38, %v1770
    %v1772 = vsel %vm1769, %v1771, %v1767
    %v1773 = vmul.f32 1.0, %v1772
    %v1774 = vtanh.pop %v1754
    %v1775 = vmul.f32 %v1773, %v1467
    %1777 = vrot.lane.b32.xlu0 %v1774, 64
    %v1778 = vpop.permute.xlu0 %1777
    %v1780 = vmul.f32 %v1773, %v1778
    %1782 = vrot.lane.b32.xlu0 %v1780, 32
    %v1783 = vpop.permute.xlu0 %1782
    %v1785 = vadd.f32 %v1775, %v1783
    %v1786 = vtanh.pop %v1785
    %1788 = vrot.lane.b32.xlu0 %v1786, 64
    %v1789 = vpop.permute.xlu0 %1788
    %v1791 = vmul.f32 %v1773, %v1789
    %v1792 = vpack.c.bf16 %v1791, %v1791
    %1794 = vrot.lane.b32.xlu0 %v1792, 32
    %v1795 = vpop.permute.xlu0 %1794
    %v1797 = vsel %vm72, %v1795, 0
    %1799 = vmatpush.bf16.msra.mxu0 0
    %1800 = vmatpush.bf16.msra.mxu0 0
    %1801 = vmatpush.bf16.msra.mxu0 0
    %1802 = vmatpush.bf16.msra.mxu0 0
    %1803 = vmatpush.bf16.msra.mxu0 0
    %1804 = vmatpush.bf16.msra.mxu0 0
    %1805 = vmatpush.bf16.msra.mxu0 %v516
    %1806 = vmatpush.bf16.msra.mxu0 %v515
    %1807 = vmatmul.bf16.gmra.mxu0 %v1797
    %v1808 = vpop.f32.mrf.mxu0
    %v1809 = vadd.f32 %v1549, %v1808
    %v1810 = vpop.f32.mrf.mxu0
    %1811 = vdwg.mxu0
    %v1812 = vadd.f32 %v1809, %v535
    %v1813 = vxor.u32 %v1812, 2147483648
    %v1814 = vmul.f32 %v1813, 1.442695
    %v1815 = vpow.pop %v1814
    %v1816 = vadd.f32 %v1815, 1.0
    %v1817 = vrcp.pop %v1816
    %v1818 = vmul.f32 %v1816, %v1817
    %v1819 = vsub.f32 1.0, %v1818
    %v1820 = vmul.f32 %v1817, %v1819
    %v1821 = vadd.f32 %v1817, %v1820
    %vm1822 = vweird.f32 %v1816
    %vm1823 = vweird.f32 %v1817
    %vm1824 = vmor %vm1822, %vm1823
    %v1825 = vsel %vm1824, %v1817, %v1821
    %v1826 = vand.u32 2147483647, %v1816
    %vm1827 = vcmp.eq.f32.partialorder %v1826, 8.507059e+37
    %v1828 = vand.u32 %v1816, 2147483648
    %v1829 = vor.u32 1.1754944e-38, %v1828
    %v1830 = vsel %vm1827, %v1829, %v1825
    %v1831 = vmul.f32 1.0, %v1830
    %v1832 = vtanh.pop %v1812
    %v1833 = vmul.f32 %v1831, %v1525
    %1835 = vrot.lane.b32.xlu0 %v1832, 64
    %v1836 = vpop.permute.xlu0 %1835
    %v1838 = vmul.f32 %v1831, %v1836
    %1840 = vrot.lane.b32.xlu0 %v1838, 32
    %v1841 = vpop.permute.xlu0 %1840
    %v1843 = vadd.f32 %v1833, %v1841
    %v1844 = vtanh.pop %v1843
    %1846 = vrot.lane.b32.xlu0 %v1844, 64
    %v1847 = vpop.permute.xlu0 %1846
    %v1849 = vmul.f32 %v1831, %v1847
    %v1850 = vpack.c.bf16 %v1849, %v1849
    %1852 = vrot.lane.b32.xlu0 %v1850, 32
    %v1853 = vpop.permute.xlu0 %1852
    %v1855 = vsel %vm72, %v1853, 0
    %1857 = vmatpush.bf16.msra.mxu0 0
    %1858 = vmatpush.bf16.msra.mxu0 0
    %1859 = vmatpush.bf16.msra.mxu0 0
    %1860 = vmatpush.bf16.msra.mxu0 0
    %1861 = vmatpush.bf16.msra.mxu0 0
    %1862 = vmatpush.bf16.msra.mxu0 0
    %1863 = vmatpush.bf16.msra.mxu0 %v199
    %1864 = vmatpush.bf16.msra.mxu0 %v197
    %1865 = vmatmul.bf16.gmra.mxu0 %v1855
    %v1866 = vpop.f32.mrf.mxu0
    %v1867 = vadd.f32 0.0, %v1866
    %v1868 = vpop.f32.mrf.mxu0
    %1869 = vdwg.mxu0
    %1870 = vmatpush.bf16.msra.mxu0 0
    %1871 = vmatpush.bf16.msra.mxu0 0
    %1872 = vmatpush.bf16.msra.mxu0 0
    %1873 = vmatpush.bf16.msra.mxu0 0
    %1874 = vmatpush.bf16.msra.mxu0 0
    %1875 = vmatpush.bf16.msra.mxu0 0
    %1876 = vmatpush.bf16.msra.mxu0 %v200
    %1877 = vmatpush.bf16.msra.mxu0 %v198
    %1878 = vmatmul.bf16.gmra.mxu0 %v1855
    %v1879 = vpop.f32.mrf.mxu0
    %v1880 = vadd.f32 0.0, %v1879
    %v1881 = vpop.f32.mrf.mxu0
    %1882 = vdwg.mxu0
    %v1884 = vrot.slane %v1880, 1
    %v1885 = vperm.slane %v1880, 0
    %v1886 = vperm.slane %v1884, 0
    %v1889 = vadd.f32 %v1885, %v86
    %v1890 = vadd.f32 %v1886, %v88
    %v1891 = vtanh.pop %v1889
    %v1892 = vtanh.pop %v1890
    %v1893 = vmul.f32 %v1891, %v244
    %v1894 = vmul.f32 %v1892, %v244
    %v1895 = vsel %vm72, %v1893, 0.0
    %1896 = vadd.xlane.f32.xlu0 %v1895
    %v1897 = vpop.xlane.xlu0 %1896
    %v1898 = vsel %vm72, %v1894, 0.0
    %1899 = vadd.xlane.f32.xlu0 %v1898
    %v1900 = vpop.xlane.xlu0 %1899
    %v1903 = vperm.slane %v1897, %v256
    %v1904 = vperm.slane %v1900, %v256
    %v1905 = vsel %vm259, %v1904, %v1903
    %v1907 = vsel %vm262, %v1905, -inf
    %1908 = vmax.xlane.f32.xlu0 %v1907
    %v1909 = vpop.xlane.xlu0 %1908
    %v1911 = vperm.slane %v1909, 0
    %v1912 = vperm.slane %v1909, 1
    %v1915 = vsub.f32 %v1897, %v1911
    %v1916 = vsub.f32 %v1900, %v1912
    %v1917 = vmul.f32 %v1915, 1.442695
    %v1918 = vpow.pop %v1917
    %v1919 = vmul.f32 %v1916, 1.442695
    %v1920 = vpow.pop %v1919
    %1923 = vset.pattern.permute.xlu0 0
    %1924 = vperm.xlu0 %1923, %v1918
    %v1925 = vpop.permute.xlu0 %1924
    %1926 = vset.pattern.permute.xlu0 0
    %1927 = vperm.xlu0 %1926, %v1920
    %v1928 = vpop.permute.xlu0 %1927
    %v1929 = vperm.slane %v1925, %v256
    %v1930 = vperm.slane %v1928, %v256
    %v1931 = vsel %vm259, %v1930, %v1929
    %v1933 = vsel %vm262, %v1931, 0.0
    %1934 = vadd.xlane.f32.xlu0 %v1933
    %v1935 = vpop.xlane.xlu0 %1934
    %v1937 = vperm.slane %v1935, 0
    %v1938 = vperm.slane %v1935, 1
    %v1941 = vrcp.pop %v1937
    %v1942 = vmul.f32 %v1937, %v1941
    %v1943 = vsub.f32 1.0, %v1942
    %v1944 = vmul.f32 %v1941, %v1943
    %v1945 = vadd.f32 %v1941, %v1944
    %vm1946 = vweird.f32 %v1937
    %vm1947 = vweird.f32 %v1941
    %vm1948 = vmor %vm1946, %vm1947
    %v1949 = vsel %vm1948, %v1941, %v1945
    %v1950 = vand.u32 2147483647, %v1937
    %vm1951 = vcmp.eq.f32.partialorder %v1950, 8.507059e+37
    %v1952 = vand.u32 %v1937, 2147483648
    %v1953 = vor.u32 1.1754944e-38, %v1952
    %v1954 = vsel %vm1951, %v1953, %v1949
    %v1955 = vmul.f32 %v1918, %v1954
    %v1956 = vrcp.pop %v1938
    %v1957 = vmul.f32 %v1938, %v1956
    %v1958 = vsub.f32 1.0, %v1957
    %v1959 = vmul.f32 %v1956, %v1958
    %v1960 = vadd.f32 %v1956, %v1959
    %vm1961 = vweird.f32 %v1938
    %vm1962 = vweird.f32 %v1956
    %vm1963 = vmor %vm1961, %vm1962
    %v1964 = vsel %vm1963, %v1956, %v1960
    %v1965 = vand.u32 2147483647, %v1938
    %vm1966 = vcmp.eq.f32.partialorder %v1965, 8.507059e+37
    %v1967 = vand.u32 %v1938, 2147483648
    %v1968 = vor.u32 1.1754944e-38, %v1967
    %v1969 = vsel %vm1966, %v1968, %v1964
    %v1970 = vmul.f32 %v1920, %v1969
    %1972 = vset.pattern.permute.xlu0 0
    %1973 = vperm.xlu0 %1972, %v1955
    %v1974 = vpop.permute.xlu0 %1973
    %1977 = vset.pattern.permute.xlu0 0
    %1978 = vperm.xlu0 %1977, %v1970
    %v1979 = vpop.permute.xlu0 %1978
    %v1981 = vmul.f32 %v1974, %v56
    %v1982 = vmul.f32 %v1979, %v57
    %v1983 = vsel %vm72, %v1981, 0.0
    %v1984 = vrot.slane %v1983, 4
    %v1985 = vadd.f32 %v1983, %v1984
    %v1986 = vrot.slane %v1985, 2
    %v1987 = vadd.f32 %v1985, %v1986
    %v1988 = vrot.slane %v1987, 1
    %v1989 = vadd.f32 %v1987, %v1988
    %v1990 = vsel %vm72, %v1982, 0.0
    %v1991 = vrot.slane %v1990, 4
    %v1992 = vadd.f32 %v1990, %v1991
    %v1993 = vrot.slane %v1992, 2
    %v1994 = vadd.f32 %v1992, %v1993
    %v1995 = vrot.slane %v1994, 1
    %v1996 = vadd.f32 %v1994, %v1995
    %v1999 = vsel %vm259, %v1996, %v1989
    %v2001 = vsel %vm357, %v1999, 0.0
    %2002 = vadd.xlane.f32.xlu0 %v2001
    %v2003 = vpop.xlane.xlu0 %2002
    %v2004 = vmul.f32 %v2003, %v367
    %v2006 = vrot.slane %v2004, 1
    %v2009 = vsub.f32 %v1989, %v2004
    %v2010 = vsub.f32 %v1996, %v2006
    %v2011 = vmul.f32 %v2009, %v2009
    %v2012 = vmul.f32 %v2010, %v2010
    %v2015 = vrot.slane %v2012, 7
    %v2016 = vsel %vm259, %v2015, %v2011
    %v2018 = vsel %vm357, %v2016, 0.0
    %2019 = vadd.xlane.f32.xlu0 %v2018
    %v2020 = vpop.xlane.xlu0 %2019
    %v2021 = vmul.f32 %v2020, %v367
    %v2022 = vadd.f32 %v2021, 1e-05
    %v2023 = vrsqrt.pop %v2022
    %v2024 = vmul.f32 %v2023, %v2022
    %v2025 = vmul.f32 %v2024, %v2023
    %v2026 = vmul.f32 0.5, %v2025
    %v2027 = vsub.f32 1.5, %v2026
    %v2028 = vmul.f32 %v2023, %v2027
    %vm2029 = vweird.f32 %v2022
    %vm2030 = vweird.f32 %v2023
    %vm2031 = vmor %vm2029, %vm2030
    %v2032 = vsel %vm2031, %v2023, %v2028
    %v2034 = vrot.slane %v2032, 1
    %v2037 = vmul.f32 %v2009, %v2032
    %v2038 = vmul.f32 %v2010, %v2034
    %v2039 = vmul.f32 %v2037, %v403
    %v2040 = vmul.f32 %v2038, %v403
    %v2041 = vadd.f32 %v2039, %v406
    %v2042 = vadd.f32 %v2040, %v406
    %v2045 = vrot.slane %v2042, 7
    %v2046 = vsel %vm259, %v2045, %v2041
    %2049 = vst [vmem:[#allocation1] ss:$4 sm:$0xff] %v1791
    %v2050 = vld.sshfl [vmem:[#allocation1] sm:$0xff pattern:$0x73625140]
    %2051 = vrot.lane.b32.xlu0 %v2050, 64
    %v2052 = vpop.permute.xlu0 %2051
    %v2054 = vsel %vm72, %v2046, %v2052
    %v2055 = vpack.c.bf16 %v2054, %v2054
    %v2057 = vsel %vm444, %v2055, 0
    %2059 = vmatpush.bf16.msra.mxu0 0
    %2060 = vmatpush.bf16.msra.mxu0 0
    %2061 = vmatpush.bf16.msra.mxu0 0
    %2062 = vmatpush.bf16.msra.mxu0 0
    %2063 = vmatpush.bf16.msra.mxu0 %v439
    %2064 = vmatpush.bf16.msra.mxu0 %v438
    %2065 = vmatpush.bf16.msra.mxu0 %v437
    %2066 = vmatpush.bf16.msra.mxu0 %v436
    %2067 = vmatmul.bf16.gmra.mxu0 %v2057
    %v2068 = vpop.f32.mrf.mxu0
    %v2069 = vadd.f32 0.0, %v2068
    %v2070 = vpop.f32.mrf.mxu0
    %2071 = vdwg.mxu0
    %v2072 = vadd.f32 %v169, %v2069
    %v2073 = vxor.u32 %v2072, 2147483648
    %v2074 = vmul.f32 %v2073, 1.442695
    %v2075 = vpow.pop %v2074
    %v2076 = vadd.f32 %v2075, 1.0
    %v2077 = vrcp.pop %v2076
    %v2078 = vmul.f32 %v2076, %v2077
    %v2079 = vsub.f32 1.0, %v2078
    %v2080 = vmul.f32 %v2077, %v2079
    %v2081 = vadd.f32 %v2077, %v2080
    %vm2082 = vweird.f32 %v2076
    %vm2083 = vweird.f32 %v2077
    %vm2084 = vmor %vm2082, %vm2083
    %v2085 = vsel %vm2084, %v2077, %v2081
    %v2086 = vand.u32 2147483647, %v2076
    %vm2087 = vcmp.eq.f32.partialorder %v2086, 8.507059e+37
    %v2088 = vand.u32 %v2076, 2147483648
    %v2089 = vor.u32 1.1754944e-38, %v2088
    %v2090 = vsel %vm2087, %v2089, %v2085
    %v2091 = vmul.f32 1.0, %v2090
    %v2092 = vtanh.pop %v2072
    %v2093 = vmul.f32 %v2091, %v1785
    %2095 = vrot.lane.b32.xlu0 %v2092, 64
    %v2096 = vpop.permute.xlu0 %2095
    %v2098 = vmul.f32 %v2091, %v2096
    %2100 = vrot.lane.b32.xlu0 %v2098, 32
    %v2101 = vpop.permute.xlu0 %2100
    %v2103 = vadd.f32 %v2093, %v2101
    %v2104 = vtanh.pop %v2103
    %2106 = vrot.lane.b32.xlu0 %v2104, 64
    %v2107 = vpop.permute.xlu0 %2106
    %v2109 = vmul.f32 %v2091, %v2107
    %v2110 = vpack.c.bf16 %v2109, %v2109
    %2112 = vrot.lane.b32.xlu0 %v2110, 32
    %v2113 = vpop.permute.xlu0 %2112
    %v2115 = vsel %vm72, %v2113, 0
    %2117 = vmatpush.bf16.msra.mxu0 0
    %2118 = vmatpush.bf16.msra.mxu0 0
    %2119 = vmatpush.bf16.msra.mxu0 0
    %2120 = vmatpush.bf16.msra.mxu0 0
    %2121 = vmatpush.bf16.msra.mxu0 0
    %2122 = vmatpush.bf16.msra.mxu0 0
    %2123 = vmatpush.bf16.msra.mxu0 %v516
    %2124 = vmatpush.bf16.msra.mxu0 %v515
    %2125 = vmatmul.bf16.gmra.mxu0 %v2115
    %v2126 = vpop.f32.mrf.mxu0
    %v2127 = vadd.f32 %v1867, %v2126
    %v2128 = vpop.f32.mrf.mxu0
    %2129 = vdwg.mxu0
    %v2130 = vadd.f32 %v2127, %v535
    %v2131 = vxor.u32 %v2130, 2147483648
    %v2132 = vmul.f32 %v2131, 1.442695
    %v2133 = vpow.pop %v2132
    %v2134 = vadd.f32 %v2133, 1.0
    %v2135 = vrcp.pop %v2134
    %v2136 = vmul.f32 %v2134, %v2135
    %v2137 = vsub.f32 1.0, %v2136
    %v2138 = vmul.f32 %v2135, %v2137
    %v2139 = vadd.f32 %v2135, %v2138
    %vm2140 = vweird.f32 %v2134
    %vm2141 = vweird.f32 %v2135
    %vm2142 = vmor %vm2140, %vm2141
    %v2143 = vsel %vm2142, %v2135, %v2139
    %v2144 = vand.u32 2147483647, %v2134
    %vm2145 = vcmp.eq.f32.partialorder %v2144, 8.507059e+37
    %v2146 = vand.u32 %v2134, 2147483648
    %v2147 = vor.u32 1.1754944e-38, %v2146
    %v2148 = vsel %vm2145, %v2147, %v2143
    %v2149 = vmul.f32 1.0, %v2148
    %v2150 = vtanh.pop %v2130
    %v2151 = vmul.f32 %v2149, %v1843
    %2153 = vrot.lane.b32.xlu0 %v2150, 64
    %v2154 = vpop.permute.xlu0 %2153
    %v2156 = vmul.f32 %v2149, %v2154
    %2158 = vrot.lane.b32.xlu0 %v2156, 32
    %v2159 = vpop.permute.xlu0 %2158
    %v2161 = vadd.f32 %v2151, %v2159
    %v2162 = vtanh.pop %v2161
    %2164 = vrot.lane.b32.xlu0 %v2162, 64
    %v2165 = vpop.permute.xlu0 %2164
    %v2167 = vmul.f32 %v2149, %v2165
    %v2168 = vpack.c.bf16 %v2167, %v2167
    %2170 = vrot.lane.b32.xlu0 %v2168, 32
    %v2171 = vpop.permute.xlu0 %2170
    %v2173 = vsel %vm72, %v2171, 0
    %2175 = vmatpush.bf16.msra.mxu0 0
    %2176 = vmatpush.bf16.msra.mxu0 0
    %2177 = vmatpush.bf16.msra.mxu0 0
    %2178 = vmatpush.bf16.msra.mxu0 0
    %2179 = vmatpush.bf16.msra.mxu0 0
    %2180 = vmatpush.bf16.msra.mxu0 0
    %2181 = vmatpush.bf16.msra.mxu0 %v199
    %2182 = vmatpush.bf16.msra.mxu0 %v197
    %2183 = vmatmul.bf16.gmra.mxu0 %v2173
    %v2184 = vpop.f32.mrf.mxu0
    %v2185 = vadd.f32 0.0, %v2184
    %v2186 = vpop.f32.mrf.mxu0
    %2187 = vdwg.mxu0
    %2188 = vmatpush.bf16.msra.mxu0 0
    %2189 = vmatpush.bf16.msra.mxu0 0
    %2190 = vmatpush.bf16.msra.mxu0 0
    %2191 = vmatpush.bf16.msra.mxu0 0
    %2192 = vmatpush.bf16.msra.mxu0 0
    %2193 = vmatpush.bf16.msra.mxu0 0
    %2194 = vmatpush.bf16.msra.mxu0 %v200
    %2195 = vmatpush.bf16.msra.mxu0 %v198
    %2196 = vmatmul.bf16.gmra.mxu0 %v2173
    %v2197 = vpop.f32.mrf.mxu0
    %v2198 = vadd.f32 0.0, %v2197
    %v2199 = vpop.f32.mrf.mxu0
    %2200 = vdwg.mxu0
    %v2202 = vrot.slane %v2198, 1
    %v2203 = vperm.slane %v2198, 0
    %v2204 = vperm.slane %v2202, 0
    %v2207 = vadd.f32 %v2203, %v86
    %v2208 = vadd.f32 %v2204, %v88
    %v2209 = vtanh.pop %v2207
    %v2210 = vtanh.pop %v2208
    %v2211 = vmul.f32 %v2209, %v244
    %v2212 = vmul.f32 %v2210, %v244
    %v2213 = vsel %vm72, %v2211, 0.0
    %2214 = vadd.xlane.f32.xlu0 %v2213
    %v2215 = vpop.xlane.xlu0 %2214
    %v2216 = vsel %vm72, %v2212, 0.0
    %2217 = vadd.xlane.f32.xlu0 %v2216
    %v2218 = vpop.xlane.xlu0 %2217
    %v2221 = vperm.slane %v2215, %v256
    %v2222 = vperm.slane %v2218, %v256
    %v2223 = vsel %vm259, %v2222, %v2221
    %v2225 = vsel %vm262, %v2223, -inf
    %2226 = vmax.xlane.f32.xlu0 %v2225
    %v2227 = vpop.xlane.xlu0 %2226
    %v2229 = vperm.slane %v2227, 0
    %v2230 = vperm.slane %v2227, 1
    %v2233 = vsub.f32 %v2215, %v2229
    %v2234 = vsub.f32 %v2218, %v2230
    %v2235 = vmul.f32 %v2233, 1.442695
    %v2236 = vpow.pop %v2235
    %v2237 = vmul.f32 %v2234, 1.442695
    %v2238 = vpow.pop %v2237
    %2241 = vset.pattern.permute.xlu0 0
    %2242 = vperm.xlu0 %2241, %v2236
    %v2243 = vpop.permute.xlu0 %2242
    %2244 = vset.pattern.permute.xlu0 0
    %2245 = vperm.xlu0 %2244, %v2238
    %v2246 = vpop.permute.xlu0 %2245
    %v2247 = vperm.slane %v2243, %v256
    %v2248 = vperm.slane %v2246, %v256
    %v2249 = vsel %vm259, %v2248, %v2247
    %v2251 = vsel %vm262, %v2249, 0.0
    %2252 = vadd.xlane.f32.xlu0 %v2251
    %v2253 = vpop.xlane.xlu0 %2252
    %v2255 = vperm.slane %v2253, 0
    %v2256 = vperm.slane %v2253, 1
    %v2259 = vrcp.pop %v2255
    %v2260 = vmul.f32 %v2255, %v2259
    %v2261 = vsub.f32 1.0, %v2260
    %v2262 = vmul.f32 %v2259, %v2261
    %v2263 = vadd.f32 %v2259, %v2262
    %vm2264 = vweird.f32 %v2255
    %vm2265 = vweird.f32 %v2259
    %vm2266 = vmor %vm2264, %vm2265
    %v2267 = vsel %vm2266, %v2259, %v2263
    %v2268 = vand.u32 2147483647, %v2255
    %vm2269 = vcmp.eq.f32.partialorder %v2268, 8.507059e+37
    %v2270 = vand.u32 %v2255, 2147483648
    %v2271 = vor.u32 1.1754944e-38, %v2270
    %v2272 = vsel %vm2269, %v2271, %v2267
    %v2273 = vmul.f32 %v2236, %v2272
    %v2274 = vrcp.pop %v2256
    %v2275 = vmul.f32 %v2256, %v2274
    %v2276 = vsub.f32 1.0, %v2275
    %v2277 = vmul.f32 %v2274, %v2276
    %v2278 = vadd.f32 %v2274, %v2277
    %vm2279 = vweird.f32 %v2256
    %vm2280 = vweird.f32 %v2274
    %vm2281 = vmor %vm2279, %vm2280
    %v2282 = vsel %vm2281, %v2274, %v2278
    %v2283 = vand.u32 2147483647, %v2256
    %vm2284 = vcmp.eq.f32.partialorder %v2283, 8.507059e+37
    %v2285 = vand.u32 %v2256, 2147483648
    %v2286 = vor.u32 1.1754944e-38, %v2285
    %v2287 = vsel %vm2284, %v2286, %v2282
    %v2288 = vmul.f32 %v2238, %v2287
    %2290 = vset.pattern.permute.xlu0 0
    %2291 = vperm.xlu0 %2290, %v2273
    %v2292 = vpop.permute.xlu0 %2291
    %2295 = vset.pattern.permute.xlu0 0
    %2296 = vperm.xlu0 %2295, %v2288
    %v2297 = vpop.permute.xlu0 %2296
    %v2299 = vmul.f32 %v2292, %v56
    %v2300 = vmul.f32 %v2297, %v57
    %v2301 = vsel %vm72, %v2299, 0.0
    %v2302 = vrot.slane %v2301, 4
    %v2303 = vadd.f32 %v2301, %v2302
    %v2304 = vrot.slane %v2303, 2
    %v2305 = vadd.f32 %v2303, %v2304
    %v2306 = vrot.slane %v2305, 1
    %v2307 = vadd.f32 %v2305, %v2306
    %v2308 = vsel %vm72, %v2300, 0.0
    %v2309 = vrot.slane %v2308, 4
    %v2310 = vadd.f32 %v2308, %v2309
    %v2311 = vrot.slane %v2310, 2
    %v2312 = vadd.f32 %v2310, %v2311
    %v2313 = vrot.slane %v2312, 1
    %v2314 = vadd.f32 %v2312, %v2313
    %v2317 = vsel %vm259, %v2314, %v2307
    %v2319 = vsel %vm357, %v2317, 0.0
    %2320 = vadd.xlane.f32.xlu0 %v2319
    %v2321 = vpop.xlane.xlu0 %2320
    %v2322 = vmul.f32 %v2321, %v367
    %v2324 = vrot.slane %v2322, 1
    %v2327 = vsub.f32 %v2307, %v2322
    %v2328 = vsub.f32 %v2314, %v2324
    %v2329 = vmul.f32 %v2327, %v2327
    %v2330 = vmul.f32 %v2328, %v2328
    %v2333 = vrot.slane %v2330, 7
    %v2334 = vsel %vm259, %v2333, %v2329
    %v2336 = vsel %vm357, %v2334, 0.0
    %2337 = vadd.xlane.f32.xlu0 %v2336
    %v2338 = vpop.xlane.xlu0 %2337
    %v2339 = vmul.f32 %v2338, %v367
    %v2340 = vadd.f32 %v2339, 1e-05
    %v2341 = vrsqrt.pop %v2340
    %v2342 = vmul.f32 %v2341, %v2340
    %v2343 = vmul.f32 %v2342, %v2341
    %v2344 = vmul.f32 0.5, %v2343
    %v2345 = vsub.f32 1.5, %v2344
    %v2346 = vmul.f32 %v2341, %v2345
    %vm2347 = vweird.f32 %v2340
    %vm2348 = vweird.f32 %v2341
    %vm2349 = vmor %vm2347, %vm2348
    %v2350 = vsel %vm2349, %v2341, %v2346
    %v2352 = vrot.slane %v2350, 1
    %v2355 = vmul.f32 %v2327, %v2350
    %v2356 = vmul.f32 %v2328, %v2352
    %v2357 = vmul.f32 %v2355, %v403
    %v2358 = vmul.f32 %v2356, %v403
    %v2359 = vadd.f32 %v2357, %v406
    %v2360 = vadd.f32 %v2358, %v406
    %v2363 = vrot.slane %v2360, 7
    %v2364 = vsel %vm259, %v2363, %v2359
    %2367 = vst [vmem:[#allocation1] ss:$4 sm:$0xff] %v2109
    %v2368 = vld.sshfl [vmem:[#allocation1] sm:$0xff pattern:$0x73625140]
    %2369 = vrot.lane.b32.xlu0 %v2368, 64
    %v2370 = vpop.permute.xlu0 %2369
    %v2372 = vsel %vm72, %v2364, %v2370
    %v2373 = vpack.c.bf16 %v2372, %v2372
    %v2375 = vsel %vm444, %v2373, 0
    %2377 = vmatpush.bf16.msra.mxu0 0
    %2378 = vmatpush.bf16.msra.mxu0 0
    %2379 = vmatpush.bf16.msra.mxu0 0
    %2380 = vmatpush.bf16.msra.mxu0 0
    %2381 = vmatpush.bf16.msra.mxu0 %v439
    %2382 = vmatpush.bf16.msra.mxu0 %v438
    %2383 = vmatpush.bf16.msra.mxu0 %v437
    %2384 = vmatpush.bf16.msra.mxu0 %v436
    %2385 = vmatmul.bf16.gmra.mxu0 %v2375
    %v2386 = vpop.f32.mrf.mxu0
    %v2387 = vadd.f32 0.0, %v2386
    %v2388 = vpop.f32.mrf.mxu0
    %2389 = vdwg.mxu0
    %v2390 = vadd.f32 %v170, %v2387
    %v2391 = vxor.u32 %v2390, 2147483648
    %v2392 = vmul.f32 %v2391, 1.442695
    %v2393 = vpow.pop %v2392
    %v2394 = vadd.f32 %v2393, 1.0
    %v2395 = vrcp.pop %v2394
    %v2396 = vmul.f32 %v2394, %v2395
    %v2397 = vsub.f32 1.0, %v2396
    %v2398 = vmul.f32 %v2395, %v2397
    %v2399 = vadd.f32 %v2395, %v2398
    %vm2400 = vweird.f32 %v2394
    %vm2401 = vweird.f32 %v2395
    %vm2402 = vmor %vm2400, %vm2401
    %v2403 = vsel %vm2402, %v2395, %v2399
    %v2404 = vand.u32 2147483647, %v2394
    %vm2405 = vcmp.eq.f32.partialorder %v2404, 8.507059e+37
    %v2406 = vand.u32 %v2394, 2147483648
    %v2407 = vor.u32 1.1754944e-38, %v2406
    %v2408 = vsel %vm2405, %v2407, %v2403
    %v2409 = vmul.f32 1.0, %v2408
    %v2410 = vtanh.pop %v2390
    %v2411 = vmul.f32 %v2409, %v2103
    %2413 = vrot.lane.b32.xlu0 %v2410, 64
    %v2414 = vpop.permute.xlu0 %2413
    %v2416 = vmul.f32 %v2409, %v2414
    %2418 = vrot.lane.b32.xlu0 %v2416, 32
    %v2419 = vpop.permute.xlu0 %2418
    %v2421 = vadd.f32 %v2411, %v2419
    %v2422 = vtanh.pop %v2421
    %2424 = vrot.lane.b32.xlu0 %v2422, 64
    %v2425 = vpop.permute.xlu0 %2424
    %v2427 = vmul.f32 %v2409, %v2425
    %v2428 = vpack.c.bf16 %v2427, %v2427
    %2430 = vrot.lane.b32.xlu0 %v2428, 32
    %v2431 = vpop.permute.xlu0 %2430
    %v2433 = vsel %vm72, %v2431, 0
    %2435 = vmatpush.bf16.msra.mxu0 0
    %2436 = vmatpush.bf16.msra.mxu0 0
    %2437 = vmatpush.bf16.msra.mxu0 0
    %2438 = vmatpush.bf16.msra.mxu0 0
    %2439 = vmatpush.bf16.msra.mxu0 0
    %2440 = vmatpush.bf16.msra.mxu0 0
    %2441 = vmatpush.bf16.msra.mxu0 %v516
    %2442 = vmatpush.bf16.msra.mxu0 %v515
    %2443 = vmatmul.bf16.gmra.mxu0 %v2433
    %v2444 = vpop.f32.mrf.mxu0
    %v2445 = vadd.f32 %v2185, %v2444
    %v2446 = vpop.f32.mrf.mxu0
    %2447 = vdwg.mxu0
    %v2448 = vadd.f32 %v2445, %v535
    %v2449 = vxor.u32 %v2448, 2147483648
    %v2450 = vmul.f32 %v2449, 1.442695
    %v2451 = vpow.pop %v2450
    %v2452 = vadd.f32 %v2451, 1.0
    %v2453 = vrcp.pop %v2452
    %v2454 = vmul.f32 %v2452, %v2453
    %v2455 = vsub.f32 1.0, %v2454
    %v2456 = vmul.f32 %v2453, %v2455
    %v2457 = vadd.f32 %v2453, %v2456
    %vm2458 = vweird.f32 %v2452
    %vm2459 = vweird.f32 %v2453
    %vm2460 = vmor %vm2458, %vm2459
    %v2461 = vsel %vm2460, %v2453, %v2457
    %v2462 = vand.u32 2147483647, %v2452
    %vm2463 = vcmp.eq.f32.partialorder %v2462, 8.507059e+37
    %v2464 = vand.u32 %v2452, 2147483648
    %v2465 = vor.u32 1.1754944e-38, %v2464
    %v2466 = vsel %vm2463, %v2465, %v2461
    %v2467 = vmul.f32 1.0, %v2466
    %v2468 = vtanh.pop %v2448
    %v2469 = vmul.f32 %v2467, %v2161
    %2471 = vrot.lane.b32.xlu0 %v2468, 64
    %v2472 = vpop.permute.xlu0 %2471
    %v2474 = vmul.f32 %v2467, %v2472
    %2476 = vrot.lane.b32.xlu0 %v2474, 32
    %v2477 = vpop.permute.xlu0 %2476
    %v2479 = vadd.f32 %v2469, %v2477
    %v2480 = vtanh.pop %v2479
    %2482 = vrot.lane.b32.xlu0 %v2480, 64
    %v2483 = vpop.permute.xlu0 %2482
    %v2485 = vmul.f32 %v2467, %v2483
    %v2486 = vpack.c.bf16 %v2485, %v2485
    %2488 = vrot.lane.b32.xlu0 %v2486, 32
    %v2489 = vpop.permute.xlu0 %2488
    %v2491 = vsel %vm72, %v2489, 0
    %2493 = vmatpush.bf16.msra.mxu0 0
    %2494 = vmatpush.bf16.msra.mxu0 0
    %2495 = vmatpush.bf16.msra.mxu0 0
    %2496 = vmatpush.bf16.msra.mxu0 0
    %2497 = vmatpush.bf16.msra.mxu0 0
    %2498 = vmatpush.bf16.msra.mxu0 0
    %2499 = vmatpush.bf16.msra.mxu0 %v199
    %2500 = vmatpush.bf16.msra.mxu0 %v197
    %2501 = vmatmul.bf16.gmra.mxu0 %v2491
    %v2502 = vpop.f32.mrf.mxu0
    %v2503 = vadd.f32 0.0, %v2502
    %v2504 = vpop.f32.mrf.mxu0
    %2505 = vdwg.mxu0
    %2506 = vmatpush.bf16.msra.mxu0 0
    %2507 = vmatpush.bf16.msra.mxu0 0
    %2508 = vmatpush.bf16.msra.mxu0 0
    %2509 = vmatpush.bf16.msra.mxu0 0
    %2510 = vmatpush.bf16.msra.mxu0 0
    %2511 = vmatpush.bf16.msra.mxu0 0
    %2512 = vmatpush.bf16.msra.mxu0 %v200
    %2513 = vmatpush.bf16.msra.mxu0 %v198
    %2514 = vmatmul.bf16.gmra.mxu0 %v2491
    %v2515 = vpop.f32.mrf.mxu0
    %v2516 = vadd.f32 0.0, %v2515
    %v2517 = vpop.f32.mrf.mxu0
    %2518 = vdwg.mxu0
    %v2520 = vrot.slane %v2516, 1
    %v2521 = vperm.slane %v2516, 0
    %v2522 = vperm.slane %v2520, 0
    %v2525 = vadd.f32 %v2521, %v86
    %v2526 = vadd.f32 %v2522, %v88
    %v2527 = vtanh.pop %v2525
    %v2528 = vtanh.pop %v2526
    %v2529 = vmul.f32 %v2527, %v244
    %v2530 = vmul.f32 %v2528, %v244
    %v2531 = vsel %vm72, %v2529, 0.0
    %2532 = vadd.xlane.f32.xlu0 %v2531
    %v2533 = vpop.xlane.xlu0 %2532
    %v2534 = vsel %vm72, %v2530, 0.0
    %2535 = vadd.xlane.f32.xlu0 %v2534
    %v2536 = vpop.xlane.xlu0 %2535
    %v2539 = vperm.slane %v2533, %v256
    %v2540 = vperm.slane %v2536, %v256
    %v2541 = vsel %vm259, %v2540, %v2539
    %v2543 = vsel %vm262, %v2541, -inf
    %2544 = vmax.xlane.f32.xlu0 %v2543
    %v2545 = vpop.xlane.xlu0 %2544
    %v2547 = vperm.slane %v2545, 0
    %v2548 = vperm.slane %v2545, 1
    %v2551 = vsub.f32 %v2533, %v2547
    %v2552 = vsub.f32 %v2536, %v2548
    %v2553 = vmul.f32 %v2551, 1.442695
    %v2554 = vpow.pop %v2553
    %v2555 = vmul.f32 %v2552, 1.442695
    %v2556 = vpow.pop %v2555
    %2559 = vset.pattern.permute.xlu0 0
    %2560 = vperm.xlu0 %2559, %v2554
    %v2561 = vpop.permute.xlu0 %2560
    %2562 = vset.pattern.permute.xlu0 0
    %2563 = vperm.xlu0 %2562, %v2556
    %v2564 = vpop.permute.xlu0 %2563
    %v2565 = vperm.slane %v2561, %v256
    %v2566 = vperm.slane %v2564, %v256
    %v2567 = vsel %vm259, %v2566, %v2565
    %v2569 = vsel %vm262, %v2567, 0.0
    %2570 = vadd.xlane.f32.xlu0 %v2569
    %v2571 = vpop.xlane.xlu0 %2570
    %v2573 = vperm.slane %v2571, 0
    %v2574 = vperm.slane %v2571, 1
    %v2577 = vrcp.pop %v2573
    %v2578 = vmul.f32 %v2573, %v2577
    %v2579 = vsub.f32 1.0, %v2578
    %v2580 = vmul.f32 %v2577, %v2579
    %v2581 = vadd.f32 %v2577, %v2580
    %vm2582 = vweird.f32 %v2573
    %vm2583 = vweird.f32 %v2577
    %vm2584 = vmor %vm2582, %vm2583
    %v2585 = vsel %vm2584, %v2577, %v2581
    %v2586 = vand.u32 2147483647, %v2573
    %vm2587 = vcmp.eq.f32.partialorder %v2586, 8.507059e+37
    %v2588 = vand.u32 %v2573, 2147483648
    %v2589 = vor.u32 1.1754944e-38, %v2588
    %v2590 = vsel %vm2587, %v2589, %v2585
    %v2591 = vmul.f32 %v2554, %v2590
    %v2592 = vrcp.pop %v2574
    %v2593 = vmul.f32 %v2574, %v2592
    %v2594 = vsub.f32 1.0, %v2593
    %v2595 = vmul.f32 %v2592, %v2594
    %v2596 = vadd.f32 %v2592, %v2595
    %vm2597 = vweird.f32 %v2574
    %vm2598 = vweird.f32 %v2592
    %vm2599 = vmor %vm2597, %vm2598
    %v2600 = vsel %vm2599, %v2592, %v2596
    %v2601 = vand.u32 2147483647, %v2574
    %vm2602 = vcmp.eq.f32.partialorder %v2601, 8.507059e+37
    %v2603 = vand.u32 %v2574, 2147483648
    %v2604 = vor.u32 1.1754944e-38, %v2603
    %v2605 = vsel %vm2602, %v2604, %v2600
    %v2606 = vmul.f32 %v2556, %v2605
    %2608 = vset.pattern.permute.xlu0 0
    %2609 = vperm.xlu0 %2608, %v2591
    %v2610 = vpop.permute.xlu0 %2609
    %2613 = vset.pattern.permute.xlu0 0
    %2614 = vperm.xlu0 %2613, %v2606
    %v2615 = vpop.permute.xlu0 %2614
    %v2617 = vmul.f32 %v2610, %v56
    %v2618 = vmul.f32 %v2615, %v57
    %v2619 = vsel %vm72, %v2617, 0.0
    %v2620 = vrot.slane %v2619, 4
    %v2621 = vadd.f32 %v2619, %v2620
    %v2622 = vrot.slane %v2621, 2
    %v2623 = vadd.f32 %v2621, %v2622
    %v2624 = vrot.slane %v2623, 1
    %v2625 = vadd.f32 %v2623, %v2624
    %v2626 = vsel %vm72, %v2618, 0.0
    %v2627 = vrot.slane %v2626, 4
    %v2628 = vadd.f32 %v2626, %v2627
    %v2629 = vrot.slane %v2628, 2
    %v2630 = vadd.f32 %v2628, %v2629
    %v2631 = vrot.slane %v2630, 1
    %v2632 = vadd.f32 %v2630, %v2631
    %v2635 = vsel %vm259, %v2632, %v2625
    %v2637 = vsel %vm357, %v2635, 0.0
    %2638 = vadd.xlane.f32.xlu0 %v2637
    %v2639 = vpop.xlane.xlu0 %2638
    %v2640 = vmul.f32 %v2639, %v367
    %v2642 = vrot.slane %v2640, 1
    %v2645 = vsub.f32 %v2625, %v2640
    %v2646 = vsub.f32 %v2632, %v2642
    %v2647 = vmul.f32 %v2645, %v2645
    %v2648 = vmul.f32 %v2646, %v2646
    %v2651 = vrot.slane %v2648, 7
    %v2652 = vsel %vm259, %v2651, %v2647
    %v2654 = vsel %vm357, %v2652, 0.0
    %2655 = vadd.xlane.f32.xlu0 %v2654
    %v2656 = vpop.xlane.xlu0 %2655
    %v2657 = vmul.f32 %v2656, %v367
    %v2658 = vadd.f32 %v2657, 1e-05
    %v2659 = vrsqrt.pop %v2658
    %v2660 = vmul.f32 %v2659, %v2658
    %v2661 = vmul.f32 %v2660, %v2659
    %v2662 = vmul.f32 0.5, %v2661
    %v2663 = vsub.f32 1.5, %v2662
    %v2664 = vmul.f32 %v2659, %v2663
    %vm2665 = vweird.f32 %v2658
    %vm2666 = vweird.f32 %v2659
    %vm2667 = vmor %vm2665, %vm2666
    %v2668 = vsel %vm2667, %v2659, %v2664
    %v2670 = vrot.slane %v2668, 1
    %v2673 = vmul.f32 %v2645, %v2668
    %v2674 = vmul.f32 %v2646, %v2670
    %v2675 = vmul.f32 %v2673, %v403
    %v2676 = vmul.f32 %v2674, %v403
    %v2677 = vadd.f32 %v2675, %v406
    %v2678 = vadd.f32 %v2676, %v406
    %v2681 = vrot.slane %v2678, 7
    %v2682 = vsel %vm259, %v2681, %v2677
    %2685 = vst [vmem:[#allocation1] ss:$4 sm:$0xff] %v2427
    %v2686 = vld.sshfl [vmem:[#allocation1] sm:$0xff pattern:$0x73625140]
    %2687 = vrot.lane.b32.xlu0 %v2686, 64
    %v2688 = vpop.permute.xlu0 %2687
    %v2690 = vsel %vm72, %v2682, %v2688
    %v2691 = vpack.c.bf16 %v2690, %v2690
    %v2693 = vsel %vm444, %v2691, 0
    %2695 = vmatpush.bf16.msra.mxu0 0
    %2696 = vmatpush.bf16.msra.mxu0 0
    %2697 = vmatpush.bf16.msra.mxu0 0
    %2698 = vmatpush.bf16.msra.mxu0 0
    %2699 = vmatpush.bf16.msra.mxu0 %v439
    %2700 = vmatpush.bf16.msra.mxu0 %v438
    %2701 = vmatpush.bf16.msra.mxu0 %v437
    %2702 = vmatpush.bf16.msra.mxu0 %v436
    %2703 = vmatmul.bf16.gmra.mxu0 %v2693
    %v2704 = vpop.f32.mrf.mxu0
    %v2705 = vadd.f32 0.0, %v2704
    %v2706 = vpop.f32.mrf.mxu0
    %2707 = vdwg.mxu0
    %v2708 = vadd.f32 %v171, %v2705
    %v2709 = vxor.u32 %v2708, 2147483648
    %v2710 = vmul.f32 %v2709, 1.442695
    %v2711 = vpow.pop %v2710
    %v2712 = vadd.f32 %v2711, 1.0
    %v2713 = vrcp.pop %v2712
    %v2714 = vmul.f32 %v2712, %v2713
    %v2715 = vsub.f32 1.0, %v2714
    %v2716 = vmul.f32 %v2713, %v2715
    %v2717 = vadd.f32 %v2713, %v2716
    %vm2718 = vweird.f32 %v2712
    %vm2719 = vweird.f32 %v2713
    %vm2720 = vmor %vm2718, %vm2719
    %v2721 = vsel %vm2720, %v2713, %v2717
    %v2722 = vand.u32 2147483647, %v2712
    %vm2723 = vcmp.eq.f32.partialorder %v2722, 8.507059e+37
    %v2724 = vand.u32 %v2712, 2147483648
    %v2725 = vor.u32 1.1754944e-38, %v2724
    %v2726 = vsel %vm2723, %v2725, %v2721
    %v2727 = vmul.f32 1.0, %v2726
    %v2728 = vtanh.pop %v2708
    %v2729 = vmul.f32 %v2727, %v2421
    %2731 = vrot.lane.b32.xlu0 %v2728, 64
    %v2732 = vpop.permute.xlu0 %2731
    %v2734 = vmul.f32 %v2727, %v2732
    %2736 = vrot.lane.b32.xlu0 %v2734, 32
    %v2737 = vpop.permute.xlu0 %2736
    %v2739 = vadd.f32 %v2729, %v2737
    %v2740 = vtanh.pop %v2739
    %2742 = vrot.lane.b32.xlu0 %v2740, 64
    %v2743 = vpop.permute.xlu0 %2742
    %v2745 = vmul.f32 %v2727, %v2743
    %v2746 = vpack.c.bf16 %v2745, %v2745
    %2748 = vrot.lane.b32.xlu0 %v2746, 32
    %v2749 = vpop.permute.xlu0 %2748
    %v2751 = vsel %vm72, %v2749, 0
    %2753 = vmatpush.bf16.msra.mxu0 0
    %2754 = vmatpush.bf16.msra.mxu0 0
    %2755 = vmatpush.bf16.msra.mxu0 0
    %2756 = vmatpush.bf16.msra.mxu0 0
    %2757 = vmatpush.bf16.msra.mxu0 0
    %2758 = vmatpush.bf16.msra.mxu0 0
    %2759 = vmatpush.bf16.msra.mxu0 %v516
    %2760 = vmatpush.bf16.msra.mxu0 %v515
    %2761 = vmatmul.bf16.gmra.mxu0 %v2751
    %v2762 = vpop.f32.mrf.mxu0
    %v2763 = vadd.f32 %v2503, %v2762
    %v2764 = vpop.f32.mrf.mxu0
    %2765 = vdwg.mxu0
    %v2766 = vadd.f32 %v2763, %v535
    %v2767 = vxor.u32 %v2766, 2147483648
    %v2768 = vmul.f32 %v2767, 1.442695
    %v2769 = vpow.pop %v2768
    %v2770 = vadd.f32 %v2769, 1.0
    %v2771 = vrcp.pop %v2770
    %v2772 = vmul.f32 %v2770, %v2771
    %v2773 = vsub.f32 1.0, %v2772
    %v2774 = vmul.f32 %v2771, %v2773
    %v2775 = vadd.f32 %v2771, %v2774
    %vm2776 = vweird.f32 %v2770
    %vm2777 = vweird.f32 %v2771
    %vm2778 = vmor %vm2776, %vm2777
    %v2779 = vsel %vm2778, %v2771, %v2775
    %v2780 = vand.u32 2147483647, %v2770
    %vm2781 = vcmp.eq.f32.partialorder %v2780, 8.507059e+37
    %v2782 = vand.u32 %v2770, 2147483648
    %v2783 = vor.u32 1.1754944e-38, %v2782
    %v2784 = vsel %vm2781, %v2783, %v2779
    %v2785 = vmul.f32 1.0, %v2784
    %v2786 = vtanh.pop %v2766
    %v2787 = vmul.f32 %v2785, %v2479
    %2789 = vrot.lane.b32.xlu0 %v2786, 64
    %v2790 = vpop.permute.xlu0 %2789
    %v2792 = vmul.f32 %v2785, %v2790
    %2794 = vrot.lane.b32.xlu0 %v2792, 32
    %v2795 = vpop.permute.xlu0 %2794
    %v2797 = vadd.f32 %v2787, %v2795
    %v2798 = vtanh.pop %v2797
    %2800 = vrot.lane.b32.xlu0 %v2798, 64
    %v2801 = vpop.permute.xlu0 %2800
    %v2803 = vmul.f32 %v2785, %v2801
    %2805 = vst [vmem:[#allocation1] ss:$4 sm:$0xff] %v2745
    %v2806 = vld.sshfl [vmem:[#allocation1] sm:$0xff pattern:$0x73625140]
    %2807 = vrot.lane.b32.xlu0 %v2806, 32
    %v2808 = vpop.permute.xlu0 %2807
    %2810 = vst.msk [vmem:[#allocation4] sm:$0x3] %vm357, %v2808
    %2812 = vrot.lane.b32.xlu0 %v2803, 32
    %v2813 = vpop.permute.xlu0 %2812
    %s2815 = scalar_lea.vmem [#allocation4], 2
    %2816 = vst.msk [vmem:[%s2815] sm:$0x3] %vm357, %v2813
    %2818 = vst [vmem:[#allocation1] ss:$4 sm:$0xff] %v2739
    %v2819 = vld.sshfl [vmem:[#allocation1] sm:$0xff pattern:$0x73625140]
    %2820 = vrot.lane.b32.xlu0 %v2819, 96
    %v2821 = vpop.permute.xlu0 %2820
    %2823 = vst.msk [vmem:[#allocation6] sm:$0x3] %vm357, %v2821
    %2825 = vrot.lane.b32.xlu0 %v2797, 96
    %v2826 = vpop.permute.xlu0 %2825
    %s2828 = scalar_lea.vmem [#allocation6], 2
    %2829 = vst.msk [vmem:[%s2828] sm:$0x3] %vm357, %v2826
    %v2830 = vperm.slane %v330, %v256
    %v2831 = vperm.slane %v335, %v256
    %v2832 = vperm.slane %v702, %v256
    %v2833 = vperm.slane %v707, %v256
    %v2834 = vperm.slane %v1020, %v256
    %v2835 = vperm.slane %v1025, %v256
    %v2836 = vperm.slane %v1338, %v256
    %v2837 = vperm.slane %v1343, %v256
    %v2838 = vperm.slane %v1656, %v256
    %v2839 = vperm.slane %v1661, %v256
    %v2840 = vperm.slane %v1974, %v256
    %v2841 = vperm.slane %v1979, %v256
    %v2842 = vperm.slane %v2292, %v256
    %v2843 = vperm.slane %v2297, %v256
    %v2844 = vperm.slane %v2610, %v256
    %v2845 = vperm.slane %v2615, %v256
    %v2846 = vsel %vm259, %v2831, %v2830
    %v2847 = vsel %vm259, %v2833, %v2832
    %v2848 = vsel %vm259, %v2835, %v2834
    %v2849 = vsel %vm259, %v2837, %v2836
    %v2850 = vsel %vm259, %v2839, %v2838
    %v2851 = vsel %vm259, %v2841, %v2840
    %v2852 = vsel %vm259, %v2843, %v2842
    %v2853 = vsel %vm259, %v2845, %v2844
    %2862 = vst.msk [vmem:[#allocation7] sm:$0x3] %vm262, %v2846
    %2863 = vst.msk [vmem:[#allocation7 + $0x2] sm:$0x3] %vm262, %v2847
    %2864 = vst.msk [vmem:[#allocation7 + $0x4] sm:$0x3] %vm262, %v2848
    %2865 = vst.msk [vmem:[#allocation7 + $0x6] sm:$0x3] %vm262, %v2849
    %2866 = vst.msk [vmem:[#allocation7 + $0x8] sm:$0x3] %vm262, %v2850
    %2867 = vst.msk [vmem:[#allocation7 + $0xa] sm:$0x3] %vm262, %v2851
    %2868 = vst.msk [vmem:[#allocation7 + $0xc] sm:$0x3] %vm262, %v2852
    %2869 = vst.msk [vmem:[#allocation7 + $0xe] sm:$0x3] %vm262, %v2853
    %2877 = vst [vmem:[#allocation1] ss:$4 sm:$0xff] %v577
    %s2878 = scalar_lea.vmem [#allocation1], 1
    %2879 = vst [vmem:[%s2878] ss:$4 sm:$0xff] %v895
    %s2880 = scalar_lea.vmem [#allocation1], 2
    %2881 = vst [vmem:[%s2880] ss:$4 sm:$0xff] %v1213
    %s2882 = scalar_lea.vmem [#allocation1], 3
    %2883 = vst [vmem:[%s2882] ss:$4 sm:$0xff] %v1531
    %s2884 = scalar_lea.vmem [#allocation1], 32
    %2885 = vst [vmem:[%s2884] ss:$4 sm:$0xff] %v1849
    %s2886 = scalar_lea.vmem [#allocation1], 33
    %2887 = vst [vmem:[%s2886] ss:$4 sm:$0xff] %v2167
    %s2888 = scalar_lea.vmem [#allocation1], 34
    %2889 = vst [vmem:[%s2888] ss:$4 sm:$0xff] %v2485
    %s2890 = scalar_lea.vmem [#allocation1], 35
    %2891 = vst [vmem:[%s2890] ss:$4 sm:$0xff] %v2803
    %v2892 = vld.sshfl [vmem:[#allocation1] sm:$0xff pattern:$0x73625140]
    %v2893 = vld.sshfl [vmem:[#allocation1 + $0x20] sm:$0xff pattern:$0x73625140]
    %v2896 = vpack.c.bf16 %v2893, %v2892
    %v2897 = vperm.slane %v55, 1
    %2899 = vrot.lane.b32.xlu0 %v2896, 32
    %v2900 = vpop.permute.xlu0 %2899
    %v2905 = vunpack.c.l.b16 %v47
    %v2906 = vunpack.c.l.b16 %v48
    %v2907 = vunpack.c.l.b16 %v49
    %v2908 = vunpack.c.l.b16 %v50
    %v2909 = vpack.c.b16 %v2906, %v2905
    %v2910 = vpack.c.b16 %v2908, %v2907
    %v2914 = vsel %vm72, %v2900, 0
    %2916 = vmatpush.bf16.msra.mxu0 0
    %2917 = vmatpush.bf16.msra.mxu0 0
    %2918 = vmatpush.bf16.msra.mxu0 0
    %2919 = vmatpush.bf16.msra.mxu0 0
    %2920 = vmatpush.bf16.msra.mxu0 0
    %2921 = vmatpush.bf16.msra.mxu0 0
    %2922 = vmatpush.bf16.msra.mxu0 %v2910
    %2923 = vmatpush.bf16.msra.mxu0 %v2909
    %2924 = vmatmul.bf16.gmra.mxu0 %v2914
    %v2925 = vpop.f32.mrf.mxu0
    %v2926 = vadd.f32 %v2897, %v2925
    %v2927 = vpop.f32.mrf.mxu0
    %v2928 = vadd.f32 %v2897, %v2927
    %2929 = vdwg.mxu0
    %v2932 = vrot.slane %v2926, 2
    %v2933 = vrot.slane %v2926, 4
    %v2934 = vrot.slane %v2926, 6
    %v2935 = vrot.slane %v2928, 2
    %v2936 = vrot.slane %v2928, 4
    %v2937 = vrot.slane %v2928, 6
    %2944 = vst [vmem:[#allocation2] sm:$0x3] %v2926
    %2945 = vst [vmem:[#allocation2 + $0x2] sm:$0x3] %v2932
    %2946 = vst [vmem:[#allocation2 + $0x4] sm:$0x3] %v2933
    %2947 = vst [vmem:[#allocation2 + $0x6] sm:$0x3] %v2934
    %2948 = vst [vmem:[#allocation2 + $0x8] sm:$0x3] %v2928
    %2949 = vst [vmem:[#allocation2 + $0xa] sm:$0x3] %v2935
    %2950 = vst [vmem:[#allocation2 + $0xc] sm:$0x3] %v2936
    %2951 = vst [vmem:[#allocation2 + $0xe] sm:$0x3] %v2937
    // Predicated region
    $region26: #{tpu_custom_call.1} parent=1 // pred_check
      _
    $region27: #{tpu_custom_call.1} parent=1 // pred_check_branch
      %2953 = sbr.rel (0) target = $region29
    $region28: #{tpu_custom_call.1} parent=1 // pred_region
      %2955 = vsyncadd [#allocation3], 0
      %s2956 = sshll.u32 [#allocation2], 4
      %s2957 = int_to_ptr.vmem [resolvable:$true] %s2956
      %s2958 = sshll.u32 %s6, 4
      %s2959 = int_to_ptr.hbm [resolvable:$true] %s2958
      %2964 = dma.vmem_to_hbm [thread:$0]  %s2957, 256, %s2959, [#allocation3], 32, 32, 2
    $region29: #{tpu_custom_call.1} parent=1 // pred_fallthru
      _
    // Predicated region
    $region30: #{tpu_custom_call.1} parent=1 // pred_check
      _
    $region31: #{tpu_custom_call.1} parent=1 // pred_check_branch
      %2966 = sbr.rel (0) target = $region33
    $region32: #{tpu_custom_call.1} parent=1 // pred_region
      %2968 = vsyncadd [#allocation5], 0
      %s2969 = sshll.u32 [#allocation4], 4
      %s2970 = int_to_ptr.vmem [resolvable:$true] %s2969
      %s2971 = sshll.u32 %s7, 4
      %s2972 = int_to_ptr.hbm [resolvable:$true] %s2971
      %2977 = dma.vmem_to_hbm [thread:$0]  %s2970, 64, %s2972, [#allocation5], 32, 32, 2
    $region33: #{tpu_custom_call.1} parent=1 // pred_fallthru
      _
    // Predicated region
    $region34: #{tpu_custom_call.1} parent=1 // pred_check
      _
    $region35: #{tpu_custom_call.1} parent=1 // pred_check_branch
      %2979 = sbr.rel (0) target = $region37
    $region36: #{tpu_custom_call.1} parent=1 // pred_region
      %2981 = vsyncadd [#allocation5], 0
      %s2982 = sshll.u32 [#allocation6], 4
      %s2983 = int_to_ptr.vmem [resolvable:$true] %s2982
      %s2984 = sshll.u32 %s8, 4
      %s2985 = int_to_ptr.hbm [resolvable:$true] %s2984
      %2990 = dma.vmem_to_hbm [thread:$0]  %s2983, 64, %s2985, [#allocation5], 32, 32, 2
    $region37: #{tpu_custom_call.1} parent=1 // pred_fallthru
      _
    // Predicated region
    $region38: #{tpu_custom_call.1} parent=1 // pred_check
      _
    $region39: #{tpu_custom_call.1} parent=1 // pred_check_branch
      %2992 = sbr.rel (0) target = $region41
    $region40: #{tpu_custom_call.1} parent=1 // pred_region
      %2994 = vsyncadd [#allocation8], 0
      %s2995 = sshll.u32 [#allocation7], 4
      %s2996 = int_to_ptr.vmem [resolvable:$true] %s2995
      %s2997 = sshll.u32 %s9, 4
      %s2998 = int_to_ptr.hbm [resolvable:$true] %s2997
      %3003 = dma.vmem_to_hbm [thread:$0]  %s2996, 256, %s2998, [#allocation8], 32, 32, 2
    $region41: #{tpu_custom_call.1} parent=1 // pred_fallthru
      _
    // Predicated region
    $region42: #{tpu_custom_call.1} parent=1 // pred_check
      _
    $region43: #{tpu_custom_call.1} parent=1 // pred_check_branch
      %3005 = sbr.rel (0) target = $region45
    $region44: #{tpu_custom_call.1} parent=1 // pred_region
      %3007 = dma.done [#allocation3], 256
    $region45: #{tpu_custom_call.1} parent=1 // pred_fallthru
      _
    // Predicated region
    $region46: #{tpu_custom_call.1} parent=1 // pred_check
      _
    $region47: #{tpu_custom_call.1} parent=1 // pred_check_branch
      %3009 = sbr.rel (0) target = $region49
    $region48: #{tpu_custom_call.1} parent=1 // pred_region
      %3011 = dma.done [#allocation5], 64
    $region49: #{tpu_custom_call.1} parent=1 // pred_fallthru
      _
    // Predicated region
    $region50: #{tpu_custom_call.1} parent=1 // pred_check
      _
    $region51: #{tpu_custom_call.1} parent=1 // pred_check_branch
      %3013 = sbr.rel (0) target = $region53
    $region52: #{tpu_custom_call.1} parent=1 // pred_region
      %3015 = dma.done [#allocation5], 64
    $region53: #{tpu_custom_call.1} parent=1 // pred_fallthru
      _
    // Predicated region
    $region54: #{tpu_custom_call.1} parent=1 // pred_check
      _
    $region55: #{tpu_custom_call.1} parent=1 // pred_check_branch
      %3017 = sbr.rel (0) target = $region57
    $region56: #{tpu_custom_call.1} parent=1 // pred_region
      %3019 = dma.done [#allocation8], 256
    $region57: #{tpu_custom_call.1} parent=1 // pred_fallthru
      _
    %3020 = vsyncpa [#allocation3], 1
    %3021 = vsyncpa [#allocation5], 1
    %3022 = vsyncpa [#allocation8], 1

</llo_original>
